<compile_context>
chip_gen: v7x
topology: tpu7x:2x2x1
jax: 0.10.0
libtpu: 0.0.40
codegen_flags: <defaults>
</compile_context>

<pallas_src>
import math
import numpy as np
import jax
import jax.numpy as jnp
from jax import lax
from jax.experimental import pallas as pl
from jax.experimental.pallas import tpu as pltpu

WINDOW_SIZE = 11
SIGMA = 1.5
C1 = 0.01 ** 2
C2 = 0.03 ** 2


def _gaussian_1d(window_size, sigma):
    g = np.array(
        [math.exp(-((x - window_size // 2) ** 2) / float(2 * sigma ** 2))
         for x in range(window_size)],
        dtype=np.float32,
    )
    return g / g.sum()


def _conv_matrices(H, W, window_size):
    """Band matrices with zero-padding folded in: conv(X) = A @ X @ B (exact)."""
    g = _gaussian_1d(window_size, SIGMA)
    p = window_size // 2
    A = np.zeros((H, H), dtype=np.float32)
    for i in range(H):                     # output row
        for t in range(window_size):
            j = i + t - p                  # input row
            if 0 <= j < H:
                A[i, j] += g[t]
    B = np.zeros((W, W), dtype=np.float32)
    for j in range(W):                     # output col
        for t in range(window_size):
            i_in = j + t - p               # input col
            if 0 <= i_in < W:
                B[i_in, j] += g[t]
    return jnp.asarray(A), jnp.asarray(B)


def _ssim_kernel(a_ref, b_ref, x_ref, y_ref, out_ref):
    a = a_ref[...]          # (H, H)  gaussian band matrix, rows
    b = b_ref[...]          # (W, W)  gaussian band matrix, cols
    x = x_ref[...]          # (TB, H, W)  image1 channel block
    y = y_ref[...]          # (TB, H, W)  image2 channel block
    tb, h, w = x.shape

    # Hoisted broadcast (JAX does not CSE broadcast_in_dim inside loops/calls).
    a_b = jnp.broadcast_to(a, (tb, h, h))

    def gconv(z):
        # Column pass: one big lane-dense MXU matmul.
        zb = jnp.dot(z.reshape(tb * h, w), b,
                     preferred_element_type=jnp.float32).reshape(tb, h, w)
        # Row pass: batched matmul (batch dim on both operands).
        return jnp.einsum('cik,ckw->ciw', a_b, zb,
                          preferred_element_type=jnp.float32)

    mu1 = gconv(x)
    mu2 = gconv(y)
    mu1_sq = mu1 * mu1
    mu2_sq = mu2 * mu2
    mu1_mu2 = mu1 * mu2
    sigma1_sq = gconv(x * x) - mu1_sq
    sigma2_sq = gconv(y * y) - mu2_sq
    sigma12 = gconv(x * y) - mu1_mu2

    num = (2.0 * mu1_mu2 + C1) * (2.0 * sigma12 + C2)
    den = (mu1_sq + mu2_sq + C1) * (sigma1_sq + sigma2_sq + C2)
    ssim_map = num * pl.reciprocal(den, approx=True)

    # Lane-dense per-channel partial sums (summed over H); final reduction over
    # W and the divide happen in the wrapper.
    out_ref[...] = jnp.sum(ssim_map, axis=1)           # (TB, W)


def _choose_tb(NC, H, W):
    """Channels per grid step, sized so a block fits comfortably in VMEM."""
    budget = 6 * 1024 * 1024                      # per-step f32 working-set target
    per_chan = H * W * 4 * 14                     # 2x2 dbuf inputs + ~10 live temps
    tb = max(1, min(NC, budget // max(per_chan, 1), 256))
    if tb < NC:
        tb = max(8, (tb // 8) * 8)                # sublane-aligned blocks when tiling
    return tb


def ssim_pallas(img1, img2, window_size=WINDOW_SIZE, size_average=True):
    N, C, H, W = img1.shape
    NC = N * C
    A, Bm = _conv_matrices(H, W, window_size)

    x = img1.astype(jnp.float32).reshape(NC, H, W)
    y = img2.astype(jnp.float32).reshape(NC, H, W)

    tb = _choose_tb(NC, H, W)
    G = -(-NC // tb)
    NC_pad = G * tb
    if NC_pad != NC:
        # Padded (all-zero) channels are dropped in the wrapper reduction below.
        x = jnp.pad(x, ((0, NC_pad - NC), (0, 0), (0, 0)))
        y = jnp.pad(y, ((0, NC_pad - NC), (0, 0), (0, 0)))

    est = (tb * H * W * 4) * 14 + (H * H + W * W) * 8 + tb * W * 8
    vmem_limit = int(min(max(2 * est, 32 * 1024 * 1024), 100 * 1024 * 1024))

    partial = pl.pallas_call(
        _ssim_kernel,
        out_shape=jax.ShapeDtypeStruct((NC_pad, W), jnp.float32),
        grid_spec=pltpu.PrefetchScalarGridSpec(
            num_scalar_prefetch=0,
            grid=(G,),
            in_specs=[
                pl.BlockSpec((H, H), lambda g: (0, 0)),          # A
                pl.BlockSpec((W, W), lambda g: (0, 0)),          # B
                pl.BlockSpec((tb, H, W), lambda g: (g, 0, 0)),   # img1 block
                pl.BlockSpec((tb, H, W), lambda g: (g, 0, 0)),   # img2 block
            ],
            out_specs=pl.BlockSpec((tb, W), lambda g: (g, 0)),
        ),
        compiler_params=pltpu.CompilerParams(
            dimension_semantics=("parallel",),
            vmem_limit_bytes=vmem_limit,
        ),
    )(A, Bm, x, y)

    per_channel_mean = jnp.sum(partial[:NC], axis=1) / (H * W)   # (NC,)
    if size_average:
        return jnp.mean(per_channel_mean)
    # PyTorch: ssim_map.mean(1).mean(1).mean(1) -> per-batch mean over (C,H,W).
    return jnp.mean(per_channel_mean.reshape(N, C), axis=1)


def ssim_map_reference(img1, img2, window_size=WINDOW_SIZE):
    """Pure-JAX reference matching the PyTorch _ssim exactly (grouped conv2d)."""
    N, C, H, W = img1.shape
    g = _gaussian_1d(window_size, SIGMA)
    win2d = jnp.asarray(np.outer(g, g).astype(np.float32))
    kernel = jnp.broadcast_to(win2d, (C, 1, window_size, window_size))
    p = window_size // 2

    def conv(x):
        return lax.conv_general_dilated(
            x, kernel, (1, 1), [(p, p), (p, p)],
            dimension_numbers=("NCHW", "OIHW", "NCHW"),
            feature_group_count=C,
            precision=lax.Precision.HIGHEST,
        )

    mu1 = conv(img1)
    mu2 = conv(img2)
    mu1_sq, mu2_sq, mu1_mu2 = mu1 * mu1, mu2 * mu2, mu1 * mu2
    sigma1_sq = conv(img1 * img1) - mu1_sq
    sigma2_sq = conv(img2 * img2) - mu2_sq
    sigma12 = conv(img1 * img2) - mu1_mu2
    return ((2 * mu1_mu2 + C1) * (2 * sigma12 + C2)) / (
        (mu1_sq + mu2_sq + C1) * (sigma1_sq + sigma2_sq + C2)
    )


if __name__ == "__main__":
    key = jax.random.PRNGKey(0)
    k1, k2 = jax.random.split(key)
    img1 = jax.random.uniform(k1, (2, 4, 16, 16), dtype=jnp.float32)
    img2 = jax.random.uniform(k2, (2, 4, 16, 16), dtype=jnp.float32)

    ref_map = ssim_map_reference(img1, img2)

    out = ssim_pallas(img1, img2, size_average=True)
    jax.block_until_ready(out)
    np.testing.assert_allclose(
        np.asarray(out), np.asarray(jnp.mean(ref_map)), rtol=1e-3, atol=1e-3)

    out_pb = ssim_pallas(img1, img2, size_average=False)
    jax.block_until_ready(out_pb)
    np.testing.assert_allclose(
        np.asarray(out_pb), np.asarray(jnp.mean(ref_map, axis=(1, 2, 3))),
        rtol=1e-3, atol=1e-3)

    print("KERNEL_OK")
</pallas_src>

<mosaic_0001>
module attributes {stable_mosaic.version = 11 : i64} {
  func.func @_ssim_kernel(%arg0: i32, %arg1: memref<16x16xf32, #tpu.memory_space<vmem>>, %arg2: memref<16x16xf32, #tpu.memory_space<vmem>>, %arg3: memref<8x16x16xf32, #tpu.memory_space<vmem>>, %arg4: memref<8x16x16xf32, #tpu.memory_space<vmem>>, %arg5: memref<8x16xf32, #tpu.memory_space<vmem>>) attributes {dimension_semantics = [#tpu.dimension_semantics<parallel>], iteration_bounds = array<i64: 1>, scalar_prefetch = 0 : i64, scratch_operands = 0 : i64, tpu.core_type = #tpu.core_type<tc>, window_params = [{pipeline_mode = #tpu.pipeline_mode<synchronous>, transform_indices = @transform_0, window_bounds = array<i64: 16, 16>}, {pipeline_mode = #tpu.pipeline_mode<synchronous>, transform_indices = @transform_1, window_bounds = array<i64: 16, 16>}, {transform_indices = @transform_2, window_bounds = array<i64: 8, 16, 16>}, {transform_indices = @transform_3, window_bounds = array<i64: 8, 16, 16>}, {transform_indices = @transform_4, window_bounds = array<i64: 8, 16>}]} {
    %c0 = arith.constant 0 : index
    %c0_0 = arith.constant 0 : index
    %0 = vector.load %arg1[%c0, %c0_0] : memref<16x16xf32, #tpu.memory_space<vmem>>, vector<16x16xf32>
    %c0_1 = arith.constant 0 : index
    %c0_2 = arith.constant 0 : index
    %1 = vector.load %arg2[%c0_1, %c0_2] : memref<16x16xf32, #tpu.memory_space<vmem>>, vector<16x16xf32>
    %c0_3 = arith.constant 0 : index
    %c0_4 = arith.constant 0 : index
    %c0_5 = arith.constant 0 : index
    %2 = vector.load %arg3[%c0_3, %c0_4, %c0_5] : memref<8x16x16xf32, #tpu.memory_space<vmem>>, vector<8x16x16xf32>
    %c0_6 = arith.constant 0 : index
    %c0_7 = arith.constant 0 : index
    %c0_8 = arith.constant 0 : index
    %3 = vector.load %arg4[%c0_6, %c0_7, %c0_8] : memref<8x16x16xf32, #tpu.memory_space<vmem>>, vector<8x16x16xf32>
    %4 = vector.shape_cast %0 : vector<16x16xf32> to vector<1x16x16xf32>
    %5 = vector.broadcast %4 : vector<1x16x16xf32> to vector<8x16x16xf32>
    %6 = vector.shape_cast %2 : vector<8x16x16xf32> to vector<128x16xf32>
    %cst = arith.constant dense<0.000000e+00> : vector<128x16xf32>
    %7 = tpu.matmul %6, %1, %cst {dimension_numbers = #tpu.dot_dimension_numbers<[1], [0], [0], [1], [0, 0, 1, 1], [], []>} : vector<128x16xf32>, vector<16x16xf32>, vector<128x16xf32> -> vector<128x16xf32>
    %8 = vector.shape_cast %7 : vector<128x16xf32> to vector<8x16x16xf32>
    "tpu.trace_start"() <{level = 10 : i32, message = "cik,ckw->ciw"}> : () -> ()
    %cst_9 = arith.constant dense<0.000000e+00> : vector<8x16x16xf32>
    %9 = tpu.matmul %5, %8, %cst_9 {dimension_numbers = #tpu.dot_dimension_numbers<[2], [1], [1], [2], [0, 0, 0, 1, 1, 2], [0], [0]>} : vector<8x16x16xf32>, vector<8x16x16xf32>, vector<8x16x16xf32> -> vector<8x16x16xf32>
    "tpu.trace_stop"() : () -> ()
    %10 = vector.shape_cast %3 : vector<8x16x16xf32> to vector<128x16xf32>
    %cst_10 = arith.constant dense<0.000000e+00> : vector<128x16xf32>
    %11 = tpu.matmul %10, %1, %cst_10 {dimension_numbers = #tpu.dot_dimension_numbers<[1], [0], [0], [1], [0, 0, 1, 1], [], []>} : vector<128x16xf32>, vector<16x16xf32>, vector<128x16xf32> -> vector<128x16xf32>
    %12 = vector.shape_cast %11 : vector<128x16xf32> to vector<8x16x16xf32>
    "tpu.trace_start"() <{level = 10 : i32, message = "cik,ckw->ciw"}> : () -> ()
    %cst_11 = arith.constant dense<0.000000e+00> : vector<8x16x16xf32>
    %13 = tpu.matmul %5, %12, %cst_11 {dimension_numbers = #tpu.dot_dimension_numbers<[2], [1], [1], [2], [0, 0, 0, 1, 1, 2], [0], [0]>} : vector<8x16x16xf32>, vector<8x16x16xf32>, vector<8x16x16xf32> -> vector<8x16x16xf32>
    "tpu.trace_stop"() : () -> ()
    %14 = arith.mulf %9, %9 : vector<8x16x16xf32>
    %15 = arith.mulf %13, %13 : vector<8x16x16xf32>
    %16 = arith.mulf %9, %13 : vector<8x16x16xf32>
    %17 = arith.mulf %2, %2 : vector<8x16x16xf32>
    %18 = vector.shape_cast %17 : vector<8x16x16xf32> to vector<128x16xf32>
    %cst_12 = arith.constant dense<0.000000e+00> : vector<128x16xf32>
    %19 = tpu.matmul %18, %1, %cst_12 {dimension_numbers = #tpu.dot_dimension_numbers<[1], [0], [0], [1], [0, 0, 1, 1], [], []>} : vector<128x16xf32>, vector<16x16xf32>, vector<128x16xf32> -> vector<128x16xf32>
    %20 = vector.shape_cast %19 : vector<128x16xf32> to vector<8x16x16xf32>
    "tpu.trace_start"() <{level = 10 : i32, message = "cik,ckw->ciw"}> : () -> ()
    %cst_13 = arith.constant dense<0.000000e+00> : vector<8x16x16xf32>
    %21 = tpu.matmul %5, %20, %cst_13 {dimension_numbers = #tpu.dot_dimension_numbers<[2], [1], [1], [2], [0, 0, 0, 1, 1, 2], [0], [0]>} : vector<8x16x16xf32>, vector<8x16x16xf32>, vector<8x16x16xf32> -> vector<8x16x16xf32>
    "tpu.trace_stop"() : () -> ()
    %22 = arith.subf %21, %14 : vector<8x16x16xf32>
    %23 = arith.mulf %3, %3 : vector<8x16x16xf32>
    %24 = vector.shape_cast %23 : vector<8x16x16xf32> to vector<128x16xf32>
    %cst_14 = arith.constant dense<0.000000e+00> : vector<128x16xf32>
    %25 = tpu.matmul %24, %1, %cst_14 {dimension_numbers = #tpu.dot_dimension_numbers<[1], [0], [0], [1], [0, 0, 1, 1], [], []>} : vector<128x16xf32>, vector<16x16xf32>, vector<128x16xf32> -> vector<128x16xf32>
    %26 = vector.shape_cast %25 : vector<128x16xf32> to vector<8x16x16xf32>
    "tpu.trace_start"() <{level = 10 : i32, message = "cik,ckw->ciw"}> : () -> ()
    %cst_15 = arith.constant dense<0.000000e+00> : vector<8x16x16xf32>
    %27 = tpu.matmul %5, %26, %cst_15 {dimension_numbers = #tpu.dot_dimension_numbers<[2], [1], [1], [2], [0, 0, 0, 1, 1, 2], [0], [0]>} : vector<8x16x16xf32>, vector<8x16x16xf32>, vector<8x16x16xf32> -> vector<8x16x16xf32>
    "tpu.trace_stop"() : () -> ()
    %28 = arith.subf %27, %15 : vector<8x16x16xf32>
    %29 = arith.mulf %2, %3 : vector<8x16x16xf32>
    %30 = vector.shape_cast %29 : vector<8x16x16xf32> to vector<128x16xf32>
    %cst_16 = arith.constant dense<0.000000e+00> : vector<128x16xf32>
    %31 = tpu.matmul %30, %1, %cst_16 {dimension_numbers = #tpu.dot_dimension_numbers<[1], [0], [0], [1], [0, 0, 1, 1], [], []>} : vector<128x16xf32>, vector<16x16xf32>, vector<128x16xf32> -> vector<128x16xf32>
    %32 = vector.shape_cast %31 : vector<128x16xf32> to vector<8x16x16xf32>
    "tpu.trace_start"() <{level = 10 : i32, message = "cik,ckw->ciw"}> : () -> ()
    %cst_17 = arith.constant dense<0.000000e+00> : vector<8x16x16xf32>
    %33 = tpu.matmul %5, %32, %cst_17 {dimension_numbers = #tpu.dot_dimension_numbers<[2], [1], [1], [2], [0, 0, 0, 1, 1, 2], [0], [0]>} : vector<8x16x16xf32>, vector<8x16x16xf32>, vector<8x16x16xf32> -> vector<8x16x16xf32>
    "tpu.trace_stop"() : () -> ()
    %34 = arith.subf %33, %16 : vector<8x16x16xf32>
    %cst_18 = arith.constant 2.000000e+00 : f32
    %35 = vector.broadcast %cst_18 : f32 to vector<8x16x16xf32>
    %36 = arith.mulf %35, %16 : vector<8x16x16xf32>
    %cst_19 = arith.constant 9.99999974E-5 : f32
    %37 = vector.broadcast %cst_19 : f32 to vector<8x16x16xf32>
    %38 = arith.addf %36, %37 : vector<8x16x16xf32>
    %cst_20 = arith.constant 2.000000e+00 : f32
    %39 = vector.broadcast %cst_20 : f32 to vector<8x16x16xf32>
    %40 = arith.mulf %39, %34 : vector<8x16x16xf32>
    %cst_21 = arith.constant 8.99999984E-4 : f32
    %41 = vector.broadcast %cst_21 : f32 to vector<8x16x16xf32>
    %42 = arith.addf %40, %41 : vector<8x16x16xf32>
    %43 = arith.mulf %38, %42 : vector<8x16x16xf32>
    %44 = arith.addf %14, %15 : vector<8x16x16xf32>
    %cst_22 = arith.constant 9.99999974E-5 : f32
    %45 = vector.broadcast %cst_22 : f32 to vector<8x16x16xf32>
    %46 = arith.addf %44, %45 : vector<8x16x16xf32>
    %47 = arith.addf %22, %28 : vector<8x16x16xf32>
    %cst_23 = arith.constant 8.99999984E-4 : f32
    %48 = vector.broadcast %cst_23 : f32 to vector<8x16x16xf32>
    %49 = arith.addf %47, %48 : vector<8x16x16xf32>
    %50 = arith.mulf %46, %49 : vector<8x16x16xf32>
    %51 = tpu.reciprocal %50 {approx = true} : vector<8x16x16xf32> -> vector<8x16x16xf32>
    %52 = arith.mulf %43, %51 : vector<8x16x16xf32>
    %cst_24 = arith.constant dense<0.000000e+00> : vector<8x16xf32>
    %53 = vector.multi_reduction <add>, %52, %cst_24 [1] : vector<8x16x16xf32> to vector<8x16xf32>
    %c0_25 = arith.constant 0 : index
    %c0_26 = arith.constant 0 : index
    %54 = vector.load %arg5[%c0_25, %c0_26] : memref<8x16xf32, #tpu.memory_space<vmem>>, vector<8x16xf32>
    tpu.vector_store %arg5[%c0_25, %c0_26], %53 {strides = array<i32>} : memref<8x16xf32, #tpu.memory_space<vmem>>, vector<8x16xf32>,
    return
  }
  func.func @transform_0(%arg0: i32) -> (i32, i32) {
    %c0_i32 = arith.constant 0 : i32
    %c0_i32_0 = arith.constant 0 : i32
    %c0_i32_1 = arith.constant 0 : i32
    return %c0_i32, %c0_i32_0 : i32, i32
  }
  func.func @transform_1(%arg0: i32) -> (i32, i32) {
    %c0_i32 = arith.constant 0 : i32
    %c0_i32_0 = arith.constant 0 : i32
    %c0_i32_1 = arith.constant 0 : i32
    return %c0_i32, %c0_i32_0 : i32, i32
  }
  func.func @transform_2(%arg0: i32) -> (i32, i32, i32) {
    %c0_i32 = arith.constant 0 : i32
    %c0_i32_0 = arith.constant 0 : i32
    %c0_i32_1 = arith.constant 0 : i32
    return %arg0, %c0_i32, %c0_i32_0 : i32, i32, i32
  }
  func.func @transform_3(%arg0: i32) -> (i32, i32, i32) {
    %c0_i32 = arith.constant 0 : i32
    %c0_i32_0 = arith.constant 0 : i32
    %c0_i32_1 = arith.constant 0 : i32
    return %arg0, %c0_i32, %c0_i32_0 : i32, i32, i32
  }
  func.func @transform_4(%arg0: i32) -> (i32, i32) {
    %c0_i32 = arith.constant 0 : i32
    %c0_i32_0 = arith.constant 0 : i32
    return %arg0, %c0_i32 : i32, i32
  }
}

</mosaic_0001>

<llo_original>
// kernel: tpu_custom_call.1
$region0: #{tpu_custom_call.1}
  #allocation0 [shape = 'u32[]', space=smem, size = 0x4, offset = 0x4, fixed_abs, tag = 'smem constant byte address 0x4 - core index']
  #allocation1 [shape = 'u32[144,128]{1,0:T(1,128)}', space=vmem, size = 0x12000, scoped, tag = 'internal scratch']
  %s0 = inlined_call_operand.hbm [shape: f32[16,16], index: 0, kind: input, shape index: {}]
  %s1 = inlined_call_operand.hbm [shape: f32[16,16], index: 1, kind: input, shape index: {}]
  %s2 = inlined_call_operand.hbm [shape: f32[8,16,16], index: 2, kind: input, shape index: {}]
  %s3 = inlined_call_operand.hbm [shape: f32[8,16,16], index: 3, kind: input, shape index: {}]
  %s4 = inlined_call_operand.hbm [shape: f32[8,16], index: 4, kind: output, shape index: {}]
  %s5 = sld [smem:[#allocation0]]
  $region42: #{tpu_custom_call.1} parent=0
    _
  %s7 = ssub.s32 1, %s5
  %s8 = scalar_select 0, %s7, %s5
  $region1: #{tpu_custom_call.1} parent=0
    #allocation2 [shape = 'u8[8192]{0}', space=vmem, size = 0x2000, scoped, tag = 'input window, operand 0, single buffered']
    #allocation3 [shape = 's32[1]{0}', space=sflag, size = 0x4, scoped, tag = 'scoped memory for tpu_custom_call.1']
    #allocation4 [shape = 's32[1]{0}', space=sflag, size = 0x4, scoped, tag = 'scoped memory for tpu_custom_call.1']
    #allocation5 [shape = 'u8[8192]{0}', space=vmem, size = 0x2000, scoped, tag = 'input window, operand 1, single buffered']
    #allocation6 [shape = 's32[1]{0}', space=sflag, size = 0x4, scoped, tag = 'scoped memory for tpu_custom_call.1']
    #allocation7 [shape = 'u8[65536]{0}', space=vmem, size = 0x10000, scoped, tag = 'input window, operand 2, single buffered']
    #allocation8 [shape = 'u8[65536]{0}', space=vmem, size = 0x10000, scoped, tag = 'input window, operand 3, single buffered']
    #allocation9 [shape = 's32[1]{0}', space=sflag, size = 0x4, scoped, tag = 'scoped memory for tpu_custom_call.1']
    #allocation10 [shape = 'u8[4096]{0}', space=vmem, size = 0x1000, scoped, tag = 'output window, operand 0, single buffered']
    %9 = vsyncpa [#allocation3], 0
    %10 = vsyncpa [#allocation6], 0
    %11 = vsyncpa [#allocation9], 0
    %12 = vsyncpa [#allocation4], 0
    // Predicated region
    $region2: #{tpu_custom_call.1} parent=1 // pred_check
      _
    $region3: #{tpu_custom_call.1} parent=1 // pred_check_branch
      %14 = sbr.rel (0) target = $region5
    $region4: #{tpu_custom_call.1} parent=1 // pred_region
      %s16 = ssub.s32 256, 256
      %17 = vsyncadd [#allocation3], %s16
      %s18 = sshll.u32 [#allocation2], 4
      %s19 = int_to_ptr.vmem [resolvable:$true] %s18
      %24 = dma.hbm_to_vmem [thread:$0]  %s0, 256, %s19, [#allocation3], 128, 128, 8
    $region5: #{tpu_custom_call.1} parent=1 // pred_fallthru
      _
    // Predicated region
    $region6: #{tpu_custom_call.1} parent=1 // pred_check
      _
    $region7: #{tpu_custom_call.1} parent=1 // pred_check_branch
      %26 = sbr.rel (0) target = $region9
    $region8: #{tpu_custom_call.1} parent=1 // pred_region
      %s28 = ssub.s32 256, 256
      %29 = vsyncadd [#allocation6], %s28
      %s30 = sshll.u32 [#allocation5], 4
      %s31 = int_to_ptr.vmem [resolvable:$true] %s30
      %36 = dma.hbm_to_vmem [thread:$0]  %s1, 256, %s31, [#allocation6], 128, 128, 8
    $region9: #{tpu_custom_call.1} parent=1 // pred_fallthru
      _
    // Predicated region
    $region10: #{tpu_custom_call.1} parent=1 // pred_check
      _
    $region11: #{tpu_custom_call.1} parent=1 // pred_check_branch
      %38 = sbr.rel (0) target = $region13
    $region12: #{tpu_custom_call.1} parent=1 // pred_region
      %s40 = ssub.s32 2048, 2048
      %41 = vsyncadd [#allocation6], %s40
      %s42 = sshll.u32 [#allocation7], 4
      %s43 = int_to_ptr.vmem [resolvable:$true] %s42
      %48 = dma.hbm_to_vmem [thread:$0]  %s2, 2048, %s43, [#allocation6], 128, 128, 8
    $region13: #{tpu_custom_call.1} parent=1 // pred_fallthru
      _
    // Predicated region
    $region14: #{tpu_custom_call.1} parent=1 // pred_check
      _
    $region15: #{tpu_custom_call.1} parent=1 // pred_check_branch
      %50 = sbr.rel (0) target = $region17
    $region16: #{tpu_custom_call.1} parent=1 // pred_region
      %s52 = ssub.s32 2048, 2048
      %53 = vsyncadd [#allocation9], %s52
      %s54 = sshll.u32 [#allocation8], 4
      %s55 = int_to_ptr.vmem [resolvable:$true] %s54
      %60 = dma.hbm_to_vmem [thread:$0]  %s3, 2048, %s55, [#allocation9], 128, 128, 8
    $region17: #{tpu_custom_call.1} parent=1 // pred_fallthru
      _
    // Predicated region
    $region18: #{tpu_custom_call.1} parent=1 // pred_check
      _
    $region19: #{tpu_custom_call.1} parent=1 // pred_check_branch
      %62 = sbr.rel (0) target = $region21
    $region20: #{tpu_custom_call.1} parent=1 // pred_region
      %63 = dma.done [#allocation3], 256
    $region21: #{tpu_custom_call.1} parent=1 // pred_fallthru
      _
    // Predicated region
    $region22: #{tpu_custom_call.1} parent=1 // pred_check
      _
    $region23: #{tpu_custom_call.1} parent=1 // pred_check_branch
      %65 = sbr.rel (0) target = $region25
    $region24: #{tpu_custom_call.1} parent=1 // pred_region
      %66 = dma.done [#allocation6], 256
    $region25: #{tpu_custom_call.1} parent=1 // pred_fallthru
      _
    // Predicated region
    $region26: #{tpu_custom_call.1} parent=1 // pred_check
      _
    $region27: #{tpu_custom_call.1} parent=1 // pred_check_branch
      %68 = sbr.rel (0) target = $region29
    $region28: #{tpu_custom_call.1} parent=1 // pred_region
      %69 = dma.done [#allocation6], 2048
    $region29: #{tpu_custom_call.1} parent=1 // pred_fallthru
      _
    // Predicated region
    $region30: #{tpu_custom_call.1} parent=1 // pred_check
      _
    $region31: #{tpu_custom_call.1} parent=1 // pred_check_branch
      %71 = sbr.rel (0) target = $region33
    $region32: #{tpu_custom_call.1} parent=1 // pred_region
      %72 = dma.done [#allocation9], 2048
    $region33: #{tpu_custom_call.1} parent=1 // pred_fallthru
      _
    %v73 = vld [vmem:[#allocation2] sm:$0xff]
    %v74 = vld [vmem:[#allocation2 + $0x8] sm:$0xff]
    %v75 = vld [vmem:[#allocation5] sm:$0xff]
    %v76 = vld [vmem:[#allocation5 + $0x8] sm:$0xff]
    %v77 = vld [vmem:[#allocation7] sm:$0xff]
    %v78 = vld [vmem:[#allocation7 + $0x8] sm:$0xff]
    %v79 = vld [vmem:[#allocation7 + $0x10] sm:$0xff]
    %v80 = vld [vmem:[#allocation7 + $0x18] sm:$0xff]
    %v81 = vld [vmem:[#allocation7 + $0x20] sm:$0xff]
    %v82 = vld [vmem:[#allocation7 + $0x28] sm:$0xff]
    %v83 = vld [vmem:[#allocation7 + $0x30] sm:$0xff]
    %v84 = vld [vmem:[#allocation7 + $0x38] sm:$0xff]
    %v85 = vld [vmem:[#allocation7 + $0x40] sm:$0xff]
    %v86 = vld [vmem:[#allocation7 + $0x48] sm:$0xff]
    %v87 = vld [vmem:[#allocation7 + $0x50] sm:$0xff]
    %v88 = vld [vmem:[#allocation7 + $0x58] sm:$0xff]
    %v89 = vld [vmem:[#allocation7 + $0x60] sm:$0xff]
    %v90 = vld [vmem:[#allocation7 + $0x68] sm:$0xff]
    %v91 = vld [vmem:[#allocation7 + $0x70] sm:$0xff]
    %v92 = vld [vmem:[#allocation7 + $0x78] sm:$0xff]
    %v93 = vld [vmem:[#allocation8] sm:$0xff]
    %v94 = vld [vmem:[#allocation8 + $0x8] sm:$0xff]
    %v95 = vld [vmem:[#allocation8 + $0x10] sm:$0xff]
    %v96 = vld [vmem:[#allocation8 + $0x18] sm:$0xff]
    %v97 = vld [vmem:[#allocation8 + $0x20] sm:$0xff]
    %v98 = vld [vmem:[#allocation8 + $0x28] sm:$0xff]
    %v99 = vld [vmem:[#allocation8 + $0x30] sm:$0xff]
    %v100 = vld [vmem:[#allocation8 + $0x38] sm:$0xff]
    %v101 = vld [vmem:[#allocation8 + $0x40] sm:$0xff]
    %v102 = vld [vmem:[#allocation8 + $0x48] sm:$0xff]
    %v103 = vld [vmem:[#allocation8 + $0x50] sm:$0xff]
    %v104 = vld [vmem:[#allocation8 + $0x58] sm:$0xff]
    %v105 = vld [vmem:[#allocation8 + $0x60] sm:$0xff]
    %v106 = vld [vmem:[#allocation8 + $0x68] sm:$0xff]
    %v107 = vld [vmem:[#allocation8 + $0x70] sm:$0xff]
    %v108 = vld [vmem:[#allocation8 + $0x78] sm:$0xff]
    %vm109 = vcmask 130048
    %v111 = vsel %vm109, %v77, 0
    %v114 = vsel %vm109, %v78, 0
    %v117 = vsel %vm109, %v79, 0
    %v120 = vsel %vm109, %v80, 0
    %v123 = vsel %vm109, %v81, 0
    %v126 = vsel %vm109, %v82, 0
    %v129 = vsel %vm109, %v83, 0
    %v132 = vsel %vm109, %v84, 0
    %v135 = vsel %vm109, %v85, 0
    %v138 = vsel %vm109, %v86, 0
    %v141 = vsel %vm109, %v87, 0
    %v144 = vsel %vm109, %v88, 0
    %v147 = vsel %vm109, %v89, 0
    %v150 = vsel %vm109, %v90, 0
    %v153 = vsel %vm109, %v91, 0
    %v156 = vsel %vm109, %v92, 0
    %158 = vmatprep.subr.mxu0 0.0
    %159 = vmatpush1.msra.mxu0 %v75
    %160 = vmatprep.subr.mxu0 0.0
    %161 = vmatpush1.msra.mxu0 %v76
    %162 = vmatprep.subr.mxu0 0.0
    %163 = vmatpush1.msra.mxu0 0.0
    %164 = vmatprep.subr.mxu0 0.0
    %165 = vmatpush1.msra.mxu0 0.0
    %166 = vmatprep.subr.mxu0 0.0
    %167 = vmatpush1.msra.mxu0 0.0
    %168 = vmatprep.subr.mxu0 0.0
    %169 = vmatpush1.msra.mxu0 0.0
    %170 = vmatprep.subr.mxu0 0.0
    %171 = vmatpush1.msra.mxu0 0.0
    %172 = vmatprep.subr.mxu0 0.0
    %173 = vmatpush1.msra.mxu0 0.0
    %174 = vmatprep.subr.mxu0 0.0
    %175 = vmatpush1.msra.mxu0 0.0
    %176 = vmatprep.subr.mxu0 0.0
    %177 = vmatpush1.msra.mxu0 0.0
    %178 = vmatprep.subr.mxu0 0.0
    %179 = vmatpush1.msra.mxu0 0.0
    %180 = vmatprep.subr.mxu0 0.0
    %181 = vmatpush1.msra.mxu0 0.0
    %182 = vmatprep.subr.mxu0 0.0
    %183 = vmatpush1.msra.mxu0 0.0
    %184 = vmatprep.subr.mxu0 0.0
    %185 = vmatpush1.msra.mxu0 0.0
    %186 = vmatprep.subr.mxu0 0.0
    %187 = vmatpush1.msra.mxu0 0.0
    %188 = vmatprep.subr.mxu0 0.0
    %189 = vmatpush1.msra.mxu0 0.0
    %190 = vmatprep.subr.mxu0 0.0
    %191 = vmatpush1.msra.mxu0 0.0
    %192 = vmatprep.subr.mxu0 0.0
    %193 = vmatpush1.msra.mxu0 0.0
    %194 = vmatprep.subr.mxu0 0.0
    %195 = vmatpush1.msra.mxu0 0.0
    %196 = vmatprep.subr.mxu0 0.0
    %197 = vmatpush1.msra.mxu0 0.0
    %198 = vmatprep.subr.mxu0 0.0
    %199 = vmatpush1.msra.mxu0 0.0
    %200 = vmatprep.subr.mxu0 0.0
    %201 = vmatpush1.msra.mxu0 0.0
    %202 = vmatprep.subr.mxu0 0.0
    %203 = vmatpush1.msra.mxu0 0.0
    %204 = vmatprep.subr.mxu0 0.0
    %205 = vmatpush1.msra.mxu0 0.0
    %206 = vmatprep.subr.mxu0 0.0
    %207 = vmatpush1.msra.mxu0 0.0
    %208 = vmatprep.subr.mxu0 0.0
    %209 = vmatpush1.msra.mxu0 0.0
    %210 = vmatprep.subr.mxu0 0.0
    %211 = vmatpush1.msra.mxu0 0.0
    %212 = vmatprep.subr.mxu0 0.0
    %213 = vmatpush1.msra.mxu0 0.0
    %214 = vmatprep.subr.mxu0 0.0
    %215 = vmatpush1.msra.mxu0 0.0
    %216 = vmatprep.subr.mxu0 0.0
    %217 = vmatpush1.msra.mxu0 0.0
    %218 = vmatprep.subr.mxu0 0.0
    %219 = vmatpush1.msra.mxu0 0.0
    %220 = vmatprep.subr.mxu0 0.0
    %221 = vmatpush1.msra.mxu0 0.0
    %222 = vmatprep.mubr.f32.mxu0 0.0
    %223 = vmatmul.mubr.f32.gmra.mrb[0].mxu0 %v111
    %v224 = vpop.f32.mrb[0].mxu0
    %v225 = vadd.f32 0.0, %v224
    %v226 = vpop.f32.mrb[0].mxu0
    %227 = vmatprep.mubr.f32.mxu0 0.0
    %228 = vmatmul.mubr.f32.gmra.mrb[0].mxu0 %v114
    %v229 = vpop.f32.mrb[0].mxu0
    %v230 = vadd.f32 0.0, %v229
    %v231 = vpop.f32.mrb[0].mxu0
    %232 = vmatprep.mubr.f32.mxu0 0.0
    %233 = vmatmul.mubr.f32.gmra.mrb[0].mxu0 %v117
    %v234 = vpop.f32.mrb[0].mxu0
    %v235 = vadd.f32 0.0, %v234
    %v236 = vpop.f32.mrb[0].mxu0
    %237 = vmatprep.mubr.f32.mxu0 0.0
    %238 = vmatmul.mubr.f32.gmra.mrb[0].mxu0 %v120
    %v239 = vpop.f32.mrb[0].mxu0
    %v240 = vadd.f32 0.0, %v239
    %v241 = vpop.f32.mrb[0].mxu0
    %242 = vmatprep.mubr.f32.mxu0 0.0
    %243 = vmatmul.mubr.f32.gmra.mrb[0].mxu0 %v123
    %v244 = vpop.f32.mrb[0].mxu0
    %v245 = vadd.f32 0.0, %v244
    %v246 = vpop.f32.mrb[0].mxu0
    %247 = vmatprep.mubr.f32.mxu0 0.0
    %248 = vmatmul.mubr.f32.gmra.mrb[0].mxu0 %v126
    %v249 = vpop.f32.mrb[0].mxu0
    %v250 = vadd.f32 0.0, %v249
    %v251 = vpop.f32.mrb[0].mxu0
    %252 = vmatprep.mubr.f32.mxu0 0.0
    %253 = vmatmul.mubr.f32.gmra.mrb[0].mxu0 %v129
    %v254 = vpop.f32.mrb[0].mxu0
    %v255 = vadd.f32 0.0, %v254
    %v256 = vpop.f32.mrb[0].mxu0
    %257 = vmatprep.mubr.f32.mxu0 0.0
    %258 = vmatmul.mubr.f32.gmra.mrb[0].mxu0 %v132
    %v259 = vpop.f32.mrb[0].mxu0
    %v260 = vadd.f32 0.0, %v259
    %v261 = vpop.f32.mrb[0].mxu0
    %262 = vmatprep.mubr.f32.mxu0 0.0
    %263 = vmatmul.mubr.f32.gmra.mrb[0].mxu0 %v135
    %v264 = vpop.f32.mrb[0].mxu0
    %v265 = vadd.f32 0.0, %v264
    %v266 = vpop.f32.mrb[0].mxu0
    %267 = vmatprep.mubr.f32.mxu0 0.0
    %268 = vmatmul.mubr.f32.gmra.mrb[0].mxu0 %v138
    %v269 = vpop.f32.mrb[0].mxu0
    %v270 = vadd.f32 0.0, %v269
    %v271 = vpop.f32.mrb[0].mxu0
    %272 = vmatprep.mubr.f32.mxu0 0.0
    %273 = vmatmul.mubr.f32.gmra.mrb[0].mxu0 %v141
    %v274 = vpop.f32.mrb[0].mxu0
    %v275 = vadd.f32 0.0, %v274
    %v276 = vpop.f32.mrb[0].mxu0
    %277 = vmatprep.mubr.f32.mxu0 0.0
    %278 = vmatmul.mubr.f32.gmra.mrb[0].mxu0 %v144
    %v279 = vpop.f32.mrb[0].mxu0
    %v280 = vadd.f32 0.0, %v279
    %v281 = vpop.f32.mrb[0].mxu0
    %282 = vmatprep.mubr.f32.mxu0 0.0
    %283 = vmatmul.mubr.f32.gmra.mrb[0].mxu0 %v147
    %v284 = vpop.f32.mrb[0].mxu0
    %v285 = vadd.f32 0.0, %v284
    %v286 = vpop.f32.mrb[0].mxu0
    %287 = vmatprep.mubr.f32.mxu0 0.0
    %288 = vmatmul.mubr.f32.gmra.mrb[0].mxu0 %v150
    %v289 = vpop.f32.mrb[0].mxu0
    %v290 = vadd.f32 0.0, %v289
    %v291 = vpop.f32.mrb[0].mxu0
    %292 = vmatprep.mubr.f32.mxu0 0.0
    %293 = vmatmul.mubr.f32.gmra.mrb[0].mxu0 %v153
    %v294 = vpop.f32.mrb[0].mxu0
    %v295 = vadd.f32 0.0, %v294
    %v296 = vpop.f32.mrb[0].mxu0
    %297 = vmatprep.mubr.f32.mxu0 0.0
    %298 = vmatmul.mubr.f32.gmra.mrb[0].mxu0 %v156
    %v299 = vpop.f32.mrb[0].mxu0
    %v300 = vadd.f32 0.0, %v299
    %v301 = vpop.f32.mrb[0].mxu0
    %302 = vdwg.mxu0
    %v304 = vsel %vm109, %v73, 0
    %v307 = vsel %vm109, %v74, 0
    %309 = vmatprep.subr.mxu0 0.0
    %310 = vmatpush1.msra.mxu0 %v225
    %311 = vmatprep.subr.mxu0 0.0
    %312 = vmatpush1.msra.mxu0 %v230
    %313 = vmatprep.subr.mxu0 0.0
    %314 = vmatpush1.msra.mxu0 0.0
    %315 = vmatprep.subr.mxu0 0.0
    %316 = vmatpush1.msra.mxu0 0.0
    %317 = vmatprep.subr.mxu0 0.0
    %318 = vmatpush1.msra.mxu0 0.0
    %319 = vmatprep.subr.mxu0 0.0
    %320 = vmatpush1.msra.mxu0 0.0
    %321 = vmatprep.subr.mxu0 0.0
    %322 = vmatpush1.msra.mxu0 0.0
    %323 = vmatprep.subr.mxu0 0.0
    %324 = vmatpush1.msra.mxu0 0.0
    %325 = vmatprep.subr.mxu0 0.0
    %326 = vmatpush1.msra.mxu0 0.0
    %327 = vmatprep.subr.mxu0 0.0
    %328 = vmatpush1.msra.mxu0 0.0
    %329 = vmatprep.subr.mxu0 0.0
    %330 = vmatpush1.msra.mxu0 0.0
    %331 = vmatprep.subr.mxu0 0.0
    %332 = vmatpush1.msra.mxu0 0.0
    %333 = vmatprep.subr.mxu0 0.0
    %334 = vmatpush1.msra.mxu0 0.0
    %335 = vmatprep.subr.mxu0 0.0
    %336 = vmatpush1.msra.mxu0 0.0
    %337 = vmatprep.subr.mxu0 0.0
    %338 = vmatpush1.msra.mxu0 0.0
    %339 = vmatprep.subr.mxu0 0.0
    %340 = vmatpush1.msra.mxu0 0.0
    %341 = vmatprep.subr.mxu0 0.0
    %342 = vmatpush1.msra.mxu0 0.0
    %343 = vmatprep.subr.mxu0 0.0
    %344 = vmatpush1.msra.mxu0 0.0
    %345 = vmatprep.subr.mxu0 0.0
    %346 = vmatpush1.msra.mxu0 0.0
    %347 = vmatprep.subr.mxu0 0.0
    %348 = vmatpush1.msra.mxu0 0.0
    %349 = vmatprep.subr.mxu0 0.0
    %350 = vmatpush1.msra.mxu0 0.0
    %351 = vmatprep.subr.mxu0 0.0
    %352 = vmatpush1.msra.mxu0 0.0
    %353 = vmatprep.subr.mxu0 0.0
    %354 = vmatpush1.msra.mxu0 0.0
    %355 = vmatprep.subr.mxu0 0.0
    %356 = vmatpush1.msra.mxu0 0.0
    %357 = vmatprep.subr.mxu0 0.0
    %358 = vmatpush1.msra.mxu0 0.0
    %359 = vmatprep.subr.mxu0 0.0
    %360 = vmatpush1.msra.mxu0 0.0
    %361 = vmatprep.subr.mxu0 0.0
    %362 = vmatpush1.msra.mxu0 0.0
    %363 = vmatprep.subr.mxu0 0.0
    %364 = vmatpush1.msra.mxu0 0.0
    %365 = vmatprep.subr.mxu0 0.0
    %366 = vmatpush1.msra.mxu0 0.0
    %367 = vmatprep.subr.mxu0 0.0
    %368 = vmatpush1.msra.mxu0 0.0
    %369 = vmatprep.subr.mxu0 0.0
    %370 = vmatpush1.msra.mxu0 0.0
    %371 = vmatprep.subr.mxu0 0.0
    %372 = vmatpush1.msra.mxu0 0.0
    %373 = vmatprep.mubr.f32.mxu0 0.0
    %374 = vmatmul.mubr.f32.gmra.mrb[0].mxu0 %v304
    %v375 = vpop.f32.mrb[0].mxu0
    %v376 = vadd.f32 0.0, %v375
    %v377 = vpop.f32.mrb[0].mxu0
    %378 = vmatprep.mubr.f32.mxu0 0.0
    %379 = vmatmul.mubr.f32.gmra.mrb[0].mxu0 %v307
    %v380 = vpop.f32.mrb[0].mxu0
    %v381 = vadd.f32 0.0, %v380
    %v382 = vpop.f32.mrb[0].mxu0
    %383 = vdwg.mxu0
    %384 = vmatprep.subr.mxu0 0.0
    %385 = vmatpush1.msra.mxu0 %v235
    %386 = vmatprep.subr.mxu0 0.0
    %387 = vmatpush1.msra.mxu0 %v240
    %388 = vmatprep.subr.mxu0 0.0
    %389 = vmatpush1.msra.mxu0 0.0
    %390 = vmatprep.subr.mxu0 0.0
    %391 = vmatpush1.msra.mxu0 0.0
    %392 = vmatprep.subr.mxu0 0.0
    %393 = vmatpush1.msra.mxu0 0.0
    %394 = vmatprep.subr.mxu0 0.0
    %395 = vmatpush1.msra.mxu0 0.0
    %396 = vmatprep.subr.mxu0 0.0
    %397 = vmatpush1.msra.mxu0 0.0
    %398 = vmatprep.subr.mxu0 0.0
    %399 = vmatpush1.msra.mxu0 0.0
    %400 = vmatprep.subr.mxu0 0.0
    %401 = vmatpush1.msra.mxu0 0.0
    %402 = vmatprep.subr.mxu0 0.0
    %403 = vmatpush1.msra.mxu0 0.0
    %404 = vmatprep.subr.mxu0 0.0
    %405 = vmatpush1.msra.mxu0 0.0
    %406 = vmatprep.subr.mxu0 0.0
    %407 = vmatpush1.msra.mxu0 0.0
    %408 = vmatprep.subr.mxu0 0.0
    %409 = vmatpush1.msra.mxu0 0.0
    %410 = vmatprep.subr.mxu0 0.0
    %411 = vmatpush1.msra.mxu0 0.0
    %412 = vmatprep.subr.mxu0 0.0
    %413 = vmatpush1.msra.mxu0 0.0
    %414 = vmatprep.subr.mxu0 0.0
    %415 = vmatpush1.msra.mxu0 0.0
    %416 = vmatprep.subr.mxu0 0.0
    %417 = vmatpush1.msra.mxu0 0.0
    %418 = vmatprep.subr.mxu0 0.0
    %419 = vmatpush1.msra.mxu0 0.0
    %420 = vmatprep.subr.mxu0 0.0
    %421 = vmatpush1.msra.mxu0 0.0
    %422 = vmatprep.subr.mxu0 0.0
    %423 = vmatpush1.msra.mxu0 0.0
    %424 = vmatprep.subr.mxu0 0.0
    %425 = vmatpush1.msra.mxu0 0.0
    %426 = vmatprep.subr.mxu0 0.0
    %427 = vmatpush1.msra.mxu0 0.0
    %428 = vmatprep.subr.mxu0 0.0
    %429 = vmatpush1.msra.mxu0 0.0
    %430 = vmatprep.subr.mxu0 0.0
    %431 = vmatpush1.msra.mxu0 0.0
    %432 = vmatprep.subr.mxu0 0.0
    %433 = vmatpush1.msra.mxu0 0.0
    %434 = vmatprep.subr.mxu0 0.0
    %435 = vmatpush1.msra.mxu0 0.0
    %436 = vmatprep.subr.mxu0 0.0
    %437 = vmatpush1.msra.mxu0 0.0
    %438 = vmatprep.subr.mxu0 0.0
    %439 = vmatpush1.msra.mxu0 0.0
    %440 = vmatprep.subr.mxu0 0.0
    %441 = vmatpush1.msra.mxu0 0.0
    %442 = vmatprep.subr.mxu0 0.0
    %443 = vmatpush1.msra.mxu0 0.0
    %444 = vmatprep.subr.mxu0 0.0
    %445 = vmatpush1.msra.mxu0 0.0
    %446 = vmatprep.subr.mxu0 0.0
    %447 = vmatpush1.msra.mxu0 0.0
    %448 = vmatprep.mubr.f32.mxu0 0.0
    %449 = vmatmul.mubr.f32.gmra.mrb[0].mxu0 %v304
    %v450 = vpop.f32.mrb[0].mxu0
    %v451 = vadd.f32 0.0, %v450
    %v452 = vpop.f32.mrb[0].mxu0
    %453 = vmatprep.mubr.f32.mxu0 0.0
    %454 = vmatmul.mubr.f32.gmra.mrb[0].mxu0 %v307
    %v455 = vpop.f32.mrb[0].mxu0
    %v456 = vadd.f32 0.0, %v455
    %v457 = vpop.f32.mrb[0].mxu0
    %458 = vdwg.mxu0
    %459 = vmatprep.subr.mxu0 0.0
    %460 = vmatpush1.msra.mxu0 %v245
    %461 = vmatprep.subr.mxu0 0.0
    %462 = vmatpush1.msra.mxu0 %v250
    %463 = vmatprep.subr.mxu0 0.0
    %464 = vmatpush1.msra.mxu0 0.0
    %465 = vmatprep.subr.mxu0 0.0
    %466 = vmatpush1.msra.mxu0 0.0
    %467 = vmatprep.subr.mxu0 0.0
    %468 = vmatpush1.msra.mxu0 0.0
    %469 = vmatprep.subr.mxu0 0.0
    %470 = vmatpush1.msra.mxu0 0.0
    %471 = vmatprep.subr.mxu0 0.0
    %472 = vmatpush1.msra.mxu0 0.0
    %473 = vmatprep.subr.mxu0 0.0
    %474 = vmatpush1.msra.mxu0 0.0
    %475 = vmatprep.subr.mxu0 0.0
    %476 = vmatpush1.msra.mxu0 0.0
    %477 = vmatprep.subr.mxu0 0.0
    %478 = vmatpush1.msra.mxu0 0.0
    %479 = vmatprep.subr.mxu0 0.0
    %480 = vmatpush1.msra.mxu0 0.0
    %481 = vmatprep.subr.mxu0 0.0
    %482 = vmatpush1.msra.mxu0 0.0
    %483 = vmatprep.subr.mxu0 0.0
    %484 = vmatpush1.msra.mxu0 0.0
    %485 = vmatprep.subr.mxu0 0.0
    %486 = vmatpush1.msra.mxu0 0.0
    %487 = vmatprep.subr.mxu0 0.0
    %488 = vmatpush1.msra.mxu0 0.0
    %489 = vmatprep.subr.mxu0 0.0
    %490 = vmatpush1.msra.mxu0 0.0
    %491 = vmatprep.subr.mxu0 0.0
    %492 = vmatpush1.msra.mxu0 0.0
    %493 = vmatprep.subr.mxu0 0.0
    %494 = vmatpush1.msra.mxu0 0.0
    %495 = vmatprep.subr.mxu0 0.0
    %496 = vmatpush1.msra.mxu0 0.0
    %497 = vmatprep.subr.mxu0 0.0
    %498 = vmatpush1.msra.mxu0 0.0
    %499 = vmatprep.subr.mxu0 0.0
    %500 = vmatpush1.msra.mxu0 0.0
    %501 = vmatprep.subr.mxu0 0.0
    %502 = vmatpush1.msra.mxu0 0.0
    %503 = vmatprep.subr.mxu0 0.0
    %504 = vmatpush1.msra.mxu0 0.0
    %505 = vmatprep.subr.mxu0 0.0
    %506 = vmatpush1.msra.mxu0 0.0
    %507 = vmatprep.subr.mxu0 0.0
    %508 = vmatpush1.msra.mxu0 0.0
    %509 = vmatprep.subr.mxu0 0.0
    %510 = vmatpush1.msra.mxu0 0.0
    %511 = vmatprep.subr.mxu0 0.0
    %512 = vmatpush1.msra.mxu0 0.0
    %513 = vmatprep.subr.mxu0 0.0
    %514 = vmatpush1.msra.mxu0 0.0
    %515 = vmatprep.subr.mxu0 0.0
    %516 = vmatpush1.msra.mxu0 0.0
    %517 = vmatprep.subr.mxu0 0.0
    %518 = vmatpush1.msra.mxu0 0.0
    %519 = vmatprep.subr.mxu0 0.0
    %520 = vmatpush1.msra.mxu0 0.0
    %521 = vmatprep.subr.mxu0 0.0
    %522 = vmatpush1.msra.mxu0 0.0
    %523 = vmatprep.mubr.f32.mxu0 0.0
    %524 = vmatmul.mubr.f32.gmra.mrb[0].mxu0 %v304
    %v525 = vpop.f32.mrb[0].mxu0
    %v526 = vadd.f32 0.0, %v525
    %v527 = vpop.f32.mrb[0].mxu0
    %528 = vmatprep.mubr.f32.mxu0 0.0
    %529 = vmatmul.mubr.f32.gmra.mrb[0].mxu0 %v307
    %v530 = vpop.f32.mrb[0].mxu0
    %v531 = vadd.f32 0.0, %v530
    %v532 = vpop.f32.mrb[0].mxu0
    %533 = vdwg.mxu0
    %534 = vmatprep.subr.mxu0 0.0
    %535 = vmatpush1.msra.mxu0 %v255
    %536 = vmatprep.subr.mxu0 0.0
    %537 = vmatpush1.msra.mxu0 %v260
    %538 = vmatprep.subr.mxu0 0.0
    %539 = vmatpush1.msra.mxu0 0.0
    %540 = vmatprep.subr.mxu0 0.0
    %541 = vmatpush1.msra.mxu0 0.0
    %542 = vmatprep.subr.mxu0 0.0
    %543 = vmatpush1.msra.mxu0 0.0
    %544 = vmatprep.subr.mxu0 0.0
    %545 = vmatpush1.msra.mxu0 0.0
    %546 = vmatprep.subr.mxu0 0.0
    %547 = vmatpush1.msra.mxu0 0.0
    %548 = vmatprep.subr.mxu0 0.0
    %549 = vmatpush1.msra.mxu0 0.0
    %550 = vmatprep.subr.mxu0 0.0
    %551 = vmatpush1.msra.mxu0 0.0
    %552 = vmatprep.subr.mxu0 0.0
    %553 = vmatpush1.msra.mxu0 0.0
    %554 = vmatprep.subr.mxu0 0.0
    %555 = vmatpush1.msra.mxu0 0.0
    %556 = vmatprep.subr.mxu0 0.0
    %557 = vmatpush1.msra.mxu0 0.0
    %558 = vmatprep.subr.mxu0 0.0
    %559 = vmatpush1.msra.mxu0 0.0
    %560 = vmatprep.subr.mxu0 0.0
    %561 = vmatpush1.msra.mxu0 0.0
    %562 = vmatprep.subr.mxu0 0.0
    %563 = vmatpush1.msra.mxu0 0.0
    %564 = vmatprep.subr.mxu0 0.0
    %565 = vmatpush1.msra.mxu0 0.0
    %566 = vmatprep.subr.mxu0 0.0
    %567 = vmatpush1.msra.mxu0 0.0
    %568 = vmatprep.subr.mxu0 0.0
    %569 = vmatpush1.msra.mxu0 0.0
    %570 = vmatprep.subr.mxu0 0.0
    %571 = vmatpush1.msra.mxu0 0.0
    %572 = vmatprep.subr.mxu0 0.0
    %573 = vmatpush1.msra.mxu0 0.0
    %574 = vmatprep.subr.mxu0 0.0
    %575 = vmatpush1.msra.mxu0 0.0
    %576 = vmatprep.subr.mxu0 0.0
    %577 = vmatpush1.msra.mxu0 0.0
    %578 = vmatprep.subr.mxu0 0.0
    %579 = vmatpush1.msra.mxu0 0.0
    %580 = vmatprep.subr.mxu0 0.0
    %581 = vmatpush1.msra.mxu0 0.0
    %582 = vmatprep.subr.mxu0 0.0
    %583 = vmatpush1.msra.mxu0 0.0
    %584 = vmatprep.subr.mxu0 0.0
    %585 = vmatpush1.msra.mxu0 0.0
    %586 = vmatprep.subr.mxu0 0.0
    %587 = vmatpush1.msra.mxu0 0.0
    %588 = vmatprep.subr.mxu0 0.0
    %589 = vmatpush1.msra.mxu0 0.0
    %590 = vmatprep.subr.mxu0 0.0
    %591 = vmatpush1.msra.mxu0 0.0
    %592 = vmatprep.subr.mxu0 0.0
    %593 = vmatpush1.msra.mxu0 0.0
    %594 = vmatprep.subr.mxu0 0.0
    %595 = vmatpush1.msra.mxu0 0.0
    %596 = vmatprep.subr.mxu0 0.0
    %597 = vmatpush1.msra.mxu0 0.0
    %598 = vmatprep.mubr.f32.mxu0 0.0
    %599 = vmatmul.mubr.f32.gmra.mrb[0].mxu0 %v304
    %v600 = vpop.f32.mrb[0].mxu0
    %v601 = vadd.f32 0.0, %v600
    %v602 = vpop.f32.mrb[0].mxu0
    %603 = vmatprep.mubr.f32.mxu0 0.0
    %604 = vmatmul.mubr.f32.gmra.mrb[0].mxu0 %v307
    %v605 = vpop.f32.mrb[0].mxu0
    %v606 = vadd.f32 0.0, %v605
    %v607 = vpop.f32.mrb[0].mxu0
    %608 = vdwg.mxu0
    %609 = vmatprep.subr.mxu0 0.0
    %610 = vmatpush1.msra.mxu0 %v265
    %611 = vmatprep.subr.mxu0 0.0
    %612 = vmatpush1.msra.mxu0 %v270
    %613 = vmatprep.subr.mxu0 0.0
    %614 = vmatpush1.msra.mxu0 0.0
    %615 = vmatprep.subr.mxu0 0.0
    %616 = vmatpush1.msra.mxu0 0.0
    %617 = vmatprep.subr.mxu0 0.0
    %618 = vmatpush1.msra.mxu0 0.0
    %619 = vmatprep.subr.mxu0 0.0
    %620 = vmatpush1.msra.mxu0 0.0
    %621 = vmatprep.subr.mxu0 0.0
    %622 = vmatpush1.msra.mxu0 0.0
    %623 = vmatprep.subr.mxu0 0.0
    %624 = vmatpush1.msra.mxu0 0.0
    %625 = vmatprep.subr.mxu0 0.0
    %626 = vmatpush1.msra.mxu0 0.0
    %627 = vmatprep.subr.mxu0 0.0
    %628 = vmatpush1.msra.mxu0 0.0
    %629 = vmatprep.subr.mxu0 0.0
    %630 = vmatpush1.msra.mxu0 0.0
    %631 = vmatprep.subr.mxu0 0.0
    %632 = vmatpush1.msra.mxu0 0.0
    %633 = vmatprep.subr.mxu0 0.0
    %634 = vmatpush1.msra.mxu0 0.0
    %635 = vmatprep.subr.mxu0 0.0
    %636 = vmatpush1.msra.mxu0 0.0
    %637 = vmatprep.subr.mxu0 0.0
    %638 = vmatpush1.msra.mxu0 0.0
    %639 = vmatprep.subr.mxu0 0.0
    %640 = vmatpush1.msra.mxu0 0.0
    %641 = vmatprep.subr.mxu0 0.0
    %642 = vmatpush1.msra.mxu0 0.0
    %643 = vmatprep.subr.mxu0 0.0
    %644 = vmatpush1.msra.mxu0 0.0
    %645 = vmatprep.subr.mxu0 0.0
    %646 = vmatpush1.msra.mxu0 0.0
    %647 = vmatprep.subr.mxu0 0.0
    %648 = vmatpush1.msra.mxu0 0.0
    %649 = vmatprep.subr.mxu0 0.0
    %650 = vmatpush1.msra.mxu0 0.0
    %651 = vmatprep.subr.mxu0 0.0
    %652 = vmatpush1.msra.mxu0 0.0
    %653 = vmatprep.subr.mxu0 0.0
    %654 = vmatpush1.msra.mxu0 0.0
    %655 = vmatprep.subr.mxu0 0.0
    %656 = vmatpush1.msra.mxu0 0.0
    %657 = vmatprep.subr.mxu0 0.0
    %658 = vmatpush1.msra.mxu0 0.0
    %659 = vmatprep.subr.mxu0 0.0
    %660 = vmatpush1.msra.mxu0 0.0
    %661 = vmatprep.subr.mxu0 0.0
    %662 = vmatpush1.msra.mxu0 0.0
    %663 = vmatprep.subr.mxu0 0.0
    %664 = vmatpush1.msra.mxu0 0.0
    %665 = vmatprep.subr.mxu0 0.0
    %666 = vmatpush1.msra.mxu0 0.0
    %667 = vmatprep.subr.mxu0 0.0
    %668 = vmatpush1.msra.mxu0 0.0
    %669 = vmatprep.subr.mxu0 0.0
    %670 = vmatpush1.msra.mxu0 0.0
    %671 = vmatprep.subr.mxu0 0.0
    %672 = vmatpush1.msra.mxu0 0.0
    %673 = vmatprep.mubr.f32.mxu0 0.0
    %674 = vmatmul.mubr.f32.gmra.mrb[0].mxu0 %v304
    %v675 = vpop.f32.mrb[0].mxu0
    %v676 = vadd.f32 0.0, %v675
    %v677 = vpop.f32.mrb[0].mxu0
    %678 = vmatprep.mubr.f32.mxu0 0.0
    %679 = vmatmul.mubr.f32.gmra.mrb[0].mxu0 %v307
    %v680 = vpop.f32.mrb[0].mxu0
    %v681 = vadd.f32 0.0, %v680
    %v682 = vpop.f32.mrb[0].mxu0
    %683 = vdwg.mxu0
    %684 = vmatprep.subr.mxu0 0.0
    %685 = vmatpush1.msra.mxu0 %v275
    %686 = vmatprep.subr.mxu0 0.0
    %687 = vmatpush1.msra.mxu0 %v280
    %688 = vmatprep.subr.mxu0 0.0
    %689 = vmatpush1.msra.mxu0 0.0
    %690 = vmatprep.subr.mxu0 0.0
    %691 = vmatpush1.msra.mxu0 0.0
    %692 = vmatprep.subr.mxu0 0.0
    %693 = vmatpush1.msra.mxu0 0.0
    %694 = vmatprep.subr.mxu0 0.0
    %695 = vmatpush1.msra.mxu0 0.0
    %696 = vmatprep.subr.mxu0 0.0
    %697 = vmatpush1.msra.mxu0 0.0
    %698 = vmatprep.subr.mxu0 0.0
    %699 = vmatpush1.msra.mxu0 0.0
    %700 = vmatprep.subr.mxu0 0.0
    %701 = vmatpush1.msra.mxu0 0.0
    %702 = vmatprep.subr.mxu0 0.0
    %703 = vmatpush1.msra.mxu0 0.0
    %704 = vmatprep.subr.mxu0 0.0
    %705 = vmatpush1.msra.mxu0 0.0
    %706 = vmatprep.subr.mxu0 0.0
    %707 = vmatpush1.msra.mxu0 0.0
    %708 = vmatprep.subr.mxu0 0.0
    %709 = vmatpush1.msra.mxu0 0.0
    %710 = vmatprep.subr.mxu0 0.0
    %711 = vmatpush1.msra.mxu0 0.0
    %712 = vmatprep.subr.mxu0 0.0
    %713 = vmatpush1.msra.mxu0 0.0
    %714 = vmatprep.subr.mxu0 0.0
    %715 = vmatpush1.msra.mxu0 0.0
    %716 = vmatprep.subr.mxu0 0.0
    %717 = vmatpush1.msra.mxu0 0.0
    %718 = vmatprep.subr.mxu0 0.0
    %719 = vmatpush1.msra.mxu0 0.0
    %720 = vmatprep.subr.mxu0 0.0
    %721 = vmatpush1.msra.mxu0 0.0
    %722 = vmatprep.subr.mxu0 0.0
    %723 = vmatpush1.msra.mxu0 0.0
    %724 = vmatprep.subr.mxu0 0.0
    %725 = vmatpush1.msra.mxu0 0.0
    %726 = vmatprep.subr.mxu0 0.0
    %727 = vmatpush1.msra.mxu0 0.0
    %728 = vmatprep.subr.mxu0 0.0
    %729 = vmatpush1.msra.mxu0 0.0
    %730 = vmatprep.subr.mxu0 0.0
    %731 = vmatpush1.msra.mxu0 0.0
    %732 = vmatprep.subr.mxu0 0.0
    %733 = vmatpush1.msra.mxu0 0.0
    %734 = vmatprep.subr.mxu0 0.0
    %735 = vmatpush1.msra.mxu0 0.0
    %736 = vmatprep.subr.mxu0 0.0
    %737 = vmatpush1.msra.mxu0 0.0
    %738 = vmatprep.subr.mxu0 0.0
    %739 = vmatpush1.msra.mxu0 0.0
    %740 = vmatprep.subr.mxu0 0.0
    %741 = vmatpush1.msra.mxu0 0.0
    %742 = vmatprep.subr.mxu0 0.0
    %743 = vmatpush1.msra.mxu0 0.0
    %744 = vmatprep.subr.mxu0 0.0
    %745 = vmatpush1.msra.mxu0 0.0
    %746 = vmatprep.subr.mxu0 0.0
    %747 = vmatpush1.msra.mxu0 0.0
    %748 = vmatprep.mubr.f32.mxu0 0.0
    %749 = vmatmul.mubr.f32.gmra.mrb[0].mxu0 %v304
    %v750 = vpop.f32.mrb[0].mxu0
    %v751 = vadd.f32 0.0, %v750
    %v752 = vpop.f32.mrb[0].mxu0
    %753 = vmatprep.mubr.f32.mxu0 0.0
    %754 = vmatmul.mubr.f32.gmra.mrb[0].mxu0 %v307
    %v755 = vpop.f32.mrb[0].mxu0
    %v756 = vadd.f32 0.0, %v755
    %v757 = vpop.f32.mrb[0].mxu0
    %758 = vdwg.mxu0
    %759 = vmatprep.subr.mxu0 0.0
    %760 = vmatpush1.msra.mxu0 %v285
    %761 = vmatprep.subr.mxu0 0.0
    %762 = vmatpush1.msra.mxu0 %v290
    %763 = vmatprep.subr.mxu0 0.0
    %764 = vmatpush1.msra.mxu0 0.0
    %765 = vmatprep.subr.mxu0 0.0
    %766 = vmatpush1.msra.mxu0 0.0
    %767 = vmatprep.subr.mxu0 0.0
    %768 = vmatpush1.msra.mxu0 0.0
    %769 = vmatprep.subr.mxu0 0.0
    %770 = vmatpush1.msra.mxu0 0.0
    %771 = vmatprep.subr.mxu0 0.0
    %772 = vmatpush1.msra.mxu0 0.0
    %773 = vmatprep.subr.mxu0 0.0
    %774 = vmatpush1.msra.mxu0 0.0
    %775 = vmatprep.subr.mxu0 0.0
    %776 = vmatpush1.msra.mxu0 0.0
    %777 = vmatprep.subr.mxu0 0.0
    %778 = vmatpush1.msra.mxu0 0.0
    %779 = vmatprep.subr.mxu0 0.0
    %780 = vmatpush1.msra.mxu0 0.0
    %781 = vmatprep.subr.mxu0 0.0
    %782 = vmatpush1.msra.mxu0 0.0
    %783 = vmatprep.subr.mxu0 0.0
    %784 = vmatpush1.msra.mxu0 0.0
    %785 = vmatprep.subr.mxu0 0.0
    %786 = vmatpush1.msra.mxu0 0.0
    %787 = vmatprep.subr.mxu0 0.0
    %788 = vmatpush1.msra.mxu0 0.0
    %789 = vmatprep.subr.mxu0 0.0
    %790 = vmatpush1.msra.mxu0 0.0
    %791 = vmatprep.subr.mxu0 0.0
    %792 = vmatpush1.msra.mxu0 0.0
    %793 = vmatprep.subr.mxu0 0.0
    %794 = vmatpush1.msra.mxu0 0.0
    %795 = vmatprep.subr.mxu0 0.0
    %796 = vmatpush1.msra.mxu0 0.0
    %797 = vmatprep.subr.mxu0 0.0
    %798 = vmatpush1.msra.mxu0 0.0
    %799 = vmatprep.subr.mxu0 0.0
    %800 = vmatpush1.msra.mxu0 0.0
    %801 = vmatprep.subr.mxu0 0.0
    %802 = vmatpush1.msra.mxu0 0.0
    %803 = vmatprep.subr.mxu0 0.0
    %804 = vmatpush1.msra.mxu0 0.0
    %805 = vmatprep.subr.mxu0 0.0
    %806 = vmatpush1.msra.mxu0 0.0
    %807 = vmatprep.subr.mxu0 0.0
    %808 = vmatpush1.msra.mxu0 0.0
    %809 = vmatprep.subr.mxu0 0.0
    %810 = vmatpush1.msra.mxu0 0.0
    %811 = vmatprep.subr.mxu0 0.0
    %812 = vmatpush1.msra.mxu0 0.0
    %813 = vmatprep.subr.mxu0 0.0
    %814 = vmatpush1.msra.mxu0 0.0
    %815 = vmatprep.subr.mxu0 0.0
    %816 = vmatpush1.msra.mxu0 0.0
    %817 = vmatprep.subr.mxu0 0.0
    %818 = vmatpush1.msra.mxu0 0.0
    %819 = vmatprep.subr.mxu0 0.0
    %820 = vmatpush1.msra.mxu0 0.0
    %821 = vmatprep.subr.mxu0 0.0
    %822 = vmatpush1.msra.mxu0 0.0
    %823 = vmatprep.mubr.f32.mxu0 0.0
    %824 = vmatmul.mubr.f32.gmra.mrb[0].mxu0 %v304
    %v825 = vpop.f32.mrb[0].mxu0
    %v826 = vadd.f32 0.0, %v825
    %v827 = vpop.f32.mrb[0].mxu0
    %828 = vmatprep.mubr.f32.mxu0 0.0
    %829 = vmatmul.mubr.f32.gmra.mrb[0].mxu0 %v307
    %v830 = vpop.f32.mrb[0].mxu0
    %v831 = vadd.f32 0.0, %v830
    %v832 = vpop.f32.mrb[0].mxu0
    %833 = vdwg.mxu0
    %834 = vmatprep.subr.mxu0 0.0
    %835 = vmatpush1.msra.mxu0 %v295
    %836 = vmatprep.subr.mxu0 0.0
    %837 = vmatpush1.msra.mxu0 %v300
    %838 = vmatprep.subr.mxu0 0.0
    %839 = vmatpush1.msra.mxu0 0.0
    %840 = vmatprep.subr.mxu0 0.0
    %841 = vmatpush1.msra.mxu0 0.0
    %842 = vmatprep.subr.mxu0 0.0
    %843 = vmatpush1.msra.mxu0 0.0
    %844 = vmatprep.subr.mxu0 0.0
    %845 = vmatpush1.msra.mxu0 0.0
    %846 = vmatprep.subr.mxu0 0.0
    %847 = vmatpush1.msra.mxu0 0.0
    %848 = vmatprep.subr.mxu0 0.0
    %849 = vmatpush1.msra.mxu0 0.0
    %850 = vmatprep.subr.mxu0 0.0
    %851 = vmatpush1.msra.mxu0 0.0
    %852 = vmatprep.subr.mxu0 0.0
    %853 = vmatpush1.msra.mxu0 0.0
    %854 = vmatprep.subr.mxu0 0.0
    %855 = vmatpush1.msra.mxu0 0.0
    %856 = vmatprep.subr.mxu0 0.0
    %857 = vmatpush1.msra.mxu0 0.0
    %858 = vmatprep.subr.mxu0 0.0
    %859 = vmatpush1.msra.mxu0 0.0
    %860 = vmatprep.subr.mxu0 0.0
    %861 = vmatpush1.msra.mxu0 0.0
    %862 = vmatprep.subr.mxu0 0.0
    %863 = vmatpush1.msra.mxu0 0.0
    %864 = vmatprep.subr.mxu0 0.0
    %865 = vmatpush1.msra.mxu0 0.0
    %866 = vmatprep.subr.mxu0 0.0
    %867 = vmatpush1.msra.mxu0 0.0
    %868 = vmatprep.subr.mxu0 0.0
    %869 = vmatpush1.msra.mxu0 0.0
    %870 = vmatprep.subr.mxu0 0.0
    %871 = vmatpush1.msra.mxu0 0.0
    %872 = vmatprep.subr.mxu0 0.0
    %873 = vmatpush1.msra.mxu0 0.0
    %874 = vmatprep.subr.mxu0 0.0
    %875 = vmatpush1.msra.mxu0 0.0
    %876 = vmatprep.subr.mxu0 0.0
    %877 = vmatpush1.msra.mxu0 0.0
    %878 = vmatprep.subr.mxu0 0.0
    %879 = vmatpush1.msra.mxu0 0.0
    %880 = vmatprep.subr.mxu0 0.0
    %881 = vmatpush1.msra.mxu0 0.0
    %882 = vmatprep.subr.mxu0 0.0
    %883 = vmatpush1.msra.mxu0 0.0
    %884 = vmatprep.subr.mxu0 0.0
    %885 = vmatpush1.msra.mxu0 0.0
    %886 = vmatprep.subr.mxu0 0.0
    %887 = vmatpush1.msra.mxu0 0.0
    %888 = vmatprep.subr.mxu0 0.0
    %889 = vmatpush1.msra.mxu0 0.0
    %890 = vmatprep.subr.mxu0 0.0
    %891 = vmatpush1.msra.mxu0 0.0
    %892 = vmatprep.subr.mxu0 0.0
    %893 = vmatpush1.msra.mxu0 0.0
    %894 = vmatprep.subr.mxu0 0.0
    %895 = vmatpush1.msra.mxu0 0.0
    %896 = vmatprep.subr.mxu0 0.0
    %897 = vmatpush1.msra.mxu0 0.0
    %898 = vmatprep.mubr.f32.mxu0 0.0
    %899 = vmatmul.mubr.f32.gmra.mrb[0].mxu0 %v304
    %v900 = vpop.f32.mrb[0].mxu0
    %v901 = vadd.f32 0.0, %v900
    %v902 = vpop.f32.mrb[0].mxu0
    %903 = vmatprep.mubr.f32.mxu0 0.0
    %904 = vmatmul.mubr.f32.gmra.mrb[0].mxu0 %v307
    %v905 = vpop.f32.mrb[0].mxu0
    %v906 = vadd.f32 0.0, %v905
    %v907 = vpop.f32.mrb[0].mxu0
    %908 = vdwg.mxu0
    %v910 = vsel %vm109, %v93, 0
    %v913 = vsel %vm109, %v94, 0
    %v916 = vsel %vm109, %v95, 0
    %v919 = vsel %vm109, %v96, 0
    %v922 = vsel %vm109, %v97, 0
    %v925 = vsel %vm109, %v98, 0
    %v928 = vsel %vm109, %v99, 0
    %v931 = vsel %vm109, %v100, 0
    %v934 = vsel %vm109, %v101, 0
    %v937 = vsel %vm109, %v102, 0
    %v940 = vsel %vm109, %v103, 0
    %v943 = vsel %vm109, %v104, 0
    %v946 = vsel %vm109, %v105, 0
    %v949 = vsel %vm109, %v106, 0
    %v952 = vsel %vm109, %v107, 0
    %v955 = vsel %vm109, %v108, 0
    %957 = vmatprep.subr.mxu0 0.0
    %958 = vmatpush1.msra.mxu0 %v75
    %959 = vmatprep.subr.mxu0 0.0
    %960 = vmatpush1.msra.mxu0 %v76
    %961 = vmatprep.subr.mxu0 0.0
    %962 = vmatpush1.msra.mxu0 0.0
    %963 = vmatprep.subr.mxu0 0.0
    %964 = vmatpush1.msra.mxu0 0.0
    %965 = vmatprep.subr.mxu0 0.0
    %966 = vmatpush1.msra.mxu0 0.0
    %967 = vmatprep.subr.mxu0 0.0
    %968 = vmatpush1.msra.mxu0 0.0
    %969 = vmatprep.subr.mxu0 0.0
    %970 = vmatpush1.msra.mxu0 0.0
    %971 = vmatprep.subr.mxu0 0.0
    %972 = vmatpush1.msra.mxu0 0.0
    %973 = vmatprep.subr.mxu0 0.0
    %974 = vmatpush1.msra.mxu0 0.0
    %975 = vmatprep.subr.mxu0 0.0
    %976 = vmatpush1.msra.mxu0 0.0
    %977 = vmatprep.subr.mxu0 0.0
    %978 = vmatpush1.msra.mxu0 0.0
    %979 = vmatprep.subr.mxu0 0.0
    %980 = vmatpush1.msra.mxu0 0.0
    %981 = vmatprep.subr.mxu0 0.0
    %982 = vmatpush1.msra.mxu0 0.0
    %983 = vmatprep.subr.mxu0 0.0
    %984 = vmatpush1.msra.mxu0 0.0
    %985 = vmatprep.subr.mxu0 0.0
    %986 = vmatpush1.msra.mxu0 0.0
    %987 = vmatprep.subr.mxu0 0.0
    %988 = vmatpush1.msra.mxu0 0.0
    %989 = vmatprep.subr.mxu0 0.0
    %990 = vmatpush1.msra.mxu0 0.0
    %991 = vmatprep.subr.mxu0 0.0
    %992 = vmatpush1.msra.mxu0 0.0
    %993 = vmatprep.subr.mxu0 0.0
    %994 = vmatpush1.msra.mxu0 0.0
    %995 = vmatprep.subr.mxu0 0.0
    %996 = vmatpush1.msra.mxu0 0.0
    %997 = vmatprep.subr.mxu0 0.0
    %998 = vmatpush1.msra.mxu0 0.0
    %999 = vmatprep.subr.mxu0 0.0
    %1000 = vmatpush1.msra.mxu0 0.0
    %1001 = vmatprep.subr.mxu0 0.0
    %1002 = vmatpush1.msra.mxu0 0.0
    %1003 = vmatprep.subr.mxu0 0.0
    %1004 = vmatpush1.msra.mxu0 0.0
    %1005 = vmatprep.subr.mxu0 0.0
    %1006 = vmatpush1.msra.mxu0 0.0
    %1007 = vmatprep.subr.mxu0 0.0
    %1008 = vmatpush1.msra.mxu0 0.0
    %1009 = vmatprep.subr.mxu0 0.0
    %1010 = vmatpush1.msra.mxu0 0.0
    %1011 = vmatprep.subr.mxu0 0.0
    %1012 = vmatpush1.msra.mxu0 0.0
    %1013 = vmatprep.subr.mxu0 0.0
    %1014 = vmatpush1.msra.mxu0 0.0
    %1015 = vmatprep.subr.mxu0 0.0
    %1016 = vmatpush1.msra.mxu0 0.0
    %1017 = vmatprep.subr.mxu0 0.0
    %1018 = vmatpush1.msra.mxu0 0.0
    %1019 = vmatprep.subr.mxu0 0.0
    %1020 = vmatpush1.msra.mxu0 0.0
    %1021 = vmatprep.mubr.f32.mxu0 0.0
    %1022 = vmatmul.mubr.f32.gmra.mrb[0].mxu0 %v910
    %v1023 = vpop.f32.mrb[0].mxu0
    %v1024 = vadd.f32 0.0, %v1023
    %v1025 = vpop.f32.mrb[0].mxu0
    %1026 = vmatprep.mubr.f32.mxu0 0.0
    %1027 = vmatmul.mubr.f32.gmra.mrb[0].mxu0 %v913
    %v1028 = vpop.f32.mrb[0].mxu0
    %v1029 = vadd.f32 0.0, %v1028
    %v1030 = vpop.f32.mrb[0].mxu0
    %1031 = vmatprep.mubr.f32.mxu0 0.0
    %1032 = vmatmul.mubr.f32.gmra.mrb[0].mxu0 %v916
    %v1033 = vpop.f32.mrb[0].mxu0
    %v1034 = vadd.f32 0.0, %v1033
    %v1035 = vpop.f32.mrb[0].mxu0
    %1036 = vmatprep.mubr.f32.mxu0 0.0
    %1037 = vmatmul.mubr.f32.gmra.mrb[0].mxu0 %v919
    %v1038 = vpop.f32.mrb[0].mxu0
    %v1039 = vadd.f32 0.0, %v1038
    %v1040 = vpop.f32.mrb[0].mxu0
    %1041 = vmatprep.mubr.f32.mxu0 0.0
    %1042 = vmatmul.mubr.f32.gmra.mrb[0].mxu0 %v922
    %v1043 = vpop.f32.mrb[0].mxu0
    %v1044 = vadd.f32 0.0, %v1043
    %v1045 = vpop.f32.mrb[0].mxu0
    %1046 = vmatprep.mubr.f32.mxu0 0.0
    %1047 = vmatmul.mubr.f32.gmra.mrb[0].mxu0 %v925
    %v1048 = vpop.f32.mrb[0].mxu0
    %v1049 = vadd.f32 0.0, %v1048
    %v1050 = vpop.f32.mrb[0].mxu0
    %1051 = vmatprep.mubr.f32.mxu0 0.0
    %1052 = vmatmul.mubr.f32.gmra.mrb[0].mxu0 %v928
    %v1053 = vpop.f32.mrb[0].mxu0
    %v1054 = vadd.f32 0.0, %v1053
    %v1055 = vpop.f32.mrb[0].mxu0
    %1056 = vmatprep.mubr.f32.mxu0 0.0
    %1057 = vmatmul.mubr.f32.gmra.mrb[0].mxu0 %v931
    %v1058 = vpop.f32.mrb[0].mxu0
    %v1059 = vadd.f32 0.0, %v1058
    %v1060 = vpop.f32.mrb[0].mxu0
    %1061 = vmatprep.mubr.f32.mxu0 0.0
    %1062 = vmatmul.mubr.f32.gmra.mrb[0].mxu0 %v934
    %v1063 = vpop.f32.mrb[0].mxu0
    %v1064 = vadd.f32 0.0, %v1063
    %v1065 = vpop.f32.mrb[0].mxu0
    %1066 = vmatprep.mubr.f32.mxu0 0.0
    %1067 = vmatmul.mubr.f32.gmra.mrb[0].mxu0 %v937
    %v1068 = vpop.f32.mrb[0].mxu0
    %v1069 = vadd.f32 0.0, %v1068
    %v1070 = vpop.f32.mrb[0].mxu0
    %1071 = vmatprep.mubr.f32.mxu0 0.0
    %1072 = vmatmul.mubr.f32.gmra.mrb[0].mxu0 %v940
    %v1073 = vpop.f32.mrb[0].mxu0
    %v1074 = vadd.f32 0.0, %v1073
    %v1075 = vpop.f32.mrb[0].mxu0
    %1076 = vmatprep.mubr.f32.mxu0 0.0
    %1077 = vmatmul.mubr.f32.gmra.mrb[0].mxu0 %v943
    %v1078 = vpop.f32.mrb[0].mxu0
    %v1079 = vadd.f32 0.0, %v1078
    %v1080 = vpop.f32.mrb[0].mxu0
    %1081 = vmatprep.mubr.f32.mxu0 0.0
    %1082 = vmatmul.mubr.f32.gmra.mrb[0].mxu0 %v946
    %v1083 = vpop.f32.mrb[0].mxu0
    %v1084 = vadd.f32 0.0, %v1083
    %v1085 = vpop.f32.mrb[0].mxu0
    %1086 = vmatprep.mubr.f32.mxu0 0.0
    %1087 = vmatmul.mubr.f32.gmra.mrb[0].mxu0 %v949
    %v1088 = vpop.f32.mrb[0].mxu0
    %v1089 = vadd.f32 0.0, %v1088
    %v1090 = vpop.f32.mrb[0].mxu0
    %1091 = vmatprep.mubr.f32.mxu0 0.0
    %1092 = vmatmul.mubr.f32.gmra.mrb[0].mxu0 %v952
    %v1093 = vpop.f32.mrb[0].mxu0
    %v1094 = vadd.f32 0.0, %v1093
    %v1095 = vpop.f32.mrb[0].mxu0
    %1096 = vmatprep.mubr.f32.mxu0 0.0
    %1097 = vmatmul.mubr.f32.gmra.mrb[0].mxu0 %v955
    %v1098 = vpop.f32.mrb[0].mxu0
    %v1099 = vadd.f32 0.0, %v1098
    %v1100 = vpop.f32.mrb[0].mxu0
    %1101 = vdwg.mxu0
    %1102 = vmatprep.subr.mxu0 0.0
    %1103 = vmatpush1.msra.mxu0 %v1024
    %1104 = vmatprep.subr.mxu0 0.0
    %1105 = vmatpush1.msra.mxu0 %v1029
    %1106 = vmatprep.subr.mxu0 0.0
    %1107 = vmatpush1.msra.mxu0 0.0
    %1108 = vmatprep.subr.mxu0 0.0
    %1109 = vmatpush1.msra.mxu0 0.0
    %1110 = vmatprep.subr.mxu0 0.0
    %1111 = vmatpush1.msra.mxu0 0.0
    %1112 = vmatprep.subr.mxu0 0.0
    %1113 = vmatpush1.msra.mxu0 0.0
    %1114 = vmatprep.subr.mxu0 0.0
    %1115 = vmatpush1.msra.mxu0 0.0
    %1116 = vmatprep.subr.mxu0 0.0
    %1117 = vmatpush1.msra.mxu0 0.0
    %1118 = vmatprep.subr.mxu0 0.0
    %1119 = vmatpush1.msra.mxu0 0.0
    %1120 = vmatprep.subr.mxu0 0.0
    %1121 = vmatpush1.msra.mxu0 0.0
    %1122 = vmatprep.subr.mxu0 0.0
    %1123 = vmatpush1.msra.mxu0 0.0
    %1124 = vmatprep.subr.mxu0 0.0
    %1125 = vmatpush1.msra.mxu0 0.0
    %1126 = vmatprep.subr.mxu0 0.0
    %1127 = vmatpush1.msra.mxu0 0.0
    %1128 = vmatprep.subr.mxu0 0.0
    %1129 = vmatpush1.msra.mxu0 0.0
    %1130 = vmatprep.subr.mxu0 0.0
    %1131 = vmatpush1.msra.mxu0 0.0
    %1132 = vmatprep.subr.mxu0 0.0
    %1133 = vmatpush1.msra.mxu0 0.0
    %1134 = vmatprep.subr.mxu0 0.0
    %1135 = vmatpush1.msra.mxu0 0.0
    %1136 = vmatprep.subr.mxu0 0.0
    %1137 = vmatpush1.msra.mxu0 0.0
    %1138 = vmatprep.subr.mxu0 0.0
    %1139 = vmatpush1.msra.mxu0 0.0
    %1140 = vmatprep.subr.mxu0 0.0
    %1141 = vmatpush1.msra.mxu0 0.0
    %1142 = vmatprep.subr.mxu0 0.0
    %1143 = vmatpush1.msra.mxu0 0.0
    %1144 = vmatprep.subr.mxu0 0.0
    %1145 = vmatpush1.msra.mxu0 0.0
    %1146 = vmatprep.subr.mxu0 0.0
    %1147 = vmatpush1.msra.mxu0 0.0
    %1148 = vmatprep.subr.mxu0 0.0
    %1149 = vmatpush1.msra.mxu0 0.0
    %1150 = vmatprep.subr.mxu0 0.0
    %1151 = vmatpush1.msra.mxu0 0.0
    %1152 = vmatprep.subr.mxu0 0.0
    %1153 = vmatpush1.msra.mxu0 0.0
    %1154 = vmatprep.subr.mxu0 0.0
    %1155 = vmatpush1.msra.mxu0 0.0
    %1156 = vmatprep.subr.mxu0 0.0
    %1157 = vmatpush1.msra.mxu0 0.0
    %1158 = vmatprep.subr.mxu0 0.0
    %1159 = vmatpush1.msra.mxu0 0.0
    %1160 = vmatprep.subr.mxu0 0.0
    %1161 = vmatpush1.msra.mxu0 0.0
    %1162 = vmatprep.subr.mxu0 0.0
    %1163 = vmatpush1.msra.mxu0 0.0
    %1164 = vmatprep.subr.mxu0 0.0
    %1165 = vmatpush1.msra.mxu0 0.0
    %1166 = vmatprep.mubr.f32.mxu0 0.0
    %1167 = vmatmul.mubr.f32.gmra.mrb[0].mxu0 %v304
    %v1168 = vpop.f32.mrb[0].mxu0
    %v1169 = vadd.f32 0.0, %v1168
    %v1170 = vpop.f32.mrb[0].mxu0
    %1171 = vmatprep.mubr.f32.mxu0 0.0
    %1172 = vmatmul.mubr.f32.gmra.mrb[0].mxu0 %v307
    %v1173 = vpop.f32.mrb[0].mxu0
    %v1174 = vadd.f32 0.0, %v1173
    %v1175 = vpop.f32.mrb[0].mxu0
    %1176 = vdwg.mxu0
    %1177 = vmatprep.subr.mxu0 0.0
    %1178 = vmatpush1.msra.mxu0 %v1034
    %1179 = vmatprep.subr.mxu0 0.0
    %1180 = vmatpush1.msra.mxu0 %v1039
    %1181 = vmatprep.subr.mxu0 0.0
    %1182 = vmatpush1.msra.mxu0 0.0
    %1183 = vmatprep.subr.mxu0 0.0
    %1184 = vmatpush1.msra.mxu0 0.0
    %1185 = vmatprep.subr.mxu0 0.0
    %1186 = vmatpush1.msra.mxu0 0.0
    %1187 = vmatprep.subr.mxu0 0.0
    %1188 = vmatpush1.msra.mxu0 0.0
    %1189 = vmatprep.subr.mxu0 0.0
    %1190 = vmatpush1.msra.mxu0 0.0
    %1191 = vmatprep.subr.mxu0 0.0
    %1192 = vmatpush1.msra.mxu0 0.0
    %1193 = vmatprep.subr.mxu0 0.0
    %1194 = vmatpush1.msra.mxu0 0.0
    %1195 = vmatprep.subr.mxu0 0.0
    %1196 = vmatpush1.msra.mxu0 0.0
    %1197 = vmatprep.subr.mxu0 0.0
    %1198 = vmatpush1.msra.mxu0 0.0
    %1199 = vmatprep.subr.mxu0 0.0
    %1200 = vmatpush1.msra.mxu0 0.0
    %1201 = vmatprep.subr.mxu0 0.0
    %1202 = vmatpush1.msra.mxu0 0.0
    %1203 = vmatprep.subr.mxu0 0.0
    %1204 = vmatpush1.msra.mxu0 0.0
    %1205 = vmatprep.subr.mxu0 0.0
    %1206 = vmatpush1.msra.mxu0 0.0
    %1207 = vmatprep.subr.mxu0 0.0
    %1208 = vmatpush1.msra.mxu0 0.0
    %1209 = vmatprep.subr.mxu0 0.0
    %1210 = vmatpush1.msra.mxu0 0.0
    %1211 = vmatprep.subr.mxu0 0.0
    %1212 = vmatpush1.msra.mxu0 0.0
    %1213 = vmatprep.subr.mxu0 0.0
    %1214 = vmatpush1.msra.mxu0 0.0
    %1215 = vmatprep.subr.mxu0 0.0
    %1216 = vmatpush1.msra.mxu0 0.0
    %1217 = vmatprep.subr.mxu0 0.0
    %1218 = vmatpush1.msra.mxu0 0.0
    %1219 = vmatprep.subr.mxu0 0.0
    %1220 = vmatpush1.msra.mxu0 0.0
    %1221 = vmatprep.subr.mxu0 0.0
    %1222 = vmatpush1.msra.mxu0 0.0
    %1223 = vmatprep.subr.mxu0 0.0
    %1224 = vmatpush1.msra.mxu0 0.0
    %1225 = vmatprep.subr.mxu0 0.0
    %1226 = vmatpush1.msra.mxu0 0.0
    %1227 = vmatprep.subr.mxu0 0.0
    %1228 = vmatpush1.msra.mxu0 0.0
    %1229 = vmatprep.subr.mxu0 0.0
    %1230 = vmatpush1.msra.mxu0 0.0
    %1231 = vmatprep.subr.mxu0 0.0
    %1232 = vmatpush1.msra.mxu0 0.0
    %1233 = vmatprep.subr.mxu0 0.0
    %1234 = vmatpush1.msra.mxu0 0.0
    %1235 = vmatprep.subr.mxu0 0.0
    %1236 = vmatpush1.msra.mxu0 0.0
    %1237 = vmatprep.subr.mxu0 0.0
    %1238 = vmatpush1.msra.mxu0 0.0
    %1239 = vmatprep.subr.mxu0 0.0
    %1240 = vmatpush1.msra.mxu0 0.0
    %1241 = vmatprep.mubr.f32.mxu0 0.0
    %1242 = vmatmul.mubr.f32.gmra.mrb[0].mxu0 %v304
    %v1243 = vpop.f32.mrb[0].mxu0
    %v1244 = vadd.f32 0.0, %v1243
    %v1245 = vpop.f32.mrb[0].mxu0
    %1246 = vmatprep.mubr.f32.mxu0 0.0
    %1247 = vmatmul.mubr.f32.gmra.mrb[0].mxu0 %v307
    %v1248 = vpop.f32.mrb[0].mxu0
    %v1249 = vadd.f32 0.0, %v1248
    %v1250 = vpop.f32.mrb[0].mxu0
    %1251 = vdwg.mxu0
    %1252 = vmatprep.subr.mxu0 0.0
    %1253 = vmatpush1.msra.mxu0 %v1044
    %1254 = vmatprep.subr.mxu0 0.0
    %1255 = vmatpush1.msra.mxu0 %v1049
    %1256 = vmatprep.subr.mxu0 0.0
    %1257 = vmatpush1.msra.mxu0 0.0
    %1258 = vmatprep.subr.mxu0 0.0
    %1259 = vmatpush1.msra.mxu0 0.0
    %1260 = vmatprep.subr.mxu0 0.0
    %1261 = vmatpush1.msra.mxu0 0.0
    %1262 = vmatprep.subr.mxu0 0.0
    %1263 = vmatpush1.msra.mxu0 0.0
    %1264 = vmatprep.subr.mxu0 0.0
    %1265 = vmatpush1.msra.mxu0 0.0
    %1266 = vmatprep.subr.mxu0 0.0
    %1267 = vmatpush1.msra.mxu0 0.0
    %1268 = vmatprep.subr.mxu0 0.0
    %1269 = vmatpush1.msra.mxu0 0.0
    %1270 = vmatprep.subr.mxu0 0.0
    %1271 = vmatpush1.msra.mxu0 0.0
    %1272 = vmatprep.subr.mxu0 0.0
    %1273 = vmatpush1.msra.mxu0 0.0
    %1274 = vmatprep.subr.mxu0 0.0
    %1275 = vmatpush1.msra.mxu0 0.0
    %1276 = vmatprep.subr.mxu0 0.0
    %1277 = vmatpush1.msra.mxu0 0.0
    %1278 = vmatprep.subr.mxu0 0.0
    %1279 = vmatpush1.msra.mxu0 0.0
    %1280 = vmatprep.subr.mxu0 0.0
    %1281 = vmatpush1.msra.mxu0 0.0
    %1282 = vmatprep.subr.mxu0 0.0
    %1283 = vmatpush1.msra.mxu0 0.0
    %1284 = vmatprep.subr.mxu0 0.0
    %1285 = vmatpush1.msra.mxu0 0.0
    %1286 = vmatprep.subr.mxu0 0.0
    %1287 = vmatpush1.msra.mxu0 0.0
    %1288 = vmatprep.subr.mxu0 0.0
    %1289 = vmatpush1.msra.mxu0 0.0
    %1290 = vmatprep.subr.mxu0 0.0
    %1291 = vmatpush1.msra.mxu0 0.0
    %1292 = vmatprep.subr.mxu0 0.0
    %1293 = vmatpush1.msra.mxu0 0.0
    %1294 = vmatprep.subr.mxu0 0.0
    %1295 = vmatpush1.msra.mxu0 0.0
    %1296 = vmatprep.subr.mxu0 0.0
    %1297 = vmatpush1.msra.mxu0 0.0
    %1298 = vmatprep.subr.mxu0 0.0
    %1299 = vmatpush1.msra.mxu0 0.0
    %1300 = vmatprep.subr.mxu0 0.0
    %1301 = vmatpush1.msra.mxu0 0.0
    %1302 = vmatprep.subr.mxu0 0.0
    %1303 = vmatpush1.msra.mxu0 0.0
    %1304 = vmatprep.subr.mxu0 0.0
    %1305 = vmatpush1.msra.mxu0 0.0
    %1306 = vmatprep.subr.mxu0 0.0
    %1307 = vmatpush1.msra.mxu0 0.0
    %1308 = vmatprep.subr.mxu0 0.0
    %1309 = vmatpush1.msra.mxu0 0.0
    %1310 = vmatprep.subr.mxu0 0.0
    %1311 = vmatpush1.msra.mxu0 0.0
    %1312 = vmatprep.subr.mxu0 0.0
    %1313 = vmatpush1.msra.mxu0 0.0
    %1314 = vmatprep.subr.mxu0 0.0
    %1315 = vmatpush1.msra.mxu0 0.0
    %1316 = vmatprep.mubr.f32.mxu0 0.0
    %1317 = vmatmul.mubr.f32.gmra.mrb[0].mxu0 %v304
    %v1318 = vpop.f32.mrb[0].mxu0
    %v1319 = vadd.f32 0.0, %v1318
    %v1320 = vpop.f32.mrb[0].mxu0
    %1321 = vmatprep.mubr.f32.mxu0 0.0
    %1322 = vmatmul.mubr.f32.gmra.mrb[0].mxu0 %v307
    %v1323 = vpop.f32.mrb[0].mxu0
    %v1324 = vadd.f32 0.0, %v1323
    %v1325 = vpop.f32.mrb[0].mxu0
    %1326 = vdwg.mxu0
    %1327 = vmatprep.subr.mxu0 0.0
    %1328 = vmatpush1.msra.mxu0 %v1054
    %1329 = vmatprep.subr.mxu0 0.0
    %1330 = vmatpush1.msra.mxu0 %v1059
    %1331 = vmatprep.subr.mxu0 0.0
    %1332 = vmatpush1.msra.mxu0 0.0
    %1333 = vmatprep.subr.mxu0 0.0
    %1334 = vmatpush1.msra.mxu0 0.0
    %1335 = vmatprep.subr.mxu0 0.0
    %1336 = vmatpush1.msra.mxu0 0.0
    %1337 = vmatprep.subr.mxu0 0.0
    %1338 = vmatpush1.msra.mxu0 0.0
    %1339 = vmatprep.subr.mxu0 0.0
    %1340 = vmatpush1.msra.mxu0 0.0
    %1341 = vmatprep.subr.mxu0 0.0
    %1342 = vmatpush1.msra.mxu0 0.0
    %1343 = vmatprep.subr.mxu0 0.0
    %1344 = vmatpush1.msra.mxu0 0.0
    %1345 = vmatprep.subr.mxu0 0.0
    %1346 = vmatpush1.msra.mxu0 0.0
    %1347 = vmatprep.subr.mxu0 0.0
    %1348 = vmatpush1.msra.mxu0 0.0
    %1349 = vmatprep.subr.mxu0 0.0
    %1350 = vmatpush1.msra.mxu0 0.0
    %1351 = vmatprep.subr.mxu0 0.0
    %1352 = vmatpush1.msra.mxu0 0.0
    %1353 = vmatprep.subr.mxu0 0.0
    %1354 = vmatpush1.msra.mxu0 0.0
    %1355 = vmatprep.subr.mxu0 0.0
    %1356 = vmatpush1.msra.mxu0 0.0
    %1357 = vmatprep.subr.mxu0 0.0
    %1358 = vmatpush1.msra.mxu0 0.0
    %1359 = vmatprep.subr.mxu0 0.0
    %1360 = vmatpush1.msra.mxu0 0.0
    %1361 = vmatprep.subr.mxu0 0.0
    %1362 = vmatpush1.msra.mxu0 0.0
    %1363 = vmatprep.subr.mxu0 0.0
    %1364 = vmatpush1.msra.mxu0 0.0
    %1365 = vmatprep.subr.mxu0 0.0
    %1366 = vmatpush1.msra.mxu0 0.0
    %1367 = vmatprep.subr.mxu0 0.0
    %1368 = vmatpush1.msra.mxu0 0.0
    %1369 = vmatprep.subr.mxu0 0.0
    %1370 = vmatpush1.msra.mxu0 0.0
    %1371 = vmatprep.subr.mxu0 0.0
    %1372 = vmatpush1.msra.mxu0 0.0
    %1373 = vmatprep.subr.mxu0 0.0
    %1374 = vmatpush1.msra.mxu0 0.0
    %1375 = vmatprep.subr.mxu0 0.0
    %1376 = vmatpush1.msra.mxu0 0.0
    %1377 = vmatprep.subr.mxu0 0.0
    %1378 = vmatpush1.msra.mxu0 0.0
    %1379 = vmatprep.subr.mxu0 0.0
    %1380 = vmatpush1.msra.mxu0 0.0
    %1381 = vmatprep.subr.mxu0 0.0
    %1382 = vmatpush1.msra.mxu0 0.0
    %1383 = vmatprep.subr.mxu0 0.0
    %1384 = vmatpush1.msra.mxu0 0.0
    %1385 = vmatprep.subr.mxu0 0.0
    %1386 = vmatpush1.msra.mxu0 0.0
    %1387 = vmatprep.subr.mxu0 0.0
    %1388 = vmatpush1.msra.mxu0 0.0
    %1389 = vmatprep.subr.mxu0 0.0
    %1390 = vmatpush1.msra.mxu0 0.0
    %1391 = vmatprep.mubr.f32.mxu0 0.0
    %1392 = vmatmul.mubr.f32.gmra.mrb[0].mxu0 %v304
    %v1393 = vpop.f32.mrb[0].mxu0
    %v1394 = vadd.f32 0.0, %v1393
    %v1395 = vpop.f32.mrb[0].mxu0
    %1396 = vmatprep.mubr.f32.mxu0 0.0
    %1397 = vmatmul.mubr.f32.gmra.mrb[0].mxu0 %v307
    %v1398 = vpop.f32.mrb[0].mxu0
    %v1399 = vadd.f32 0.0, %v1398
    %v1400 = vpop.f32.mrb[0].mxu0
    %1401 = vdwg.mxu0
    %1402 = vmatprep.subr.mxu0 0.0
    %1403 = vmatpush1.msra.mxu0 %v1064
    %1404 = vmatprep.subr.mxu0 0.0
    %1405 = vmatpush1.msra.mxu0 %v1069
    %1406 = vmatprep.subr.mxu0 0.0
    %1407 = vmatpush1.msra.mxu0 0.0
    %1408 = vmatprep.subr.mxu0 0.0
    %1409 = vmatpush1.msra.mxu0 0.0
    %1410 = vmatprep.subr.mxu0 0.0
    %1411 = vmatpush1.msra.mxu0 0.0
    %1412 = vmatprep.subr.mxu0 0.0
    %1413 = vmatpush1.msra.mxu0 0.0
    %1414 = vmatprep.subr.mxu0 0.0
    %1415 = vmatpush1.msra.mxu0 0.0
    %1416 = vmatprep.subr.mxu0 0.0
    %1417 = vmatpush1.msra.mxu0 0.0
    %1418 = vmatprep.subr.mxu0 0.0
    %1419 = vmatpush1.msra.mxu0 0.0
    %1420 = vmatprep.subr.mxu0 0.0
    %1421 = vmatpush1.msra.mxu0 0.0
    %1422 = vmatprep.subr.mxu0 0.0
    %1423 = vmatpush1.msra.mxu0 0.0
    %1424 = vmatprep.subr.mxu0 0.0
    %1425 = vmatpush1.msra.mxu0 0.0
    %1426 = vmatprep.subr.mxu0 0.0
    %1427 = vmatpush1.msra.mxu0 0.0
    %1428 = vmatprep.subr.mxu0 0.0
    %1429 = vmatpush1.msra.mxu0 0.0
    %1430 = vmatprep.subr.mxu0 0.0
    %1431 = vmatpush1.msra.mxu0 0.0
    %1432 = vmatprep.subr.mxu0 0.0
    %1433 = vmatpush1.msra.mxu0 0.0
    %1434 = vmatprep.subr.mxu0 0.0
    %1435 = vmatpush1.msra.mxu0 0.0
    %1436 = vmatprep.subr.mxu0 0.0
    %1437 = vmatpush1.msra.mxu0 0.0
    %1438 = vmatprep.subr.mxu0 0.0
    %1439 = vmatpush1.msra.mxu0 0.0
    %1440 = vmatprep.subr.mxu0 0.0
    %1441 = vmatpush1.msra.mxu0 0.0
    %1442 = vmatprep.subr.mxu0 0.0
    %1443 = vmatpush1.msra.mxu0 0.0
    %1444 = vmatprep.subr.mxu0 0.0
    %1445 = vmatpush1.msra.mxu0 0.0
    %1446 = vmatprep.subr.mxu0 0.0
    %1447 = vmatpush1.msra.mxu0 0.0
    %1448 = vmatprep.subr.mxu0 0.0
    %1449 = vmatpush1.msra.mxu0 0.0
    %1450 = vmatprep.subr.mxu0 0.0
    %1451 = vmatpush1.msra.mxu0 0.0
    %1452 = vmatprep.subr.mxu0 0.0
    %1453 = vmatpush1.msra.mxu0 0.0
    %1454 = vmatprep.subr.mxu0 0.0
    %1455 = vmatpush1.msra.mxu0 0.0
    %1456 = vmatprep.subr.mxu0 0.0
    %1457 = vmatpush1.msra.mxu0 0.0
    %1458 = vmatprep.subr.mxu0 0.0
    %1459 = vmatpush1.msra.mxu0 0.0
    %1460 = vmatprep.subr.mxu0 0.0
    %1461 = vmatpush1.msra.mxu0 0.0
    %1462 = vmatprep.subr.mxu0 0.0
    %1463 = vmatpush1.msra.mxu0 0.0
    %1464 = vmatprep.subr.mxu0 0.0
    %1465 = vmatpush1.msra.mxu0 0.0
    %1466 = vmatprep.mubr.f32.mxu0 0.0
    %1467 = vmatmul.mubr.f32.gmra.mrb[0].mxu0 %v304
    %v1468 = vpop.f32.mrb[0].mxu0
    %v1469 = vadd.f32 0.0, %v1468
    %v1470 = vpop.f32.mrb[0].mxu0
    %1471 = vmatprep.mubr.f32.mxu0 0.0
    %1472 = vmatmul.mubr.f32.gmra.mrb[0].mxu0 %v307
    %v1473 = vpop.f32.mrb[0].mxu0
    %v1474 = vadd.f32 0.0, %v1473
    %v1475 = vpop.f32.mrb[0].mxu0
    %1476 = vdwg.mxu0
    %1477 = vmatprep.subr.mxu0 0.0
    %1478 = vmatpush1.msra.mxu0 %v1074
    %1479 = vmatprep.subr.mxu0 0.0
    %1480 = vmatpush1.msra.mxu0 %v1079
    %1481 = vmatprep.subr.mxu0 0.0
    %1482 = vmatpush1.msra.mxu0 0.0
    %1483 = vmatprep.subr.mxu0 0.0
    %1484 = vmatpush1.msra.mxu0 0.0
    %1485 = vmatprep.subr.mxu0 0.0
    %1486 = vmatpush1.msra.mxu0 0.0
    %1487 = vmatprep.subr.mxu0 0.0
    %1488 = vmatpush1.msra.mxu0 0.0
    %1489 = vmatprep.subr.mxu0 0.0
    %1490 = vmatpush1.msra.mxu0 0.0
    %1491 = vmatprep.subr.mxu0 0.0
    %1492 = vmatpush1.msra.mxu0 0.0
    %1493 = vmatprep.subr.mxu0 0.0
    %1494 = vmatpush1.msra.mxu0 0.0
    %1495 = vmatprep.subr.mxu0 0.0
    %1496 = vmatpush1.msra.mxu0 0.0
    %1497 = vmatprep.subr.mxu0 0.0
    %1498 = vmatpush1.msra.mxu0 0.0
    %1499 = vmatprep.subr.mxu0 0.0
    %1500 = vmatpush1.msra.mxu0 0.0
    %1501 = vmatprep.subr.mxu0 0.0
    %1502 = vmatpush1.msra.mxu0 0.0
    %1503 = vmatprep.subr.mxu0 0.0
    %1504 = vmatpush1.msra.mxu0 0.0
    %1505 = vmatprep.subr.mxu0 0.0
    %1506 = vmatpush1.msra.mxu0 0.0
    %1507 = vmatprep.subr.mxu0 0.0
    %1508 = vmatpush1.msra.mxu0 0.0
    %1509 = vmatprep.subr.mxu0 0.0
    %1510 = vmatpush1.msra.mxu0 0.0
    %1511 = vmatprep.subr.mxu0 0.0
    %1512 = vmatpush1.msra.mxu0 0.0
    %1513 = vmatprep.subr.mxu0 0.0
    %1514 = vmatpush1.msra.mxu0 0.0
    %1515 = vmatprep.subr.mxu0 0.0
    %1516 = vmatpush1.msra.mxu0 0.0
    %1517 = vmatprep.subr.mxu0 0.0
    %1518 = vmatpush1.msra.mxu0 0.0
    %1519 = vmatprep.subr.mxu0 0.0
    %1520 = vmatpush1.msra.mxu0 0.0
    %1521 = vmatprep.subr.mxu0 0.0
    %1522 = vmatpush1.msra.mxu0 0.0
    %1523 = vmatprep.subr.mxu0 0.0
    %1524 = vmatpush1.msra.mxu0 0.0
    %1525 = vmatprep.subr.mxu0 0.0
    %1526 = vmatpush1.msra.mxu0 0.0
    %1527 = vmatprep.subr.mxu0 0.0
    %1528 = vmatpush1.msra.mxu0 0.0
    %1529 = vmatprep.subr.mxu0 0.0
    %1530 = vmatpush1.msra.mxu0 0.0
    %1531 = vmatprep.subr.mxu0 0.0
    %1532 = vmatpush1.msra.mxu0 0.0
    %1533 = vmatprep.subr.mxu0 0.0
    %1534 = vmatpush1.msra.mxu0 0.0
    %1535 = vmatprep.subr.mxu0 0.0
    %1536 = vmatpush1.msra.mxu0 0.0
    %1537 = vmatprep.subr.mxu0 0.0
    %1538 = vmatpush1.msra.mxu0 0.0
    %1539 = vmatprep.subr.mxu0 0.0
    %1540 = vmatpush1.msra.mxu0 0.0
    %1541 = vmatprep.mubr.f32.mxu0 0.0
    %1542 = vmatmul.mubr.f32.gmra.mrb[0].mxu0 %v304
    %v1543 = vpop.f32.mrb[0].mxu0
    %v1544 = vadd.f32 0.0, %v1543
    %v1545 = vpop.f32.mrb[0].mxu0
    %1546 = vmatprep.mubr.f32.mxu0 0.0
    %1547 = vmatmul.mubr.f32.gmra.mrb[0].mxu0 %v307
    %v1548 = vpop.f32.mrb[0].mxu0
    %v1549 = vadd.f32 0.0, %v1548
    %v1550 = vpop.f32.mrb[0].mxu0
    %1551 = vdwg.mxu0
    %1552 = vmatprep.subr.mxu0 0.0
    %1553 = vmatpush1.msra.mxu0 %v1084
    %1554 = vmatprep.subr.mxu0 0.0
    %1555 = vmatpush1.msra.mxu0 %v1089
    %1556 = vmatprep.subr.mxu0 0.0
    %1557 = vmatpush1.msra.mxu0 0.0
    %1558 = vmatprep.subr.mxu0 0.0
    %1559 = vmatpush1.msra.mxu0 0.0
    %1560 = vmatprep.subr.mxu0 0.0
    %1561 = vmatpush1.msra.mxu0 0.0
    %1562 = vmatprep.subr.mxu0 0.0
    %1563 = vmatpush1.msra.mxu0 0.0
    %1564 = vmatprep.subr.mxu0 0.0
    %1565 = vmatpush1.msra.mxu0 0.0
    %1566 = vmatprep.subr.mxu0 0.0
    %1567 = vmatpush1.msra.mxu0 0.0
    %1568 = vmatprep.subr.mxu0 0.0
    %1569 = vmatpush1.msra.mxu0 0.0
    %1570 = vmatprep.subr.mxu0 0.0
    %1571 = vmatpush1.msra.mxu0 0.0
    %1572 = vmatprep.subr.mxu0 0.0
    %1573 = vmatpush1.msra.mxu0 0.0
    %1574 = vmatprep.subr.mxu0 0.0
    %1575 = vmatpush1.msra.mxu0 0.0
    %1576 = vmatprep.subr.mxu0 0.0
    %1577 = vmatpush1.msra.mxu0 0.0
    %1578 = vmatprep.subr.mxu0 0.0
    %1579 = vmatpush1.msra.mxu0 0.0
    %1580 = vmatprep.subr.mxu0 0.0
    %1581 = vmatpush1.msra.mxu0 0.0
    %1582 = vmatprep.subr.mxu0 0.0
    %1583 = vmatpush1.msra.mxu0 0.0
    %1584 = vmatprep.subr.mxu0 0.0
    %1585 = vmatpush1.msra.mxu0 0.0
    %1586 = vmatprep.subr.mxu0 0.0
    %1587 = vmatpush1.msra.mxu0 0.0
    %1588 = vmatprep.subr.mxu0 0.0
    %1589 = vmatpush1.msra.mxu0 0.0
    %1590 = vmatprep.subr.mxu0 0.0
    %1591 = vmatpush1.msra.mxu0 0.0
    %1592 = vmatprep.subr.mxu0 0.0
    %1593 = vmatpush1.msra.mxu0 0.0
    %1594 = vmatprep.subr.mxu0 0.0
    %1595 = vmatpush1.msra.mxu0 0.0
    %1596 = vmatprep.subr.mxu0 0.0
    %1597 = vmatpush1.msra.mxu0 0.0
    %1598 = vmatprep.subr.mxu0 0.0
    %1599 = vmatpush1.msra.mxu0 0.0
    %1600 = vmatprep.subr.mxu0 0.0
    %1601 = vmatpush1.msra.mxu0 0.0
    %1602 = vmatprep.subr.mxu0 0.0
    %1603 = vmatpush1.msra.mxu0 0.0
    %1604 = vmatprep.subr.mxu0 0.0
    %1605 = vmatpush1.msra.mxu0 0.0
    %1606 = vmatprep.subr.mxu0 0.0
    %1607 = vmatpush1.msra.mxu0 0.0
    %1608 = vmatprep.subr.mxu0 0.0
    %1609 = vmatpush1.msra.mxu0 0.0
    %1610 = vmatprep.subr.mxu0 0.0
    %1611 = vmatpush1.msra.mxu0 0.0
    %1612 = vmatprep.subr.mxu0 0.0
    %1613 = vmatpush1.msra.mxu0 0.0
    %1614 = vmatprep.subr.mxu0 0.0
    %1615 = vmatpush1.msra.mxu0 0.0
    %1616 = vmatprep.mubr.f32.mxu0 0.0
    %1617 = vmatmul.mubr.f32.gmra.mrb[0].mxu0 %v304
    %v1618 = vpop.f32.mrb[0].mxu0
    %v1619 = vadd.f32 0.0, %v1618
    %v1620 = vpop.f32.mrb[0].mxu0
    %1621 = vmatprep.mubr.f32.mxu0 0.0
    %1622 = vmatmul.mubr.f32.gmra.mrb[0].mxu0 %v307
    %v1623 = vpop.f32.mrb[0].mxu0
    %v1624 = vadd.f32 0.0, %v1623
    %v1625 = vpop.f32.mrb[0].mxu0
    %1626 = vdwg.mxu0
    %1627 = vmatprep.subr.mxu0 0.0
    %1628 = vmatpush1.msra.mxu0 %v1094
    %1629 = vmatprep.subr.mxu0 0.0
    %1630 = vmatpush1.msra.mxu0 %v1099
    %1631 = vmatprep.subr.mxu0 0.0
    %1632 = vmatpush1.msra.mxu0 0.0
    %1633 = vmatprep.subr.mxu0 0.0
    %1634 = vmatpush1.msra.mxu0 0.0
    %1635 = vmatprep.subr.mxu0 0.0
    %1636 = vmatpush1.msra.mxu0 0.0
    %1637 = vmatprep.subr.mxu0 0.0
    %1638 = vmatpush1.msra.mxu0 0.0
    %1639 = vmatprep.subr.mxu0 0.0
    %1640 = vmatpush1.msra.mxu0 0.0
    %1641 = vmatprep.subr.mxu0 0.0
    %1642 = vmatpush1.msra.mxu0 0.0
    %1643 = vmatprep.subr.mxu0 0.0
    %1644 = vmatpush1.msra.mxu0 0.0
    %1645 = vmatprep.subr.mxu0 0.0
    %1646 = vmatpush1.msra.mxu0 0.0
    %1647 = vmatprep.subr.mxu0 0.0
    %1648 = vmatpush1.msra.mxu0 0.0
    %1649 = vmatprep.subr.mxu0 0.0
    %1650 = vmatpush1.msra.mxu0 0.0
    %1651 = vmatprep.subr.mxu0 0.0
    %1652 = vmatpush1.msra.mxu0 0.0
    %1653 = vmatprep.subr.mxu0 0.0
    %1654 = vmatpush1.msra.mxu0 0.0
    %1655 = vmatprep.subr.mxu0 0.0
    %1656 = vmatpush1.msra.mxu0 0.0
    %1657 = vmatprep.subr.mxu0 0.0
    %1658 = vmatpush1.msra.mxu0 0.0
    %1659 = vmatprep.subr.mxu0 0.0
    %1660 = vmatpush1.msra.mxu0 0.0
    %1661 = vmatprep.subr.mxu0 0.0
    %1662 = vmatpush1.msra.mxu0 0.0
    %1663 = vmatprep.subr.mxu0 0.0
    %1664 = vmatpush1.msra.mxu0 0.0
    %1665 = vmatprep.subr.mxu0 0.0
    %1666 = vmatpush1.msra.mxu0 0.0
    %1667 = vmatprep.subr.mxu0 0.0
    %1668 = vmatpush1.msra.mxu0 0.0
    %1669 = vmatprep.subr.mxu0 0.0
    %1670 = vmatpush1.msra.mxu0 0.0
    %1671 = vmatprep.subr.mxu0 0.0
    %1672 = vmatpush1.msra.mxu0 0.0
    %1673 = vmatprep.subr.mxu0 0.0
    %1674 = vmatpush1.msra.mxu0 0.0
    %1675 = vmatprep.subr.mxu0 0.0
    %1676 = vmatpush1.msra.mxu0 0.0
    %1677 = vmatprep.subr.mxu0 0.0
    %1678 = vmatpush1.msra.mxu0 0.0
    %1679 = vmatprep.subr.mxu0 0.0
    %1680 = vmatpush1.msra.mxu0 0.0
    %1681 = vmatprep.subr.mxu0 0.0
    %1682 = vmatpush1.msra.mxu0 0.0
    %1683 = vmatprep.subr.mxu0 0.0
    %1684 = vmatpush1.msra.mxu0 0.0
    %1685 = vmatprep.subr.mxu0 0.0
    %1686 = vmatpush1.msra.mxu0 0.0
    %1687 = vmatprep.subr.mxu0 0.0
    %1688 = vmatpush1.msra.mxu0 0.0
    %1689 = vmatprep.subr.mxu0 0.0
    %1690 = vmatpush1.msra.mxu0 0.0
    %1691 = vmatprep.mubr.f32.mxu0 0.0
    %1692 = vmatmul.mubr.f32.gmra.mrb[0].mxu0 %v304
    %v1693 = vpop.f32.mrb[0].mxu0
    %v1694 = vadd.f32 0.0, %v1693
    %v1695 = vpop.f32.mrb[0].mxu0
    %1696 = vmatprep.mubr.f32.mxu0 0.0
    %1697 = vmatmul.mubr.f32.gmra.mrb[0].mxu0 %v307
    %v1698 = vpop.f32.mrb[0].mxu0
    %v1699 = vadd.f32 0.0, %v1698
    %v1700 = vpop.f32.mrb[0].mxu0
    %1701 = vdwg.mxu0
    %v1702 = vmul.f32 %v376, %v376
    %v1703 = vmul.f32 %v381, %v381
    %v1704 = vmul.f32 %v451, %v451
    %v1705 = vmul.f32 %v456, %v456
    %v1706 = vmul.f32 %v526, %v526
    %v1707 = vmul.f32 %v531, %v531
    %v1708 = vmul.f32 %v601, %v601
    %v1709 = vmul.f32 %v606, %v606
    %v1710 = vmul.f32 %v676, %v676
    %v1711 = vmul.f32 %v681, %v681
    %v1712 = vmul.f32 %v751, %v751
    %v1713 = vmul.f32 %v756, %v756
    %v1714 = vmul.f32 %v826, %v826
    %v1715 = vmul.f32 %v831, %v831
    %v1716 = vmul.f32 %v901, %v901
    %v1717 = vmul.f32 %v906, %v906
    %v1718 = vmul.f32 %v1169, %v1169
    %v1719 = vmul.f32 %v1174, %v1174
    %v1720 = vmul.f32 %v1244, %v1244
    %v1721 = vmul.f32 %v1249, %v1249
    %v1722 = vmul.f32 %v1319, %v1319
    %v1723 = vmul.f32 %v1324, %v1324
    %v1724 = vmul.f32 %v1394, %v1394
    %v1725 = vmul.f32 %v1399, %v1399
    %v1726 = vmul.f32 %v1469, %v1469
    %v1727 = vmul.f32 %v1474, %v1474
    %v1728 = vmul.f32 %v1544, %v1544
    %v1729 = vmul.f32 %v1549, %v1549
    %v1730 = vmul.f32 %v1619, %v1619
    %v1731 = vmul.f32 %v1624, %v1624
    %v1732 = vmul.f32 %v1694, %v1694
    %v1733 = vmul.f32 %v1699, %v1699
    %v1734 = vmul.f32 %v376, %v1169
    %v1735 = vmul.f32 %v381, %v1174
    %v1736 = vmul.f32 %v451, %v1244
    %v1737 = vmul.f32 %v456, %v1249
    %v1738 = vmul.f32 %v526, %v1319
    %v1739 = vmul.f32 %v531, %v1324
    %v1740 = vmul.f32 %v601, %v1394
    %v1741 = vmul.f32 %v606, %v1399
    %v1742 = vmul.f32 %v676, %v1469
    %v1743 = vmul.f32 %v681, %v1474
    %v1744 = vmul.f32 %v751, %v1544
    %v1745 = vmul.f32 %v756, %v1549
    %v1746 = vmul.f32 %v826, %v1619
    %v1747 = vmul.f32 %v831, %v1624
    %v1748 = vmul.f32 %v901, %v1694
    %v1749 = vmul.f32 %v906, %v1699
    %v1750 = vmul.f32 %v77, %v77
    %v1751 = vmul.f32 %v78, %v78
    %v1752 = vmul.f32 %v79, %v79
    %v1753 = vmul.f32 %v80, %v80
    %v1754 = vmul.f32 %v81, %v81
    %v1755 = vmul.f32 %v82, %v82
    %v1756 = vmul.f32 %v83, %v83
    %v1757 = vmul.f32 %v84, %v84
    %v1758 = vmul.f32 %v85, %v85
    %v1759 = vmul.f32 %v86, %v86
    %v1760 = vmul.f32 %v87, %v87
    %v1761 = vmul.f32 %v88, %v88
    %v1762 = vmul.f32 %v89, %v89
    %v1763 = vmul.f32 %v90, %v90
    %v1764 = vmul.f32 %v91, %v91
    %v1765 = vmul.f32 %v92, %v92
    %v1767 = vsel %vm109, %v1750, 0
    %v1770 = vsel %vm109, %v1751, 0
    %v1773 = vsel %vm109, %v1752, 0
    %v1776 = vsel %vm109, %v1753, 0
    %v1779 = vsel %vm109, %v1754, 0
    %v1782 = vsel %vm109, %v1755, 0
    %v1785 = vsel %vm109, %v1756, 0
    %v1788 = vsel %vm109, %v1757, 0
    %v1791 = vsel %vm109, %v1758, 0
    %v1794 = vsel %vm109, %v1759, 0
    %v1797 = vsel %vm109, %v1760, 0
    %v1800 = vsel %vm109, %v1761, 0
    %v1803 = vsel %vm109, %v1762, 0
    %v1806 = vsel %vm109, %v1763, 0
    %v1809 = vsel %vm109, %v1764, 0
    %v1812 = vsel %vm109, %v1765, 0
    %1814 = vmatprep.subr.mxu0 0.0
    %1815 = vmatpush1.msra.mxu0 %v75
    %1816 = vmatprep.subr.mxu0 0.0
    %1817 = vmatpush1.msra.mxu0 %v76
    %1818 = vmatprep.subr.mxu0 0.0
    %1819 = vmatpush1.msra.mxu0 0.0
    %1820 = vmatprep.subr.mxu0 0.0
    %1821 = vmatpush1.msra.mxu0 0.0
    %1822 = vmatprep.subr.mxu0 0.0
    %1823 = vmatpush1.msra.mxu0 0.0
    %1824 = vmatprep.subr.mxu0 0.0
    %1825 = vmatpush1.msra.mxu0 0.0
    %1826 = vmatprep.subr.mxu0 0.0
    %1827 = vmatpush1.msra.mxu0 0.0
    %1828 = vmatprep.subr.mxu0 0.0
    %1829 = vmatpush1.msra.mxu0 0.0
    %1830 = vmatprep.subr.mxu0 0.0
    %1831 = vmatpush1.msra.mxu0 0.0
    %1832 = vmatprep.subr.mxu0 0.0
    %1833 = vmatpush1.msra.mxu0 0.0
    %1834 = vmatprep.subr.mxu0 0.0
    %1835 = vmatpush1.msra.mxu0 0.0
    %1836 = vmatprep.subr.mxu0 0.0
    %1837 = vmatpush1.msra.mxu0 0.0
    %1838 = vmatprep.subr.mxu0 0.0
    %1839 = vmatpush1.msra.mxu0 0.0
    %1840 = vmatprep.subr.mxu0 0.0
    %1841 = vmatpush1.msra.mxu0 0.0
    %1842 = vmatprep.subr.mxu0 0.0
    %1843 = vmatpush1.msra.mxu0 0.0
    %1844 = vmatprep.subr.mxu0 0.0
    %1845 = vmatpush1.msra.mxu0 0.0
    %1846 = vmatprep.subr.mxu0 0.0
    %1847 = vmatpush1.msra.mxu0 0.0
    %1848 = vmatprep.subr.mxu0 0.0
    %1849 = vmatpush1.msra.mxu0 0.0
    %1850 = vmatprep.subr.mxu0 0.0
    %1851 = vmatpush1.msra.mxu0 0.0
    %1852 = vmatprep.subr.mxu0 0.0
    %1853 = vmatpush1.msra.mxu0 0.0
    %1854 = vmatprep.subr.mxu0 0.0
    %1855 = vmatpush1.msra.mxu0 0.0
    %1856 = vmatprep.subr.mxu0 0.0
    %1857 = vmatpush1.msra.mxu0 0.0
    %1858 = vmatprep.subr.mxu0 0.0
    %1859 = vmatpush1.msra.mxu0 0.0
    %1860 = vmatprep.subr.mxu0 0.0
    %1861 = vmatpush1.msra.mxu0 0.0
    %1862 = vmatprep.subr.mxu0 0.0
    %1863 = vmatpush1.msra.mxu0 0.0
    %1864 = vmatprep.subr.mxu0 0.0
    %1865 = vmatpush1.msra.mxu0 0.0
    %1866 = vmatprep.subr.mxu0 0.0
    %1867 = vmatpush1.msra.mxu0 0.0
    %1868 = vmatprep.subr.mxu0 0.0
    %1869 = vmatpush1.msra.mxu0 0.0
    %1870 = vmatprep.subr.mxu0 0.0
    %1871 = vmatpush1.msra.mxu0 0.0
    %1872 = vmatprep.subr.mxu0 0.0
    %1873 = vmatpush1.msra.mxu0 0.0
    %1874 = vmatprep.subr.mxu0 0.0
    %1875 = vmatpush1.msra.mxu0 0.0
    %1876 = vmatprep.subr.mxu0 0.0
    %1877 = vmatpush1.msra.mxu0 0.0
    %1878 = vmatprep.mubr.f32.mxu0 0.0
    %1879 = vmatmul.mubr.f32.gmra.mrb[0].mxu0 %v1767
    %v1880 = vpop.f32.mrb[0].mxu0
    %v1881 = vadd.f32 0.0, %v1880
    %v1882 = vpop.f32.mrb[0].mxu0
    %1883 = vmatprep.mubr.f32.mxu0 0.0
    %1884 = vmatmul.mubr.f32.gmra.mrb[0].mxu0 %v1770
    %v1885 = vpop.f32.mrb[0].mxu0
    %v1886 = vadd.f32 0.0, %v1885
    %v1887 = vpop.f32.mrb[0].mxu0
    %1888 = vmatprep.mubr.f32.mxu0 0.0
    %1889 = vmatmul.mubr.f32.gmra.mrb[0].mxu0 %v1773
    %v1890 = vpop.f32.mrb[0].mxu0
    %v1891 = vadd.f32 0.0, %v1890
    %v1892 = vpop.f32.mrb[0].mxu0
    %1893 = vmatprep.mubr.f32.mxu0 0.0
    %1894 = vmatmul.mubr.f32.gmra.mrb[0].mxu0 %v1776
    %v1895 = vpop.f32.mrb[0].mxu0
    %v1896 = vadd.f32 0.0, %v1895
    %v1897 = vpop.f32.mrb[0].mxu0
    %1898 = vmatprep.mubr.f32.mxu0 0.0
    %1899 = vmatmul.mubr.f32.gmra.mrb[0].mxu0 %v1779
    %v1900 = vpop.f32.mrb[0].mxu0
    %v1901 = vadd.f32 0.0, %v1900
    %v1902 = vpop.f32.mrb[0].mxu0
    %1903 = vmatprep.mubr.f32.mxu0 0.0
    %1904 = vmatmul.mubr.f32.gmra.mrb[0].mxu0 %v1782
    %v1905 = vpop.f32.mrb[0].mxu0
    %v1906 = vadd.f32 0.0, %v1905
    %v1907 = vpop.f32.mrb[0].mxu0
    %1908 = vmatprep.mubr.f32.mxu0 0.0
    %1909 = vmatmul.mubr.f32.gmra.mrb[0].mxu0 %v1785
    %v1910 = vpop.f32.mrb[0].mxu0
    %v1911 = vadd.f32 0.0, %v1910
    %v1912 = vpop.f32.mrb[0].mxu0
    %1913 = vmatprep.mubr.f32.mxu0 0.0
    %1914 = vmatmul.mubr.f32.gmra.mrb[0].mxu0 %v1788
    %v1915 = vpop.f32.mrb[0].mxu0
    %v1916 = vadd.f32 0.0, %v1915
    %v1917 = vpop.f32.mrb[0].mxu0
    %1918 = vmatprep.mubr.f32.mxu0 0.0
    %1919 = vmatmul.mubr.f32.gmra.mrb[0].mxu0 %v1791
    %v1920 = vpop.f32.mrb[0].mxu0
    %v1921 = vadd.f32 0.0, %v1920
    %v1922 = vpop.f32.mrb[0].mxu0
    %1923 = vmatprep.mubr.f32.mxu0 0.0
    %1924 = vmatmul.mubr.f32.gmra.mrb[0].mxu0 %v1794
    %v1925 = vpop.f32.mrb[0].mxu0
    %v1926 = vadd.f32 0.0, %v1925
    %v1927 = vpop.f32.mrb[0].mxu0
    %1928 = vmatprep.mubr.f32.mxu0 0.0
    %1929 = vmatmul.mubr.f32.gmra.mrb[0].mxu0 %v1797
    %v1930 = vpop.f32.mrb[0].mxu0
    %v1931 = vadd.f32 0.0, %v1930
    %v1932 = vpop.f32.mrb[0].mxu0
    %1933 = vmatprep.mubr.f32.mxu0 0.0
    %1934 = vmatmul.mubr.f32.gmra.mrb[0].mxu0 %v1800
    %v1935 = vpop.f32.mrb[0].mxu0
    %v1936 = vadd.f32 0.0, %v1935
    %v1937 = vpop.f32.mrb[0].mxu0
    %1938 = vmatprep.mubr.f32.mxu0 0.0
    %1939 = vmatmul.mubr.f32.gmra.mrb[0].mxu0 %v1803
    %v1940 = vpop.f32.mrb[0].mxu0
    %v1941 = vadd.f32 0.0, %v1940
    %v1942 = vpop.f32.mrb[0].mxu0
    %1943 = vmatprep.mubr.f32.mxu0 0.0
    %1944 = vmatmul.mubr.f32.gmra.mrb[0].mxu0 %v1806
    %v1945 = vpop.f32.mrb[0].mxu0
    %v1946 = vadd.f32 0.0, %v1945
    %v1947 = vpop.f32.mrb[0].mxu0
    %1948 = vmatprep.mubr.f32.mxu0 0.0
    %1949 = vmatmul.mubr.f32.gmra.mrb[0].mxu0 %v1809
    %v1950 = vpop.f32.mrb[0].mxu0
    %v1951 = vadd.f32 0.0, %v1950
    %v1952 = vpop.f32.mrb[0].mxu0
    %1953 = vmatprep.mubr.f32.mxu0 0.0
    %1954 = vmatmul.mubr.f32.gmra.mrb[0].mxu0 %v1812
    %v1955 = vpop.f32.mrb[0].mxu0
    %v1956 = vadd.f32 0.0, %v1955
    %v1957 = vpop.f32.mrb[0].mxu0
    %1958 = vdwg.mxu0
    %1959 = vmatprep.subr.mxu0 0.0
    %1960 = vmatpush1.msra.mxu0 %v1881
    %1961 = vmatprep.subr.mxu0 0.0
    %1962 = vmatpush1.msra.mxu0 %v1886
    %1963 = vmatprep.subr.mxu0 0.0
    %1964 = vmatpush1.msra.mxu0 0.0
    %1965 = vmatprep.subr.mxu0 0.0
    %1966 = vmatpush1.msra.mxu0 0.0
    %1967 = vmatprep.subr.mxu0 0.0
    %1968 = vmatpush1.msra.mxu0 0.0
    %1969 = vmatprep.subr.mxu0 0.0
    %1970 = vmatpush1.msra.mxu0 0.0
    %1971 = vmatprep.subr.mxu0 0.0
    %1972 = vmatpush1.msra.mxu0 0.0
    %1973 = vmatprep.subr.mxu0 0.0
    %1974 = vmatpush1.msra.mxu0 0.0
    %1975 = vmatprep.subr.mxu0 0.0
    %1976 = vmatpush1.msra.mxu0 0.0
    %1977 = vmatprep.subr.mxu0 0.0
    %1978 = vmatpush1.msra.mxu0 0.0
    %1979 = vmatprep.subr.mxu0 0.0
    %1980 = vmatpush1.msra.mxu0 0.0
    %1981 = vmatprep.subr.mxu0 0.0
    %1982 = vmatpush1.msra.mxu0 0.0
    %1983 = vmatprep.subr.mxu0 0.0
    %1984 = vmatpush1.msra.mxu0 0.0
    %1985 = vmatprep.subr.mxu0 0.0
    %1986 = vmatpush1.msra.mxu0 0.0
    %1987 = vmatprep.subr.mxu0 0.0
    %1988 = vmatpush1.msra.mxu0 0.0
    %1989 = vmatprep.subr.mxu0 0.0
    %1990 = vmatpush1.msra.mxu0 0.0
    %1991 = vmatprep.subr.mxu0 0.0
    %1992 = vmatpush1.msra.mxu0 0.0
    %1993 = vmatprep.subr.mxu0 0.0
    %1994 = vmatpush1.msra.mxu0 0.0
    %1995 = vmatprep.subr.mxu0 0.0
    %1996 = vmatpush1.msra.mxu0 0.0
    %1997 = vmatprep.subr.mxu0 0.0
    %1998 = vmatpush1.msra.mxu0 0.0
    %1999 = vmatprep.subr.mxu0 0.0
    %2000 = vmatpush1.msra.mxu0 0.0
    %2001 = vmatprep.subr.mxu0 0.0
    %2002 = vmatpush1.msra.mxu0 0.0
    %2003 = vmatprep.subr.mxu0 0.0
    %2004 = vmatpush1.msra.mxu0 0.0
    %2005 = vmatprep.subr.mxu0 0.0
    %2006 = vmatpush1.msra.mxu0 0.0
    %2007 = vmatprep.subr.mxu0 0.0
    %2008 = vmatpush1.msra.mxu0 0.0
    %2009 = vmatprep.subr.mxu0 0.0
    %2010 = vmatpush1.msra.mxu0 0.0
    %2011 = vmatprep.subr.mxu0 0.0
    %2012 = vmatpush1.msra.mxu0 0.0
    %2013 = vmatprep.subr.mxu0 0.0
    %2014 = vmatpush1.msra.mxu0 0.0
    %2015 = vmatprep.subr.mxu0 0.0
    %2016 = vmatpush1.msra.mxu0 0.0
    %2017 = vmatprep.subr.mxu0 0.0
    %2018 = vmatpush1.msra.mxu0 0.0
    %2019 = vmatprep.subr.mxu0 0.0
    %2020 = vmatpush1.msra.mxu0 0.0
    %2021 = vmatprep.subr.mxu0 0.0
    %2022 = vmatpush1.msra.mxu0 0.0
    %2023 = vmatprep.mubr.f32.mxu0 0.0
    %2024 = vmatmul.mubr.f32.gmra.mrb[0].mxu0 %v304
    %v2025 = vpop.f32.mrb[0].mxu0
    %v2026 = vadd.f32 0.0, %v2025
    %v2027 = vpop.f32.mrb[0].mxu0
    %2028 = vmatprep.mubr.f32.mxu0 0.0
    %2029 = vmatmul.mubr.f32.gmra.mrb[0].mxu0 %v307
    %v2030 = vpop.f32.mrb[0].mxu0
    %v2031 = vadd.f32 0.0, %v2030
    %v2032 = vpop.f32.mrb[0].mxu0
    %2033 = vdwg.mxu0
    %2034 = vmatprep.subr.mxu0 0.0
    %2035 = vmatpush1.msra.mxu0 %v1891
    %2036 = vmatprep.subr.mxu0 0.0
    %2037 = vmatpush1.msra.mxu0 %v1896
    %2038 = vmatprep.subr.mxu0 0.0
    %2039 = vmatpush1.msra.mxu0 0.0
    %2040 = vmatprep.subr.mxu0 0.0
    %2041 = vmatpush1.msra.mxu0 0.0
    %2042 = vmatprep.subr.mxu0 0.0
    %2043 = vmatpush1.msra.mxu0 0.0
    %2044 = vmatprep.subr.mxu0 0.0
    %2045 = vmatpush1.msra.mxu0 0.0
    %2046 = vmatprep.subr.mxu0 0.0
    %2047 = vmatpush1.msra.mxu0 0.0
    %2048 = vmatprep.subr.mxu0 0.0
    %2049 = vmatpush1.msra.mxu0 0.0
    %2050 = vmatprep.subr.mxu0 0.0
    %2051 = vmatpush1.msra.mxu0 0.0
    %2052 = vmatprep.subr.mxu0 0.0
    %2053 = vmatpush1.msra.mxu0 0.0
    %2054 = vmatprep.subr.mxu0 0.0
    %2055 = vmatpush1.msra.mxu0 0.0
    %2056 = vmatprep.subr.mxu0 0.0
    %2057 = vmatpush1.msra.mxu0 0.0
    %2058 = vmatprep.subr.mxu0 0.0
    %2059 = vmatpush1.msra.mxu0 0.0
    %2060 = vmatprep.subr.mxu0 0.0
    %2061 = vmatpush1.msra.mxu0 0.0
    %2062 = vmatprep.subr.mxu0 0.0
    %2063 = vmatpush1.msra.mxu0 0.0
    %2064 = vmatprep.subr.mxu0 0.0
    %2065 = vmatpush1.msra.mxu0 0.0
    %2066 = vmatprep.subr.mxu0 0.0
    %2067 = vmatpush1.msra.mxu0 0.0
    %2068 = vmatprep.subr.mxu0 0.0
    %2069 = vmatpush1.msra.mxu0 0.0
    %2070 = vmatprep.subr.mxu0 0.0
    %2071 = vmatpush1.msra.mxu0 0.0
    %2072 = vmatprep.subr.mxu0 0.0
    %2073 = vmatpush1.msra.mxu0 0.0
    %2074 = vmatprep.subr.mxu0 0.0
    %2075 = vmatpush1.msra.mxu0 0.0
    %2076 = vmatprep.subr.mxu0 0.0
    %2077 = vmatpush1.msra.mxu0 0.0
    %2078 = vmatprep.subr.mxu0 0.0
    %2079 = vmatpush1.msra.mxu0 0.0
    %2080 = vmatprep.subr.mxu0 0.0
    %2081 = vmatpush1.msra.mxu0 0.0
    %2082 = vmatprep.subr.mxu0 0.0
    %2083 = vmatpush1.msra.mxu0 0.0
    %2084 = vmatprep.subr.mxu0 0.0
    %2085 = vmatpush1.msra.mxu0 0.0
    %2086 = vmatprep.subr.mxu0 0.0
    %2087 = vmatpush1.msra.mxu0 0.0
    %2088 = vmatprep.subr.mxu0 0.0
    %2089 = vmatpush1.msra.mxu0 0.0
    %2090 = vmatprep.subr.mxu0 0.0
    %2091 = vmatpush1.msra.mxu0 0.0
    %2092 = vmatprep.subr.mxu0 0.0
    %2093 = vmatpush1.msra.mxu0 0.0
    %2094 = vmatprep.subr.mxu0 0.0
    %2095 = vmatpush1.msra.mxu0 0.0
    %2096 = vmatprep.subr.mxu0 0.0
    %2097 = vmatpush1.msra.mxu0 0.0
    %2098 = vmatprep.mubr.f32.mxu0 0.0
    %2099 = vmatmul.mubr.f32.gmra.mrb[0].mxu0 %v304
    %v2100 = vpop.f32.mrb[0].mxu0
    %v2101 = vadd.f32 0.0, %v2100
    %v2102 = vpop.f32.mrb[0].mxu0
    %2103 = vmatprep.mubr.f32.mxu0 0.0
    %2104 = vmatmul.mubr.f32.gmra.mrb[0].mxu0 %v307
    %v2105 = vpop.f32.mrb[0].mxu0
    %v2106 = vadd.f32 0.0, %v2105
    %v2107 = vpop.f32.mrb[0].mxu0
    %2108 = vdwg.mxu0
    %2109 = vmatprep.subr.mxu0 0.0
    %2110 = vmatpush1.msra.mxu0 %v1901
    %2111 = vmatprep.subr.mxu0 0.0
    %2112 = vmatpush1.msra.mxu0 %v1906
    %2113 = vmatprep.subr.mxu0 0.0
    %2114 = vmatpush1.msra.mxu0 0.0
    %2115 = vmatprep.subr.mxu0 0.0
    %2116 = vmatpush1.msra.mxu0 0.0
    %2117 = vmatprep.subr.mxu0 0.0
    %2118 = vmatpush1.msra.mxu0 0.0
    %2119 = vmatprep.subr.mxu0 0.0
    %2120 = vmatpush1.msra.mxu0 0.0
    %2121 = vmatprep.subr.mxu0 0.0
    %2122 = vmatpush1.msra.mxu0 0.0
    %2123 = vmatprep.subr.mxu0 0.0
    %2124 = vmatpush1.msra.mxu0 0.0
    %2125 = vmatprep.subr.mxu0 0.0
    %2126 = vmatpush1.msra.mxu0 0.0
    %2127 = vmatprep.subr.mxu0 0.0
    %2128 = vmatpush1.msra.mxu0 0.0
    %2129 = vmatprep.subr.mxu0 0.0
    %2130 = vmatpush1.msra.mxu0 0.0
    %2131 = vmatprep.subr.mxu0 0.0
    %2132 = vmatpush1.msra.mxu0 0.0
    %2133 = vmatprep.subr.mxu0 0.0
    %2134 = vmatpush1.msra.mxu0 0.0
    %2135 = vmatprep.subr.mxu0 0.0
    %2136 = vmatpush1.msra.mxu0 0.0
    %2137 = vmatprep.subr.mxu0 0.0
    %2138 = vmatpush1.msra.mxu0 0.0
    %2139 = vmatprep.subr.mxu0 0.0
    %2140 = vmatpush1.msra.mxu0 0.0
    %2141 = vmatprep.subr.mxu0 0.0
    %2142 = vmatpush1.msra.mxu0 0.0
    %2143 = vmatprep.subr.mxu0 0.0
    %2144 = vmatpush1.msra.mxu0 0.0
    %2145 = vmatprep.subr.mxu0 0.0
    %2146 = vmatpush1.msra.mxu0 0.0
    %2147 = vmatprep.subr.mxu0 0.0
    %2148 = vmatpush1.msra.mxu0 0.0
    %2149 = vmatprep.subr.mxu0 0.0
    %2150 = vmatpush1.msra.mxu0 0.0
    %2151 = vmatprep.subr.mxu0 0.0
    %2152 = vmatpush1.msra.mxu0 0.0
    %2153 = vmatprep.subr.mxu0 0.0
    %2154 = vmatpush1.msra.mxu0 0.0
    %2155 = vmatprep.subr.mxu0 0.0
    %2156 = vmatpush1.msra.mxu0 0.0
    %2157 = vmatprep.subr.mxu0 0.0
    %2158 = vmatpush1.msra.mxu0 0.0
    %2159 = vmatprep.subr.mxu0 0.0
    %2160 = vmatpush1.msra.mxu0 0.0
    %2161 = vmatprep.subr.mxu0 0.0
    %2162 = vmatpush1.msra.mxu0 0.0
    %2163 = vmatprep.subr.mxu0 0.0
    %2164 = vmatpush1.msra.mxu0 0.0
    %2165 = vmatprep.subr.mxu0 0.0
    %2166 = vmatpush1.msra.mxu0 0.0
    %2167 = vmatprep.subr.mxu0 0.0
    %2168 = vmatpush1.msra.mxu0 0.0
    %2169 = vmatprep.subr.mxu0 0.0
    %2170 = vmatpush1.msra.mxu0 0.0
    %2171 = vmatprep.subr.mxu0 0.0
    %2172 = vmatpush1.msra.mxu0 0.0
    %2173 = vmatprep.mubr.f32.mxu0 0.0
    %2174 = vmatmul.mubr.f32.gmra.mrb[0].mxu0 %v304
    %v2175 = vpop.f32.mrb[0].mxu0
    %v2176 = vadd.f32 0.0, %v2175
    %v2177 = vpop.f32.mrb[0].mxu0
    %2178 = vmatprep.mubr.f32.mxu0 0.0
    %2179 = vmatmul.mubr.f32.gmra.mrb[0].mxu0 %v307
    %v2180 = vpop.f32.mrb[0].mxu0
    %v2181 = vadd.f32 0.0, %v2180
    %v2182 = vpop.f32.mrb[0].mxu0
    %2183 = vdwg.mxu0
    %2184 = vmatprep.subr.mxu0 0.0
    %2185 = vmatpush1.msra.mxu0 %v1911
    %2186 = vmatprep.subr.mxu0 0.0
    %2187 = vmatpush1.msra.mxu0 %v1916
    %2188 = vmatprep.subr.mxu0 0.0
    %2189 = vmatpush1.msra.mxu0 0.0
    %2190 = vmatprep.subr.mxu0 0.0
    %2191 = vmatpush1.msra.mxu0 0.0
    %2192 = vmatprep.subr.mxu0 0.0
    %2193 = vmatpush1.msra.mxu0 0.0
    %2194 = vmatprep.subr.mxu0 0.0
    %2195 = vmatpush1.msra.mxu0 0.0
    %2196 = vmatprep.subr.mxu0 0.0
    %2197 = vmatpush1.msra.mxu0 0.0
    %2198 = vmatprep.subr.mxu0 0.0
    %2199 = vmatpush1.msra.mxu0 0.0
    %2200 = vmatprep.subr.mxu0 0.0
    %2201 = vmatpush1.msra.mxu0 0.0
    %2202 = vmatprep.subr.mxu0 0.0
    %2203 = vmatpush1.msra.mxu0 0.0
    %2204 = vmatprep.subr.mxu0 0.0
    %2205 = vmatpush1.msra.mxu0 0.0
    %2206 = vmatprep.subr.mxu0 0.0
    %2207 = vmatpush1.msra.mxu0 0.0
    %2208 = vmatprep.subr.mxu0 0.0
    %2209 = vmatpush1.msra.mxu0 0.0
    %2210 = vmatprep.subr.mxu0 0.0
    %2211 = vmatpush1.msra.mxu0 0.0
    %2212 = vmatprep.subr.mxu0 0.0
    %2213 = vmatpush1.msra.mxu0 0.0
    %2214 = vmatprep.subr.mxu0 0.0
    %2215 = vmatpush1.msra.mxu0 0.0
    %2216 = vmatprep.subr.mxu0 0.0
    %2217 = vmatpush1.msra.mxu0 0.0
    %2218 = vmatprep.subr.mxu0 0.0
    %2219 = vmatpush1.msra.mxu0 0.0
    %2220 = vmatprep.subr.mxu0 0.0
    %2221 = vmatpush1.msra.mxu0 0.0
    %2222 = vmatprep.subr.mxu0 0.0
    %2223 = vmatpush1.msra.mxu0 0.0
    %2224 = vmatprep.subr.mxu0 0.0
    %2225 = vmatpush1.msra.mxu0 0.0
    %2226 = vmatprep.subr.mxu0 0.0
    %2227 = vmatpush1.msra.mxu0 0.0
    %2228 = vmatprep.subr.mxu0 0.0
    %2229 = vmatpush1.msra.mxu0 0.0
    %2230 = vmatprep.subr.mxu0 0.0
    %2231 = vmatpush1.msra.mxu0 0.0
    %2232 = vmatprep.subr.mxu0 0.0
    %2233 = vmatpush1.msra.mxu0 0.0
    %2234 = vmatprep.subr.mxu0 0.0
    %2235 = vmatpush1.msra.mxu0 0.0
    %2236 = vmatprep.subr.mxu0 0.0
    %2237 = vmatpush1.msra.mxu0 0.0
    %2238 = vmatprep.subr.mxu0 0.0
    %2239 = vmatpush1.msra.mxu0 0.0
    %2240 = vmatprep.subr.mxu0 0.0
    %2241 = vmatpush1.msra.mxu0 0.0
    %2242 = vmatprep.subr.mxu0 0.0
    %2243 = vmatpush1.msra.mxu0 0.0
    %2244 = vmatprep.subr.mxu0 0.0
    %2245 = vmatpush1.msra.mxu0 0.0
    %2246 = vmatprep.subr.mxu0 0.0
    %2247 = vmatpush1.msra.mxu0 0.0
    %2248 = vmatprep.mubr.f32.mxu0 0.0
    %2249 = vmatmul.mubr.f32.gmra.mrb[0].mxu0 %v304
    %v2250 = vpop.f32.mrb[0].mxu0
    %v2251 = vadd.f32 0.0, %v2250
    %v2252 = vpop.f32.mrb[0].mxu0
    %2253 = vmatprep.mubr.f32.mxu0 0.0
    %2254 = vmatmul.mubr.f32.gmra.mrb[0].mxu0 %v307
    %v2255 = vpop.f32.mrb[0].mxu0
    %v2256 = vadd.f32 0.0, %v2255
    %v2257 = vpop.f32.mrb[0].mxu0
    %2258 = vdwg.mxu0
    %2259 = vmatprep.subr.mxu0 0.0
    %2260 = vmatpush1.msra.mxu0 %v1921
    %2261 = vmatprep.subr.mxu0 0.0
    %2262 = vmatpush1.msra.mxu0 %v1926
    %2263 = vmatprep.subr.mxu0 0.0
    %2264 = vmatpush1.msra.mxu0 0.0
    %2265 = vmatprep.subr.mxu0 0.0
    %2266 = vmatpush1.msra.mxu0 0.0
    %2267 = vmatprep.subr.mxu0 0.0
    %2268 = vmatpush1.msra.mxu0 0.0
    %2269 = vmatprep.subr.mxu0 0.0
    %2270 = vmatpush1.msra.mxu0 0.0
    %2271 = vmatprep.subr.mxu0 0.0
    %2272 = vmatpush1.msra.mxu0 0.0
    %2273 = vmatprep.subr.mxu0 0.0
    %2274 = vmatpush1.msra.mxu0 0.0
    %2275 = vmatprep.subr.mxu0 0.0
    %2276 = vmatpush1.msra.mxu0 0.0
    %2277 = vmatprep.subr.mxu0 0.0
    %2278 = vmatpush1.msra.mxu0 0.0
    %2279 = vmatprep.subr.mxu0 0.0
    %2280 = vmatpush1.msra.mxu0 0.0
    %2281 = vmatprep.subr.mxu0 0.0
    %2282 = vmatpush1.msra.mxu0 0.0
    %2283 = vmatprep.subr.mxu0 0.0
    %2284 = vmatpush1.msra.mxu0 0.0
    %2285 = vmatprep.subr.mxu0 0.0
    %2286 = vmatpush1.msra.mxu0 0.0
    %2287 = vmatprep.subr.mxu0 0.0
    %2288 = vmatpush1.msra.mxu0 0.0
    %2289 = vmatprep.subr.mxu0 0.0
    %2290 = vmatpush1.msra.mxu0 0.0
    %2291 = vmatprep.subr.mxu0 0.0
    %2292 = vmatpush1.msra.mxu0 0.0
    %2293 = vmatprep.subr.mxu0 0.0
    %2294 = vmatpush1.msra.mxu0 0.0
    %2295 = vmatprep.subr.mxu0 0.0
    %2296 = vmatpush1.msra.mxu0 0.0
    %2297 = vmatprep.subr.mxu0 0.0
    %2298 = vmatpush1.msra.mxu0 0.0
    %2299 = vmatprep.subr.mxu0 0.0
    %2300 = vmatpush1.msra.mxu0 0.0
    %2301 = vmatprep.subr.mxu0 0.0
    %2302 = vmatpush1.msra.mxu0 0.0
    %2303 = vmatprep.subr.mxu0 0.0
    %2304 = vmatpush1.msra.mxu0 0.0
    %2305 = vmatprep.subr.mxu0 0.0
    %2306 = vmatpush1.msra.mxu0 0.0
    %2307 = vmatprep.subr.mxu0 0.0
    %2308 = vmatpush1.msra.mxu0 0.0
    %2309 = vmatprep.subr.mxu0 0.0
    %2310 = vmatpush1.msra.mxu0 0.0
    %2311 = vmatprep.subr.mxu0 0.0
    %2312 = vmatpush1.msra.mxu0 0.0
    %2313 = vmatprep.subr.mxu0 0.0
    %2314 = vmatpush1.msra.mxu0 0.0
    %2315 = vmatprep.subr.mxu0 0.0
    %2316 = vmatpush1.msra.mxu0 0.0
    %2317 = vmatprep.subr.mxu0 0.0
    %2318 = vmatpush1.msra.mxu0 0.0
    %2319 = vmatprep.subr.mxu0 0.0
    %2320 = vmatpush1.msra.mxu0 0.0
    %2321 = vmatprep.subr.mxu0 0.0
    %2322 = vmatpush1.msra.mxu0 0.0
    %2323 = vmatprep.mubr.f32.mxu0 0.0
    %2324 = vmatmul.mubr.f32.gmra.mrb[0].mxu0 %v304
    %v2325 = vpop.f32.mrb[0].mxu0
    %v2326 = vadd.f32 0.0, %v2325
    %v2327 = vpop.f32.mrb[0].mxu0
    %2328 = vmatprep.mubr.f32.mxu0 0.0
    %2329 = vmatmul.mubr.f32.gmra.mrb[0].mxu0 %v307
    %v2330 = vpop.f32.mrb[0].mxu0
    %v2331 = vadd.f32 0.0, %v2330
    %v2332 = vpop.f32.mrb[0].mxu0
    %2333 = vdwg.mxu0
    %2334 = vmatprep.subr.mxu0 0.0
    %2335 = vmatpush1.msra.mxu0 %v1931
    %2336 = vmatprep.subr.mxu0 0.0
    %2337 = vmatpush1.msra.mxu0 %v1936
    %2338 = vmatprep.subr.mxu0 0.0
    %2339 = vmatpush1.msra.mxu0 0.0
    %2340 = vmatprep.subr.mxu0 0.0
    %2341 = vmatpush1.msra.mxu0 0.0
    %2342 = vmatprep.subr.mxu0 0.0
    %2343 = vmatpush1.msra.mxu0 0.0
    %2344 = vmatprep.subr.mxu0 0.0
    %2345 = vmatpush1.msra.mxu0 0.0
    %2346 = vmatprep.subr.mxu0 0.0
    %2347 = vmatpush1.msra.mxu0 0.0
    %2348 = vmatprep.subr.mxu0 0.0
    %2349 = vmatpush1.msra.mxu0 0.0
    %2350 = vmatprep.subr.mxu0 0.0
    %2351 = vmatpush1.msra.mxu0 0.0
    %2352 = vmatprep.subr.mxu0 0.0
    %2353 = vmatpush1.msra.mxu0 0.0
    %2354 = vmatprep.subr.mxu0 0.0
    %2355 = vmatpush1.msra.mxu0 0.0
    %2356 = vmatprep.subr.mxu0 0.0
    %2357 = vmatpush1.msra.mxu0 0.0
    %2358 = vmatprep.subr.mxu0 0.0
    %2359 = vmatpush1.msra.mxu0 0.0
    %2360 = vmatprep.subr.mxu0 0.0
    %2361 = vmatpush1.msra.mxu0 0.0
    %2362 = vmatprep.subr.mxu0 0.0
    %2363 = vmatpush1.msra.mxu0 0.0
    %2364 = vmatprep.subr.mxu0 0.0
    %2365 = vmatpush1.msra.mxu0 0.0
    %2366 = vmatprep.subr.mxu0 0.0
    %2367 = vmatpush1.msra.mxu0 0.0
    %2368 = vmatprep.subr.mxu0 0.0
    %2369 = vmatpush1.msra.mxu0 0.0
    %2370 = vmatprep.subr.mxu0 0.0
    %2371 = vmatpush1.msra.mxu0 0.0
    %2372 = vmatprep.subr.mxu0 0.0
    %2373 = vmatpush1.msra.mxu0 0.0
    %2374 = vmatprep.subr.mxu0 0.0
    %2375 = vmatpush1.msra.mxu0 0.0
    %2376 = vmatprep.subr.mxu0 0.0
    %2377 = vmatpush1.msra.mxu0 0.0
    %2378 = vmatprep.subr.mxu0 0.0
    %2379 = vmatpush1.msra.mxu0 0.0
    %2380 = vmatprep.subr.mxu0 0.0
    %2381 = vmatpush1.msra.mxu0 0.0
    %2382 = vmatprep.subr.mxu0 0.0
    %2383 = vmatpush1.msra.mxu0 0.0
    %2384 = vmatprep.subr.mxu0 0.0
    %2385 = vmatpush1.msra.mxu0 0.0
    %2386 = vmatprep.subr.mxu0 0.0
    %2387 = vmatpush1.msra.mxu0 0.0
    %2388 = vmatprep.subr.mxu0 0.0
    %2389 = vmatpush1.msra.mxu0 0.0
    %2390 = vmatprep.subr.mxu0 0.0
    %2391 = vmatpush1.msra.mxu0 0.0
    %2392 = vmatprep.subr.mxu0 0.0
    %2393 = vmatpush1.msra.mxu0 0.0
    %2394 = vmatprep.subr.mxu0 0.0
    %2395 = vmatpush1.msra.mxu0 0.0
    %2396 = vmatprep.subr.mxu0 0.0
    %2397 = vmatpush1.msra.mxu0 0.0
    %2398 = vmatprep.mubr.f32.mxu0 0.0
    %2399 = vmatmul.mubr.f32.gmra.mrb[0].mxu0 %v304
    %v2400 = vpop.f32.mrb[0].mxu0
    %v2401 = vadd.f32 0.0, %v2400
    %v2402 = vpop.f32.mrb[0].mxu0
    %2403 = vmatprep.mubr.f32.mxu0 0.0
    %2404 = vmatmul.mubr.f32.gmra.mrb[0].mxu0 %v307
    %v2405 = vpop.f32.mrb[0].mxu0
    %v2406 = vadd.f32 0.0, %v2405
    %v2407 = vpop.f32.mrb[0].mxu0
    %2408 = vdwg.mxu0
    %2409 = vmatprep.subr.mxu0 0.0
    %2410 = vmatpush1.msra.mxu0 %v1941
    %2411 = vmatprep.subr.mxu0 0.0
    %2412 = vmatpush1.msra.mxu0 %v1946
    %2413 = vmatprep.subr.mxu0 0.0
    %2414 = vmatpush1.msra.mxu0 0.0
    %2415 = vmatprep.subr.mxu0 0.0
    %2416 = vmatpush1.msra.mxu0 0.0
    %2417 = vmatprep.subr.mxu0 0.0
    %2418 = vmatpush1.msra.mxu0 0.0
    %2419 = vmatprep.subr.mxu0 0.0
    %2420 = vmatpush1.msra.mxu0 0.0
    %2421 = vmatprep.subr.mxu0 0.0
    %2422 = vmatpush1.msra.mxu0 0.0
    %2423 = vmatprep.subr.mxu0 0.0
    %2424 = vmatpush1.msra.mxu0 0.0
    %2425 = vmatprep.subr.mxu0 0.0
    %2426 = vmatpush1.msra.mxu0 0.0
    %2427 = vmatprep.subr.mxu0 0.0
    %2428 = vmatpush1.msra.mxu0 0.0
    %2429 = vmatprep.subr.mxu0 0.0
    %2430 = vmatpush1.msra.mxu0 0.0
    %2431 = vmatprep.subr.mxu0 0.0
    %2432 = vmatpush1.msra.mxu0 0.0
    %2433 = vmatprep.subr.mxu0 0.0
    %2434 = vmatpush1.msra.mxu0 0.0
    %2435 = vmatprep.subr.mxu0 0.0
    %2436 = vmatpush1.msra.mxu0 0.0
    %2437 = vmatprep.subr.mxu0 0.0
    %2438 = vmatpush1.msra.mxu0 0.0
    %2439 = vmatprep.subr.mxu0 0.0
    %2440 = vmatpush1.msra.mxu0 0.0
    %2441 = vmatprep.subr.mxu0 0.0
    %2442 = vmatpush1.msra.mxu0 0.0
    %2443 = vmatprep.subr.mxu0 0.0
    %2444 = vmatpush1.msra.mxu0 0.0
    %2445 = vmatprep.subr.mxu0 0.0
    %2446 = vmatpush1.msra.mxu0 0.0
    %2447 = vmatprep.subr.mxu0 0.0
    %2448 = vmatpush1.msra.mxu0 0.0
    %2449 = vmatprep.subr.mxu0 0.0
    %2450 = vmatpush1.msra.mxu0 0.0
    %2451 = vmatprep.subr.mxu0 0.0
    %2452 = vmatpush1.msra.mxu0 0.0
    %2453 = vmatprep.subr.mxu0 0.0
    %2454 = vmatpush1.msra.mxu0 0.0
    %2455 = vmatprep.subr.mxu0 0.0
    %2456 = vmatpush1.msra.mxu0 0.0
    %2457 = vmatprep.subr.mxu0 0.0
    %2458 = vmatpush1.msra.mxu0 0.0
    %2459 = vmatprep.subr.mxu0 0.0
    %2460 = vmatpush1.msra.mxu0 0.0
    %2461 = vmatprep.subr.mxu0 0.0
    %2462 = vmatpush1.msra.mxu0 0.0
    %2463 = vmatprep.subr.mxu0 0.0
    %2464 = vmatpush1.msra.mxu0 0.0
    %2465 = vmatprep.subr.mxu0 0.0
    %2466 = vmatpush1.msra.mxu0 0.0
    %2467 = vmatprep.subr.mxu0 0.0
    %2468 = vmatpush1.msra.mxu0 0.0
    %2469 = vmatprep.subr.mxu0 0.0
    %2470 = vmatpush1.msra.mxu0 0.0
    %2471 = vmatprep.subr.mxu0 0.0
    %2472 = vmatpush1.msra.mxu0 0.0
    %2473 = vmatprep.mubr.f32.mxu0 0.0
    %2474 = vmatmul.mubr.f32.gmra.mrb[0].mxu0 %v304
    %v2475 = vpop.f32.mrb[0].mxu0
    %v2476 = vadd.f32 0.0, %v2475
    %v2477 = vpop.f32.mrb[0].mxu0
    %2478 = vmatprep.mubr.f32.mxu0 0.0
    %2479 = vmatmul.mubr.f32.gmra.mrb[0].mxu0 %v307
    %v2480 = vpop.f32.mrb[0].mxu0
    %v2481 = vadd.f32 0.0, %v2480
    %v2482 = vpop.f32.mrb[0].mxu0
    %2483 = vdwg.mxu0
    %2484 = vmatprep.subr.mxu0 0.0
    %2485 = vmatpush1.msra.mxu0 %v1951
    %2486 = vmatprep.subr.mxu0 0.0
    %2487 = vmatpush1.msra.mxu0 %v1956
    %2488 = vmatprep.subr.mxu0 0.0
    %2489 = vmatpush1.msra.mxu0 0.0
    %2490 = vmatprep.subr.mxu0 0.0
    %2491 = vmatpush1.msra.mxu0 0.0
    %2492 = vmatprep.subr.mxu0 0.0
    %2493 = vmatpush1.msra.mxu0 0.0
    %2494 = vmatprep.subr.mxu0 0.0
    %2495 = vmatpush1.msra.mxu0 0.0
    %2496 = vmatprep.subr.mxu0 0.0
    %2497 = vmatpush1.msra.mxu0 0.0
    %2498 = vmatprep.subr.mxu0 0.0
    %2499 = vmatpush1.msra.mxu0 0.0
    %2500 = vmatprep.subr.mxu0 0.0
    %2501 = vmatpush1.msra.mxu0 0.0
    %2502 = vmatprep.subr.mxu0 0.0
    %2503 = vmatpush1.msra.mxu0 0.0
    %2504 = vmatprep.subr.mxu0 0.0
    %2505 = vmatpush1.msra.mxu0 0.0
    %2506 = vmatprep.subr.mxu0 0.0
    %2507 = vmatpush1.msra.mxu0 0.0
    %2508 = vmatprep.subr.mxu0 0.0
    %2509 = vmatpush1.msra.mxu0 0.0
    %2510 = vmatprep.subr.mxu0 0.0
    %2511 = vmatpush1.msra.mxu0 0.0
    %2512 = vmatprep.subr.mxu0 0.0
    %2513 = vmatpush1.msra.mxu0 0.0
    %2514 = vmatprep.subr.mxu0 0.0
    %2515 = vmatpush1.msra.mxu0 0.0
    %2516 = vmatprep.subr.mxu0 0.0
    %2517 = vmatpush1.msra.mxu0 0.0
    %2518 = vmatprep.subr.mxu0 0.0
    %2519 = vmatpush1.msra.mxu0 0.0
    %2520 = vmatprep.subr.mxu0 0.0
    %2521 = vmatpush1.msra.mxu0 0.0
    %2522 = vmatprep.subr.mxu0 0.0
    %2523 = vmatpush1.msra.mxu0 0.0
    %2524 = vmatprep.subr.mxu0 0.0
    %2525 = vmatpush1.msra.mxu0 0.0
    %2526 = vmatprep.subr.mxu0 0.0
    %2527 = vmatpush1.msra.mxu0 0.0
    %2528 = vmatprep.subr.mxu0 0.0
    %2529 = vmatpush1.msra.mxu0 0.0
    %2530 = vmatprep.subr.mxu0 0.0
    %2531 = vmatpush1.msra.mxu0 0.0
    %2532 = vmatprep.subr.mxu0 0.0
    %2533 = vmatpush1.msra.mxu0 0.0
    %2534 = vmatprep.subr.mxu0 0.0
    %2535 = vmatpush1.msra.mxu0 0.0
    %2536 = vmatprep.subr.mxu0 0.0
    %2537 = vmatpush1.msra.mxu0 0.0
    %2538 = vmatprep.subr.mxu0 0.0
    %2539 = vmatpush1.msra.mxu0 0.0
    %2540 = vmatprep.subr.mxu0 0.0
    %2541 = vmatpush1.msra.mxu0 0.0
    %2542 = vmatprep.subr.mxu0 0.0
    %2543 = vmatpush1.msra.mxu0 0.0
    %2544 = vmatprep.subr.mxu0 0.0
    %2545 = vmatpush1.msra.mxu0 0.0
    %2546 = vmatprep.subr.mxu0 0.0
    %2547 = vmatpush1.msra.mxu0 0.0
    %2548 = vmatprep.mubr.f32.mxu0 0.0
    %2549 = vmatmul.mubr.f32.gmra.mrb[0].mxu0 %v304
    %v2550 = vpop.f32.mrb[0].mxu0
    %v2551 = vadd.f32 0.0, %v2550
    %v2552 = vpop.f32.mrb[0].mxu0
    %2553 = vmatprep.mubr.f32.mxu0 0.0
    %2554 = vmatmul.mubr.f32.gmra.mrb[0].mxu0 %v307
    %v2555 = vpop.f32.mrb[0].mxu0
    %v2556 = vadd.f32 0.0, %v2555
    %v2557 = vpop.f32.mrb[0].mxu0
    %2558 = vdwg.mxu0
    %v2559 = vsub.f32 %v2026, %v1702
    %v2560 = vsub.f32 %v2031, %v1703
    %v2561 = vsub.f32 %v2101, %v1704
    %v2562 = vsub.f32 %v2106, %v1705
    %v2563 = vsub.f32 %v2176, %v1706
    %v2564 = vsub.f32 %v2181, %v1707
    %v2565 = vsub.f32 %v2251, %v1708
    %v2566 = vsub.f32 %v2256, %v1709
    %v2567 = vsub.f32 %v2326, %v1710
    %v2568 = vsub.f32 %v2331, %v1711
    %v2569 = vsub.f32 %v2401, %v1712
    %v2570 = vsub.f32 %v2406, %v1713
    %v2571 = vsub.f32 %v2476, %v1714
    %v2572 = vsub.f32 %v2481, %v1715
    %v2573 = vsub.f32 %v2551, %v1716
    %v2574 = vsub.f32 %v2556, %v1717
    %v2575 = vmul.f32 %v93, %v93
    %v2576 = vmul.f32 %v94, %v94
    %v2577 = vmul.f32 %v95, %v95
    %v2578 = vmul.f32 %v96, %v96
    %v2579 = vmul.f32 %v97, %v97
    %v2580 = vmul.f32 %v98, %v98
    %v2581 = vmul.f32 %v99, %v99
    %v2582 = vmul.f32 %v100, %v100
    %v2583 = vmul.f32 %v101, %v101
    %v2584 = vmul.f32 %v102, %v102
    %v2585 = vmul.f32 %v103, %v103
    %v2586 = vmul.f32 %v104, %v104
    %v2587 = vmul.f32 %v105, %v105
    %v2588 = vmul.f32 %v106, %v106
    %v2589 = vmul.f32 %v107, %v107
    %v2590 = vmul.f32 %v108, %v108
    %v2592 = vsel %vm109, %v2575, 0
    %v2595 = vsel %vm109, %v2576, 0
    %v2598 = vsel %vm109, %v2577, 0
    %v2601 = vsel %vm109, %v2578, 0
    %v2604 = vsel %vm109, %v2579, 0
    %v2607 = vsel %vm109, %v2580, 0
    %v2610 = vsel %vm109, %v2581, 0
    %v2613 = vsel %vm109, %v2582, 0
    %v2616 = vsel %vm109, %v2583, 0
    %v2619 = vsel %vm109, %v2584, 0
    %v2622 = vsel %vm109, %v2585, 0
    %v2625 = vsel %vm109, %v2586, 0
    %v2628 = vsel %vm109, %v2587, 0
    %v2631 = vsel %vm109, %v2588, 0
    %v2634 = vsel %vm109, %v2589, 0
    %v2637 = vsel %vm109, %v2590, 0
    %2639 = vmatprep.subr.mxu0 0.0
    %2640 = vmatpush1.msra.mxu0 %v75
    %2641 = vmatprep.subr.mxu0 0.0
    %2642 = vmatpush1.msra.mxu0 %v76
    %2643 = vmatprep.subr.mxu0 0.0
    %2644 = vmatpush1.msra.mxu0 0.0
    %2645 = vmatprep.subr.mxu0 0.0
    %2646 = vmatpush1.msra.mxu0 0.0
    %2647 = vmatprep.subr.mxu0 0.0
    %2648 = vmatpush1.msra.mxu0 0.0
    %2649 = vmatprep.subr.mxu0 0.0
    %2650 = vmatpush1.msra.mxu0 0.0
    %2651 = vmatprep.subr.mxu0 0.0
    %2652 = vmatpush1.msra.mxu0 0.0
    %2653 = vmatprep.subr.mxu0 0.0
    %2654 = vmatpush1.msra.mxu0 0.0
    %2655 = vmatprep.subr.mxu0 0.0
    %2656 = vmatpush1.msra.mxu0 0.0
    %2657 = vmatprep.subr.mxu0 0.0
    %2658 = vmatpush1.msra.mxu0 0.0
    %2659 = vmatprep.subr.mxu0 0.0
    %2660 = vmatpush1.msra.mxu0 0.0
    %2661 = vmatprep.subr.mxu0 0.0
    %2662 = vmatpush1.msra.mxu0 0.0
    %2663 = vmatprep.subr.mxu0 0.0
    %2664 = vmatpush1.msra.mxu0 0.0
    %2665 = vmatprep.subr.mxu0 0.0
    %2666 = vmatpush1.msra.mxu0 0.0
    %2667 = vmatprep.subr.mxu0 0.0
    %2668 = vmatpush1.msra.mxu0 0.0
    %2669 = vmatprep.subr.mxu0 0.0
    %2670 = vmatpush1.msra.mxu0 0.0
    %2671 = vmatprep.subr.mxu0 0.0
    %2672 = vmatpush1.msra.mxu0 0.0
    %2673 = vmatprep.subr.mxu0 0.0
    %2674 = vmatpush1.msra.mxu0 0.0
    %2675 = vmatprep.subr.mxu0 0.0
    %2676 = vmatpush1.msra.mxu0 0.0
    %2677 = vmatprep.subr.mxu0 0.0
    %2678 = vmatpush1.msra.mxu0 0.0
    %2679 = vmatprep.subr.mxu0 0.0
    %2680 = vmatpush1.msra.mxu0 0.0
    %2681 = vmatprep.subr.mxu0 0.0
    %2682 = vmatpush1.msra.mxu0 0.0
    %2683 = vmatprep.subr.mxu0 0.0
    %2684 = vmatpush1.msra.mxu0 0.0
    %2685 = vmatprep.subr.mxu0 0.0
    %2686 = vmatpush1.msra.mxu0 0.0
    %2687 = vmatprep.subr.mxu0 0.0
    %2688 = vmatpush1.msra.mxu0 0.0
    %2689 = vmatprep.subr.mxu0 0.0
    %2690 = vmatpush1.msra.mxu0 0.0
    %2691 = vmatprep.subr.mxu0 0.0
    %2692 = vmatpush1.msra.mxu0 0.0
    %2693 = vmatprep.subr.mxu0 0.0
    %2694 = vmatpush1.msra.mxu0 0.0
    %2695 = vmatprep.subr.mxu0 0.0
    %2696 = vmatpush1.msra.mxu0 0.0
    %2697 = vmatprep.subr.mxu0 0.0
    %2698 = vmatpush1.msra.mxu0 0.0
    %2699 = vmatprep.subr.mxu0 0.0
    %2700 = vmatpush1.msra.mxu0 0.0
    %2701 = vmatprep.subr.mxu0 0.0
    %2702 = vmatpush1.msra.mxu0 0.0
    %2703 = vmatprep.mubr.f32.mxu0 0.0
    %2704 = vmatmul.mubr.f32.gmra.mrb[0].mxu0 %v2592
    %v2705 = vpop.f32.mrb[0].mxu0
    %v2706 = vadd.f32 0.0, %v2705
    %v2707 = vpop.f32.mrb[0].mxu0
    %2708 = vmatprep.mubr.f32.mxu0 0.0
    %2709 = vmatmul.mubr.f32.gmra.mrb[0].mxu0 %v2595
    %v2710 = vpop.f32.mrb[0].mxu0
    %v2711 = vadd.f32 0.0, %v2710
    %v2712 = vpop.f32.mrb[0].mxu0
    %2713 = vmatprep.mubr.f32.mxu0 0.0
    %2714 = vmatmul.mubr.f32.gmra.mrb[0].mxu0 %v2598
    %v2715 = vpop.f32.mrb[0].mxu0
    %v2716 = vadd.f32 0.0, %v2715
    %v2717 = vpop.f32.mrb[0].mxu0
    %2718 = vmatprep.mubr.f32.mxu0 0.0
    %2719 = vmatmul.mubr.f32.gmra.mrb[0].mxu0 %v2601
    %v2720 = vpop.f32.mrb[0].mxu0
    %v2721 = vadd.f32 0.0, %v2720
    %v2722 = vpop.f32.mrb[0].mxu0
    %2723 = vmatprep.mubr.f32.mxu0 0.0
    %2724 = vmatmul.mubr.f32.gmra.mrb[0].mxu0 %v2604
    %v2725 = vpop.f32.mrb[0].mxu0
    %v2726 = vadd.f32 0.0, %v2725
    %v2727 = vpop.f32.mrb[0].mxu0
    %2728 = vmatprep.mubr.f32.mxu0 0.0
    %2729 = vmatmul.mubr.f32.gmra.mrb[0].mxu0 %v2607
    %v2730 = vpop.f32.mrb[0].mxu0
    %v2731 = vadd.f32 0.0, %v2730
    %v2732 = vpop.f32.mrb[0].mxu0
    %2733 = vmatprep.mubr.f32.mxu0 0.0
    %2734 = vmatmul.mubr.f32.gmra.mrb[0].mxu0 %v2610
    %v2735 = vpop.f32.mrb[0].mxu0
    %v2736 = vadd.f32 0.0, %v2735
    %v2737 = vpop.f32.mrb[0].mxu0
    %2738 = vmatprep.mubr.f32.mxu0 0.0
    %2739 = vmatmul.mubr.f32.gmra.mrb[0].mxu0 %v2613
    %v2740 = vpop.f32.mrb[0].mxu0
    %v2741 = vadd.f32 0.0, %v2740
    %v2742 = vpop.f32.mrb[0].mxu0
    %2743 = vmatprep.mubr.f32.mxu0 0.0
    %2744 = vmatmul.mubr.f32.gmra.mrb[0].mxu0 %v2616
    %v2745 = vpop.f32.mrb[0].mxu0
    %v2746 = vadd.f32 0.0, %v2745
    %v2747 = vpop.f32.mrb[0].mxu0
    %2748 = vmatprep.mubr.f32.mxu0 0.0
    %2749 = vmatmul.mubr.f32.gmra.mrb[0].mxu0 %v2619
    %v2750 = vpop.f32.mrb[0].mxu0
    %v2751 = vadd.f32 0.0, %v2750
    %v2752 = vpop.f32.mrb[0].mxu0
    %2753 = vmatprep.mubr.f32.mxu0 0.0
    %2754 = vmatmul.mubr.f32.gmra.mrb[0].mxu0 %v2622
    %v2755 = vpop.f32.mrb[0].mxu0
    %v2756 = vadd.f32 0.0, %v2755
    %v2757 = vpop.f32.mrb[0].mxu0
    %2758 = vmatprep.mubr.f32.mxu0 0.0
    %2759 = vmatmul.mubr.f32.gmra.mrb[0].mxu0 %v2625
    %v2760 = vpop.f32.mrb[0].mxu0
    %v2761 = vadd.f32 0.0, %v2760
    %v2762 = vpop.f32.mrb[0].mxu0
    %2763 = vmatprep.mubr.f32.mxu0 0.0
    %2764 = vmatmul.mubr.f32.gmra.mrb[0].mxu0 %v2628
    %v2765 = vpop.f32.mrb[0].mxu0
    %v2766 = vadd.f32 0.0, %v2765
    %v2767 = vpop.f32.mrb[0].mxu0
    %2768 = vmatprep.mubr.f32.mxu0 0.0
    %2769 = vmatmul.mubr.f32.gmra.mrb[0].mxu0 %v2631
    %v2770 = vpop.f32.mrb[0].mxu0
    %v2771 = vadd.f32 0.0, %v2770
    %v2772 = vpop.f32.mrb[0].mxu0
    %2773 = vmatprep.mubr.f32.mxu0 0.0
    %2774 = vmatmul.mubr.f32.gmra.mrb[0].mxu0 %v2634
    %v2775 = vpop.f32.mrb[0].mxu0
    %v2776 = vadd.f32 0.0, %v2775
    %v2777 = vpop.f32.mrb[0].mxu0
    %2778 = vmatprep.mubr.f32.mxu0 0.0
    %2779 = vmatmul.mubr.f32.gmra.mrb[0].mxu0 %v2637
    %v2780 = vpop.f32.mrb[0].mxu0
    %v2781 = vadd.f32 0.0, %v2780
    %v2782 = vpop.f32.mrb[0].mxu0
    %2783 = vdwg.mxu0
    %2784 = vmatprep.subr.mxu0 0.0
    %2785 = vmatpush1.msra.mxu0 %v2706
    %2786 = vmatprep.subr.mxu0 0.0
    %2787 = vmatpush1.msra.mxu0 %v2711
    %2788 = vmatprep.subr.mxu0 0.0
    %2789 = vmatpush1.msra.mxu0 0.0
    %2790 = vmatprep.subr.mxu0 0.0
    %2791 = vmatpush1.msra.mxu0 0.0
    %2792 = vmatprep.subr.mxu0 0.0
    %2793 = vmatpush1.msra.mxu0 0.0
    %2794 = vmatprep.subr.mxu0 0.0
    %2795 = vmatpush1.msra.mxu0 0.0
    %2796 = vmatprep.subr.mxu0 0.0
    %2797 = vmatpush1.msra.mxu0 0.0
    %2798 = vmatprep.subr.mxu0 0.0
    %2799 = vmatpush1.msra.mxu0 0.0
    %2800 = vmatprep.subr.mxu0 0.0
    %2801 = vmatpush1.msra.mxu0 0.0
    %2802 = vmatprep.subr.mxu0 0.0
    %2803 = vmatpush1.msra.mxu0 0.0
    %2804 = vmatprep.subr.mxu0 0.0
    %2805 = vmatpush1.msra.mxu0 0.0
    %2806 = vmatprep.subr.mxu0 0.0
    %2807 = vmatpush1.msra.mxu0 0.0
    %2808 = vmatprep.subr.mxu0 0.0
    %2809 = vmatpush1.msra.mxu0 0.0
    %2810 = vmatprep.subr.mxu0 0.0
    %2811 = vmatpush1.msra.mxu0 0.0
    %2812 = vmatprep.subr.mxu0 0.0
    %2813 = vmatpush1.msra.mxu0 0.0
    %2814 = vmatprep.subr.mxu0 0.0
    %2815 = vmatpush1.msra.mxu0 0.0
    %2816 = vmatprep.subr.mxu0 0.0
    %2817 = vmatpush1.msra.mxu0 0.0
    %2818 = vmatprep.subr.mxu0 0.0
    %2819 = vmatpush1.msra.mxu0 0.0
    %2820 = vmatprep.subr.mxu0 0.0
    %2821 = vmatpush1.msra.mxu0 0.0
    %2822 = vmatprep.subr.mxu0 0.0
    %2823 = vmatpush1.msra.mxu0 0.0
    %2824 = vmatprep.subr.mxu0 0.0
    %2825 = vmatpush1.msra.mxu0 0.0
    %2826 = vmatprep.subr.mxu0 0.0
    %2827 = vmatpush1.msra.mxu0 0.0
    %2828 = vmatprep.subr.mxu0 0.0
    %2829 = vmatpush1.msra.mxu0 0.0
    %2830 = vmatprep.subr.mxu0 0.0
    %2831 = vmatpush1.msra.mxu0 0.0
    %2832 = vmatprep.subr.mxu0 0.0
    %2833 = vmatpush1.msra.mxu0 0.0
    %2834 = vmatprep.subr.mxu0 0.0
    %2835 = vmatpush1.msra.mxu0 0.0
    %2836 = vmatprep.subr.mxu0 0.0
    %2837 = vmatpush1.msra.mxu0 0.0
    %2838 = vmatprep.subr.mxu0 0.0
    %2839 = vmatpush1.msra.mxu0 0.0
    %2840 = vmatprep.subr.mxu0 0.0
    %2841 = vmatpush1.msra.mxu0 0.0
    %2842 = vmatprep.subr.mxu0 0.0
    %2843 = vmatpush1.msra.mxu0 0.0
    %2844 = vmatprep.subr.mxu0 0.0
    %2845 = vmatpush1.msra.mxu0 0.0
    %2846 = vmatprep.subr.mxu0 0.0
    %2847 = vmatpush1.msra.mxu0 0.0
    %2848 = vmatprep.mubr.f32.mxu0 0.0
    %2849 = vmatmul.mubr.f32.gmra.mrb[0].mxu0 %v304
    %v2850 = vpop.f32.mrb[0].mxu0
    %v2851 = vadd.f32 0.0, %v2850
    %v2852 = vpop.f32.mrb[0].mxu0
    %2853 = vmatprep.mubr.f32.mxu0 0.0
    %2854 = vmatmul.mubr.f32.gmra.mrb[0].mxu0 %v307
    %v2855 = vpop.f32.mrb[0].mxu0
    %v2856 = vadd.f32 0.0, %v2855
    %v2857 = vpop.f32.mrb[0].mxu0
    %2858 = vdwg.mxu0
    %2859 = vmatprep.subr.mxu0 0.0
    %2860 = vmatpush1.msra.mxu0 %v2716
    %2861 = vmatprep.subr.mxu0 0.0
    %2862 = vmatpush1.msra.mxu0 %v2721
    %2863 = vmatprep.subr.mxu0 0.0
    %2864 = vmatpush1.msra.mxu0 0.0
    %2865 = vmatprep.subr.mxu0 0.0
    %2866 = vmatpush1.msra.mxu0 0.0
    %2867 = vmatprep.subr.mxu0 0.0
    %2868 = vmatpush1.msra.mxu0 0.0
    %2869 = vmatprep.subr.mxu0 0.0
    %2870 = vmatpush1.msra.mxu0 0.0
    %2871 = vmatprep.subr.mxu0 0.0
    %2872 = vmatpush1.msra.mxu0 0.0
    %2873 = vmatprep.subr.mxu0 0.0
    %2874 = vmatpush1.msra.mxu0 0.0
    %2875 = vmatprep.subr.mxu0 0.0
    %2876 = vmatpush1.msra.mxu0 0.0
    %2877 = vmatprep.subr.mxu0 0.0
    %2878 = vmatpush1.msra.mxu0 0.0
    %2879 = vmatprep.subr.mxu0 0.0
    %2880 = vmatpush1.msra.mxu0 0.0
    %2881 = vmatprep.subr.mxu0 0.0
    %2882 = vmatpush1.msra.mxu0 0.0
    %2883 = vmatprep.subr.mxu0 0.0
    %2884 = vmatpush1.msra.mxu0 0.0
    %2885 = vmatprep.subr.mxu0 0.0
    %2886 = vmatpush1.msra.mxu0 0.0
    %2887 = vmatprep.subr.mxu0 0.0
    %2888 = vmatpush1.msra.mxu0 0.0
    %2889 = vmatprep.subr.mxu0 0.0
    %2890 = vmatpush1.msra.mxu0 0.0
    %2891 = vmatprep.subr.mxu0 0.0
    %2892 = vmatpush1.msra.mxu0 0.0
    %2893 = vmatprep.subr.mxu0 0.0
    %2894 = vmatpush1.msra.mxu0 0.0
    %2895 = vmatprep.subr.mxu0 0.0
    %2896 = vmatpush1.msra.mxu0 0.0
    %2897 = vmatprep.subr.mxu0 0.0
    %2898 = vmatpush1.msra.mxu0 0.0
    %2899 = vmatprep.subr.mxu0 0.0
    %2900 = vmatpush1.msra.mxu0 0.0
    %2901 = vmatprep.subr.mxu0 0.0
    %2902 = vmatpush1.msra.mxu0 0.0
    %2903 = vmatprep.subr.mxu0 0.0
    %2904 = vmatpush1.msra.mxu0 0.0
    %2905 = vmatprep.subr.mxu0 0.0
    %2906 = vmatpush1.msra.mxu0 0.0
    %2907 = vmatprep.subr.mxu0 0.0
    %2908 = vmatpush1.msra.mxu0 0.0
    %2909 = vmatprep.subr.mxu0 0.0
    %2910 = vmatpush1.msra.mxu0 0.0
    %2911 = vmatprep.subr.mxu0 0.0
    %2912 = vmatpush1.msra.mxu0 0.0
    %2913 = vmatprep.subr.mxu0 0.0
    %2914 = vmatpush1.msra.mxu0 0.0
    %2915 = vmatprep.subr.mxu0 0.0
    %2916 = vmatpush1.msra.mxu0 0.0
    %2917 = vmatprep.subr.mxu0 0.0
    %2918 = vmatpush1.msra.mxu0 0.0
    %2919 = vmatprep.subr.mxu0 0.0
    %2920 = vmatpush1.msra.mxu0 0.0
    %2921 = vmatprep.subr.mxu0 0.0
    %2922 = vmatpush1.msra.mxu0 0.0
    %2923 = vmatprep.mubr.f32.mxu0 0.0
    %2924 = vmatmul.mubr.f32.gmra.mrb[0].mxu0 %v304
    %v2925 = vpop.f32.mrb[0].mxu0
    %v2926 = vadd.f32 0.0, %v2925
    %v2927 = vpop.f32.mrb[0].mxu0
    %2928 = vmatprep.mubr.f32.mxu0 0.0
    %2929 = vmatmul.mubr.f32.gmra.mrb[0].mxu0 %v307
    %v2930 = vpop.f32.mrb[0].mxu0
    %v2931 = vadd.f32 0.0, %v2930
    %v2932 = vpop.f32.mrb[0].mxu0
    %2933 = vdwg.mxu0
    %2934 = vmatprep.subr.mxu0 0.0
    %2935 = vmatpush1.msra.mxu0 %v2726
    %2936 = vmatprep.subr.mxu0 0.0
    %2937 = vmatpush1.msra.mxu0 %v2731
    %2938 = vmatprep.subr.mxu0 0.0
    %2939 = vmatpush1.msra.mxu0 0.0
    %2940 = vmatprep.subr.mxu0 0.0
    %2941 = vmatpush1.msra.mxu0 0.0
    %2942 = vmatprep.subr.mxu0 0.0
    %2943 = vmatpush1.msra.mxu0 0.0
    %2944 = vmatprep.subr.mxu0 0.0
    %2945 = vmatpush1.msra.mxu0 0.0
    %2946 = vmatprep.subr.mxu0 0.0
    %2947 = vmatpush1.msra.mxu0 0.0
    %2948 = vmatprep.subr.mxu0 0.0
    %2949 = vmatpush1.msra.mxu0 0.0
    %2950 = vmatprep.subr.mxu0 0.0
    %2951 = vmatpush1.msra.mxu0 0.0
    %2952 = vmatprep.subr.mxu0 0.0
    %2953 = vmatpush1.msra.mxu0 0.0
    %2954 = vmatprep.subr.mxu0 0.0
    %2955 = vmatpush1.msra.mxu0 0.0
    %2956 = vmatprep.subr.mxu0 0.0
    %2957 = vmatpush1.msra.mxu0 0.0
    %2958 = vmatprep.subr.mxu0 0.0
    %2959 = vmatpush1.msra.mxu0 0.0
    %2960 = vmatprep.subr.mxu0 0.0
    %2961 = vmatpush1.msra.mxu0 0.0
    %2962 = vmatprep.subr.mxu0 0.0
    %2963 = vmatpush1.msra.mxu0 0.0
    %2964 = vmatprep.subr.mxu0 0.0
    %2965 = vmatpush1.msra.mxu0 0.0
    %2966 = vmatprep.subr.mxu0 0.0
    %2967 = vmatpush1.msra.mxu0 0.0
    %2968 = vmatprep.subr.mxu0 0.0
    %2969 = vmatpush1.msra.mxu0 0.0
    %2970 = vmatprep.subr.mxu0 0.0
    %2971 = vmatpush1.msra.mxu0 0.0
    %2972 = vmatprep.subr.mxu0 0.0
    %2973 = vmatpush1.msra.mxu0 0.0
    %2974 = vmatprep.subr.mxu0 0.0
    %2975 = vmatpush1.msra.mxu0 0.0
    %2976 = vmatprep.subr.mxu0 0.0
    %2977 = vmatpush1.msra.mxu0 0.0
    %2978 = vmatprep.subr.mxu0 0.0
    %2979 = vmatpush1.msra.mxu0 0.0
    %2980 = vmatprep.subr.mxu0 0.0
    %2981 = vmatpush1.msra.mxu0 0.0
    %2982 = vmatprep.subr.mxu0 0.0
    %2983 = vmatpush1.msra.mxu0 0.0
    %2984 = vmatprep.subr.mxu0 0.0
    %2985 = vmatpush1.msra.mxu0 0.0
    %2986 = vmatprep.subr.mxu0 0.0
    %2987 = vmatpush1.msra.mxu0 0.0
    %2988 = vmatprep.subr.mxu0 0.0
    %2989 = vmatpush1.msra.mxu0 0.0
    %2990 = vmatprep.subr.mxu0 0.0
    %2991 = vmatpush1.msra.mxu0 0.0
    %2992 = vmatprep.subr.mxu0 0.0
    %2993 = vmatpush1.msra.mxu0 0.0
    %2994 = vmatprep.subr.mxu0 0.0
    %2995 = vmatpush1.msra.mxu0 0.0
    %2996 = vmatprep.subr.mxu0 0.0
    %2997 = vmatpush1.msra.mxu0 0.0
    %2998 = vmatprep.mubr.f32.mxu0 0.0
    %2999 = vmatmul.mubr.f32.gmra.mrb[0].mxu0 %v304
    %v3000 = vpop.f32.mrb[0].mxu0
    %v3001 = vadd.f32 0.0, %v3000
    %v3002 = vpop.f32.mrb[0].mxu0
    %3003 = vmatprep.mubr.f32.mxu0 0.0
    %3004 = vmatmul.mubr.f32.gmra.mrb[0].mxu0 %v307
    %v3005 = vpop.f32.mrb[0].mxu0
    %v3006 = vadd.f32 0.0, %v3005
    %v3007 = vpop.f32.mrb[0].mxu0
    %3008 = vdwg.mxu0
    %3009 = vmatprep.subr.mxu0 0.0
    %3010 = vmatpush1.msra.mxu0 %v2736
    %3011 = vmatprep.subr.mxu0 0.0
    %3012 = vmatpush1.msra.mxu0 %v2741
    %3013 = vmatprep.subr.mxu0 0.0
    %3014 = vmatpush1.msra.mxu0 0.0
    %3015 = vmatprep.subr.mxu0 0.0
    %3016 = vmatpush1.msra.mxu0 0.0
    %3017 = vmatprep.subr.mxu0 0.0
    %3018 = vmatpush1.msra.mxu0 0.0
    %3019 = vmatprep.subr.mxu0 0.0
    %3020 = vmatpush1.msra.mxu0 0.0
    %3021 = vmatprep.subr.mxu0 0.0
    %3022 = vmatpush1.msra.mxu0 0.0
    %3023 = vmatprep.subr.mxu0 0.0
    %3024 = vmatpush1.msra.mxu0 0.0
    %3025 = vmatprep.subr.mxu0 0.0
    %3026 = vmatpush1.msra.mxu0 0.0
    %3027 = vmatprep.subr.mxu0 0.0
    %3028 = vmatpush1.msra.mxu0 0.0
    %3029 = vmatprep.subr.mxu0 0.0
    %3030 = vmatpush1.msra.mxu0 0.0
    %3031 = vmatprep.subr.mxu0 0.0
    %3032 = vmatpush1.msra.mxu0 0.0
    %3033 = vmatprep.subr.mxu0 0.0
    %3034 = vmatpush1.msra.mxu0 0.0
    %3035 = vmatprep.subr.mxu0 0.0
    %3036 = vmatpush1.msra.mxu0 0.0
    %3037 = vmatprep.subr.mxu0 0.0
    %3038 = vmatpush1.msra.mxu0 0.0
    %3039 = vmatprep.subr.mxu0 0.0
    %3040 = vmatpush1.msra.mxu0 0.0
    %3041 = vmatprep.subr.mxu0 0.0
    %3042 = vmatpush1.msra.mxu0 0.0
    %3043 = vmatprep.subr.mxu0 0.0
    %3044 = vmatpush1.msra.mxu0 0.0
    %3045 = vmatprep.subr.mxu0 0.0
    %3046 = vmatpush1.msra.mxu0 0.0
    %3047 = vmatprep.subr.mxu0 0.0
    %3048 = vmatpush1.msra.mxu0 0.0
    %3049 = vmatprep.subr.mxu0 0.0
    %3050 = vmatpush1.msra.mxu0 0.0
    %3051 = vmatprep.subr.mxu0 0.0
    %3052 = vmatpush1.msra.mxu0 0.0
    %3053 = vmatprep.subr.mxu0 0.0
    %3054 = vmatpush1.msra.mxu0 0.0
    %3055 = vmatprep.subr.mxu0 0.0
    %3056 = vmatpush1.msra.mxu0 0.0
    %3057 = vmatprep.subr.mxu0 0.0
    %3058 = vmatpush1.msra.mxu0 0.0
    %3059 = vmatprep.subr.mxu0 0.0
    %3060 = vmatpush1.msra.mxu0 0.0
    %3061 = vmatprep.subr.mxu0 0.0
    %3062 = vmatpush1.msra.mxu0 0.0
    %3063 = vmatprep.subr.mxu0 0.0
    %3064 = vmatpush1.msra.mxu0 0.0
    %3065 = vmatprep.subr.mxu0 0.0
    %3066 = vmatpush1.msra.mxu0 0.0
    %3067 = vmatprep.subr.mxu0 0.0
    %3068 = vmatpush1.msra.mxu0 0.0
    %3069 = vmatprep.subr.mxu0 0.0
    %3070 = vmatpush1.msra.mxu0 0.0
    %3071 = vmatprep.subr.mxu0 0.0
    %3072 = vmatpush1.msra.mxu0 0.0
    %3073 = vmatprep.mubr.f32.mxu0 0.0
    %3074 = vmatmul.mubr.f32.gmra.mrb[0].mxu0 %v304
    %v3075 = vpop.f32.mrb[0].mxu0
    %v3076 = vadd.f32 0.0, %v3075
    %v3077 = vpop.f32.mrb[0].mxu0
    %3078 = vmatprep.mubr.f32.mxu0 0.0
    %3079 = vmatmul.mubr.f32.gmra.mrb[0].mxu0 %v307
    %v3080 = vpop.f32.mrb[0].mxu0
    %v3081 = vadd.f32 0.0, %v3080
    %v3082 = vpop.f32.mrb[0].mxu0
    %3083 = vdwg.mxu0
    %3084 = vmatprep.subr.mxu0 0.0
    %3085 = vmatpush1.msra.mxu0 %v2746
    %3086 = vmatprep.subr.mxu0 0.0
    %3087 = vmatpush1.msra.mxu0 %v2751
    %3088 = vmatprep.subr.mxu0 0.0
    %3089 = vmatpush1.msra.mxu0 0.0
    %3090 = vmatprep.subr.mxu0 0.0
    %3091 = vmatpush1.msra.mxu0 0.0
    %3092 = vmatprep.subr.mxu0 0.0
    %3093 = vmatpush1.msra.mxu0 0.0
    %3094 = vmatprep.subr.mxu0 0.0
    %3095 = vmatpush1.msra.mxu0 0.0
    %3096 = vmatprep.subr.mxu0 0.0
    %3097 = vmatpush1.msra.mxu0 0.0
    %3098 = vmatprep.subr.mxu0 0.0
    %3099 = vmatpush1.msra.mxu0 0.0
    %3100 = vmatprep.subr.mxu0 0.0
    %3101 = vmatpush1.msra.mxu0 0.0
    %3102 = vmatprep.subr.mxu0 0.0
    %3103 = vmatpush1.msra.mxu0 0.0
    %3104 = vmatprep.subr.mxu0 0.0
    %3105 = vmatpush1.msra.mxu0 0.0
    %3106 = vmatprep.subr.mxu0 0.0
    %3107 = vmatpush1.msra.mxu0 0.0
    %3108 = vmatprep.subr.mxu0 0.0
    %3109 = vmatpush1.msra.mxu0 0.0
    %3110 = vmatprep.subr.mxu0 0.0
    %3111 = vmatpush1.msra.mxu0 0.0
    %3112 = vmatprep.subr.mxu0 0.0
    %3113 = vmatpush1.msra.mxu0 0.0
    %3114 = vmatprep.subr.mxu0 0.0
    %3115 = vmatpush1.msra.mxu0 0.0
    %3116 = vmatprep.subr.mxu0 0.0
    %3117 = vmatpush1.msra.mxu0 0.0
    %3118 = vmatprep.subr.mxu0 0.0
    %3119 = vmatpush1.msra.mxu0 0.0
    %3120 = vmatprep.subr.mxu0 0.0
    %3121 = vmatpush1.msra.mxu0 0.0
    %3122 = vmatprep.subr.mxu0 0.0
    %3123 = vmatpush1.msra.mxu0 0.0
    %3124 = vmatprep.subr.mxu0 0.0
    %3125 = vmatpush1.msra.mxu0 0.0
    %3126 = vmatprep.subr.mxu0 0.0
    %3127 = vmatpush1.msra.mxu0 0.0
    %3128 = vmatprep.subr.mxu0 0.0
    %3129 = vmatpush1.msra.mxu0 0.0
    %3130 = vmatprep.subr.mxu0 0.0
    %3131 = vmatpush1.msra.mxu0 0.0
    %3132 = vmatprep.subr.mxu0 0.0
    %3133 = vmatpush1.msra.mxu0 0.0
    %3134 = vmatprep.subr.mxu0 0.0
    %3135 = vmatpush1.msra.mxu0 0.0
    %3136 = vmatprep.subr.mxu0 0.0
    %3137 = vmatpush1.msra.mxu0 0.0
    %3138 = vmatprep.subr.mxu0 0.0
    %3139 = vmatpush1.msra.mxu0 0.0
    %3140 = vmatprep.subr.mxu0 0.0
    %3141 = vmatpush1.msra.mxu0 0.0
    %3142 = vmatprep.subr.mxu0 0.0
    %3143 = vmatpush1.msra.mxu0 0.0
    %3144 = vmatprep.subr.mxu0 0.0
    %3145 = vmatpush1.msra.mxu0 0.0
    %3146 = vmatprep.subr.mxu0 0.0
    %3147 = vmatpush1.msra.mxu0 0.0
    %3148 = vmatprep.mubr.f32.mxu0 0.0
    %3149 = vmatmul.mubr.f32.gmra.mrb[0].mxu0 %v304
    %v3150 = vpop.f32.mrb[0].mxu0
    %v3151 = vadd.f32 0.0, %v3150
    %v3152 = vpop.f32.mrb[0].mxu0
    %3153 = vmatprep.mubr.f32.mxu0 0.0
    %3154 = vmatmul.mubr.f32.gmra.mrb[0].mxu0 %v307
    %v3155 = vpop.f32.mrb[0].mxu0
    %v3156 = vadd.f32 0.0, %v3155
    %v3157 = vpop.f32.mrb[0].mxu0
    %3158 = vdwg.mxu0
    %3159 = vmatprep.subr.mxu0 0.0
    %3160 = vmatpush1.msra.mxu0 %v2756
    %3161 = vmatprep.subr.mxu0 0.0
    %3162 = vmatpush1.msra.mxu0 %v2761
    %3163 = vmatprep.subr.mxu0 0.0
    %3164 = vmatpush1.msra.mxu0 0.0
    %3165 = vmatprep.subr.mxu0 0.0
    %3166 = vmatpush1.msra.mxu0 0.0
    %3167 = vmatprep.subr.mxu0 0.0
    %3168 = vmatpush1.msra.mxu0 0.0
    %3169 = vmatprep.subr.mxu0 0.0
    %3170 = vmatpush1.msra.mxu0 0.0
    %3171 = vmatprep.subr.mxu0 0.0
    %3172 = vmatpush1.msra.mxu0 0.0
    %3173 = vmatprep.subr.mxu0 0.0
    %3174 = vmatpush1.msra.mxu0 0.0
    %3175 = vmatprep.subr.mxu0 0.0
    %3176 = vmatpush1.msra.mxu0 0.0
    %3177 = vmatprep.subr.mxu0 0.0
    %3178 = vmatpush1.msra.mxu0 0.0
    %3179 = vmatprep.subr.mxu0 0.0
    %3180 = vmatpush1.msra.mxu0 0.0
    %3181 = vmatprep.subr.mxu0 0.0
    %3182 = vmatpush1.msra.mxu0 0.0
    %3183 = vmatprep.subr.mxu0 0.0
    %3184 = vmatpush1.msra.mxu0 0.0
    %3185 = vmatprep.subr.mxu0 0.0
    %3186 = vmatpush1.msra.mxu0 0.0
    %3187 = vmatprep.subr.mxu0 0.0
    %3188 = vmatpush1.msra.mxu0 0.0
    %3189 = vmatprep.subr.mxu0 0.0
    %3190 = vmatpush1.msra.mxu0 0.0
    %3191 = vmatprep.subr.mxu0 0.0
    %3192 = vmatpush1.msra.mxu0 0.0
    %3193 = vmatprep.subr.mxu0 0.0
    %3194 = vmatpush1.msra.mxu0 0.0
    %3195 = vmatprep.subr.mxu0 0.0
    %3196 = vmatpush1.msra.mxu0 0.0
    %3197 = vmatprep.subr.mxu0 0.0
    %3198 = vmatpush1.msra.mxu0 0.0
    %3199 = vmatprep.subr.mxu0 0.0
    %3200 = vmatpush1.msra.mxu0 0.0
    %3201 = vmatprep.subr.mxu0 0.0
    %3202 = vmatpush1.msra.mxu0 0.0
    %3203 = vmatprep.subr.mxu0 0.0
    %3204 = vmatpush1.msra.mxu0 0.0
    %3205 = vmatprep.subr.mxu0 0.0
    %3206 = vmatpush1.msra.mxu0 0.0
    %3207 = vmatprep.subr.mxu0 0.0
    %3208 = vmatpush1.msra.mxu0 0.0
    %3209 = vmatprep.subr.mxu0 0.0
    %3210 = vmatpush1.msra.mxu0 0.0
    %3211 = vmatprep.subr.mxu0 0.0
    %3212 = vmatpush1.msra.mxu0 0.0
    %3213 = vmatprep.subr.mxu0 0.0
    %3214 = vmatpush1.msra.mxu0 0.0
    %3215 = vmatprep.subr.mxu0 0.0
    %3216 = vmatpush1.msra.mxu0 0.0
    %3217 = vmatprep.subr.mxu0 0.0
    %3218 = vmatpush1.msra.mxu0 0.0
    %3219 = vmatprep.subr.mxu0 0.0
    %3220 = vmatpush1.msra.mxu0 0.0
    %3221 = vmatprep.subr.mxu0 0.0
    %3222 = vmatpush1.msra.mxu0 0.0
    %3223 = vmatprep.mubr.f32.mxu0 0.0
    %3224 = vmatmul.mubr.f32.gmra.mrb[0].mxu0 %v304
    %v3225 = vpop.f32.mrb[0].mxu0
    %v3226 = vadd.f32 0.0, %v3225
    %v3227 = vpop.f32.mrb[0].mxu0
    %3228 = vmatprep.mubr.f32.mxu0 0.0
    %3229 = vmatmul.mubr.f32.gmra.mrb[0].mxu0 %v307
    %v3230 = vpop.f32.mrb[0].mxu0
    %v3231 = vadd.f32 0.0, %v3230
    %v3232 = vpop.f32.mrb[0].mxu0
    %3233 = vdwg.mxu0
    %3234 = vmatprep.subr.mxu0 0.0
    %3235 = vmatpush1.msra.mxu0 %v2766
    %3236 = vmatprep.subr.mxu0 0.0
    %3237 = vmatpush1.msra.mxu0 %v2771
    %3238 = vmatprep.subr.mxu0 0.0
    %3239 = vmatpush1.msra.mxu0 0.0
    %3240 = vmatprep.subr.mxu0 0.0
    %3241 = vmatpush1.msra.mxu0 0.0
    %3242 = vmatprep.subr.mxu0 0.0
    %3243 = vmatpush1.msra.mxu0 0.0
    %3244 = vmatprep.subr.mxu0 0.0
    %3245 = vmatpush1.msra.mxu0 0.0
    %3246 = vmatprep.subr.mxu0 0.0
    %3247 = vmatpush1.msra.mxu0 0.0
    %3248 = vmatprep.subr.mxu0 0.0
    %3249 = vmatpush1.msra.mxu0 0.0
    %3250 = vmatprep.subr.mxu0 0.0
    %3251 = vmatpush1.msra.mxu0 0.0
    %3252 = vmatprep.subr.mxu0 0.0
    %3253 = vmatpush1.msra.mxu0 0.0
    %3254 = vmatprep.subr.mxu0 0.0
    %3255 = vmatpush1.msra.mxu0 0.0
    %3256 = vmatprep.subr.mxu0 0.0
    %3257 = vmatpush1.msra.mxu0 0.0
    %3258 = vmatprep.subr.mxu0 0.0
    %3259 = vmatpush1.msra.mxu0 0.0
    %3260 = vmatprep.subr.mxu0 0.0
    %3261 = vmatpush1.msra.mxu0 0.0
    %3262 = vmatprep.subr.mxu0 0.0
    %3263 = vmatpush1.msra.mxu0 0.0
    %3264 = vmatprep.subr.mxu0 0.0
    %3265 = vmatpush1.msra.mxu0 0.0
    %3266 = vmatprep.subr.mxu0 0.0
    %3267 = vmatpush1.msra.mxu0 0.0
    %3268 = vmatprep.subr.mxu0 0.0
    %3269 = vmatpush1.msra.mxu0 0.0
    %3270 = vmatprep.subr.mxu0 0.0
    %3271 = vmatpush1.msra.mxu0 0.0
    %3272 = vmatprep.subr.mxu0 0.0
    %3273 = vmatpush1.msra.mxu0 0.0
    %3274 = vmatprep.subr.mxu0 0.0
    %3275 = vmatpush1.msra.mxu0 0.0
    %3276 = vmatprep.subr.mxu0 0.0
    %3277 = vmatpush1.msra.mxu0 0.0
    %3278 = vmatprep.subr.mxu0 0.0
    %3279 = vmatpush1.msra.mxu0 0.0
    %3280 = vmatprep.subr.mxu0 0.0
    %3281 = vmatpush1.msra.mxu0 0.0
    %3282 = vmatprep.subr.mxu0 0.0
    %3283 = vmatpush1.msra.mxu0 0.0
    %3284 = vmatprep.subr.mxu0 0.0
    %3285 = vmatpush1.msra.mxu0 0.0
    %3286 = vmatprep.subr.mxu0 0.0
    %3287 = vmatpush1.msra.mxu0 0.0
    %3288 = vmatprep.subr.mxu0 0.0
    %3289 = vmatpush1.msra.mxu0 0.0
    %3290 = vmatprep.subr.mxu0 0.0
    %3291 = vmatpush1.msra.mxu0 0.0
    %3292 = vmatprep.subr.mxu0 0.0
    %3293 = vmatpush1.msra.mxu0 0.0
    %3294 = vmatprep.subr.mxu0 0.0
    %3295 = vmatpush1.msra.mxu0 0.0
    %3296 = vmatprep.subr.mxu0 0.0
    %3297 = vmatpush1.msra.mxu0 0.0
    %3298 = vmatprep.mubr.f32.mxu0 0.0
    %3299 = vmatmul.mubr.f32.gmra.mrb[0].mxu0 %v304
    %v3300 = vpop.f32.mrb[0].mxu0
    %v3301 = vadd.f32 0.0, %v3300
    %v3302 = vpop.f32.mrb[0].mxu0
    %3303 = vmatprep.mubr.f32.mxu0 0.0
    %3304 = vmatmul.mubr.f32.gmra.mrb[0].mxu0 %v307
    %v3305 = vpop.f32.mrb[0].mxu0
    %v3306 = vadd.f32 0.0, %v3305
    %v3307 = vpop.f32.mrb[0].mxu0
    %3308 = vdwg.mxu0
    %3309 = vmatprep.subr.mxu0 0.0
    %3310 = vmatpush1.msra.mxu0 %v2776
    %3311 = vmatprep.subr.mxu0 0.0
    %3312 = vmatpush1.msra.mxu0 %v2781
    %3313 = vmatprep.subr.mxu0 0.0
    %3314 = vmatpush1.msra.mxu0 0.0
    %3315 = vmatprep.subr.mxu0 0.0
    %3316 = vmatpush1.msra.mxu0 0.0
    %3317 = vmatprep.subr.mxu0 0.0
    %3318 = vmatpush1.msra.mxu0 0.0
    %3319 = vmatprep.subr.mxu0 0.0
    %3320 = vmatpush1.msra.mxu0 0.0
    %3321 = vmatprep.subr.mxu0 0.0
    %3322 = vmatpush1.msra.mxu0 0.0
    %3323 = vmatprep.subr.mxu0 0.0
    %3324 = vmatpush1.msra.mxu0 0.0
    %3325 = vmatprep.subr.mxu0 0.0
    %3326 = vmatpush1.msra.mxu0 0.0
    %3327 = vmatprep.subr.mxu0 0.0
    %3328 = vmatpush1.msra.mxu0 0.0
    %3329 = vmatprep.subr.mxu0 0.0
    %3330 = vmatpush1.msra.mxu0 0.0
    %3331 = vmatprep.subr.mxu0 0.0
    %3332 = vmatpush1.msra.mxu0 0.0
    %3333 = vmatprep.subr.mxu0 0.0
    %3334 = vmatpush1.msra.mxu0 0.0
    %3335 = vmatprep.subr.mxu0 0.0
    %3336 = vmatpush1.msra.mxu0 0.0
    %3337 = vmatprep.subr.mxu0 0.0
    %3338 = vmatpush1.msra.mxu0 0.0
    %3339 = vmatprep.subr.mxu0 0.0
    %3340 = vmatpush1.msra.mxu0 0.0
    %3341 = vmatprep.subr.mxu0 0.0
    %3342 = vmatpush1.msra.mxu0 0.0
    %3343 = vmatprep.subr.mxu0 0.0
    %3344 = vmatpush1.msra.mxu0 0.0
    %3345 = vmatprep.subr.mxu0 0.0
    %3346 = vmatpush1.msra.mxu0 0.0
    %3347 = vmatprep.subr.mxu0 0.0
    %3348 = vmatpush1.msra.mxu0 0.0
    %3349 = vmatprep.subr.mxu0 0.0
    %3350 = vmatpush1.msra.mxu0 0.0
    %3351 = vmatprep.subr.mxu0 0.0
    %3352 = vmatpush1.msra.mxu0 0.0
    %3353 = vmatprep.subr.mxu0 0.0
    %3354 = vmatpush1.msra.mxu0 0.0
    %3355 = vmatprep.subr.mxu0 0.0
    %3356 = vmatpush1.msra.mxu0 0.0
    %3357 = vmatprep.subr.mxu0 0.0
    %3358 = vmatpush1.msra.mxu0 0.0
    %3359 = vmatprep.subr.mxu0 0.0
    %3360 = vmatpush1.msra.mxu0 0.0
    %3361 = vmatprep.subr.mxu0 0.0
    %3362 = vmatpush1.msra.mxu0 0.0
    %3363 = vmatprep.subr.mxu0 0.0
    %3364 = vmatpush1.msra.mxu0 0.0
    %3365 = vmatprep.subr.mxu0 0.0
    %3366 = vmatpush1.msra.mxu0 0.0
    %3367 = vmatprep.subr.mxu0 0.0
    %3368 = vmatpush1.msra.mxu0 0.0
    %3369 = vmatprep.subr.mxu0 0.0
    %3370 = vmatpush1.msra.mxu0 0.0
    %3371 = vmatprep.subr.mxu0 0.0
    %3372 = vmatpush1.msra.mxu0 0.0
    %3373 = vmatprep.mubr.f32.mxu0 0.0
    %3374 = vmatmul.mubr.f32.gmra.mrb[0].mxu0 %v304
    %v3375 = vpop.f32.mrb[0].mxu0
    %v3376 = vadd.f32 0.0, %v3375
    %v3377 = vpop.f32.mrb[0].mxu0
    %3378 = vmatprep.mubr.f32.mxu0 0.0
    %3379 = vmatmul.mubr.f32.gmra.mrb[0].mxu0 %v307
    %v3380 = vpop.f32.mrb[0].mxu0
    %v3381 = vadd.f32 0.0, %v3380
    %v3382 = vpop.f32.mrb[0].mxu0
    %3383 = vdwg.mxu0
    %v3384 = vsub.f32 %v2851, %v1718
    %v3385 = vsub.f32 %v2856, %v1719
    %v3386 = vsub.f32 %v2926, %v1720
    %v3387 = vsub.f32 %v2931, %v1721
    %v3388 = vsub.f32 %v3001, %v1722
    %v3389 = vsub.f32 %v3006, %v1723
    %v3390 = vsub.f32 %v3076, %v1724
    %v3391 = vsub.f32 %v3081, %v1725
    %v3392 = vsub.f32 %v3151, %v1726
    %v3393 = vsub.f32 %v3156, %v1727
    %v3394 = vsub.f32 %v3226, %v1728
    %v3395 = vsub.f32 %v3231, %v1729
    %v3396 = vsub.f32 %v3301, %v1730
    %v3397 = vsub.f32 %v3306, %v1731
    %v3398 = vsub.f32 %v3376, %v1732
    %v3399 = vsub.f32 %v3381, %v1733
    %v3400 = vmul.f32 %v77, %v93
    %v3401 = vmul.f32 %v78, %v94
    %v3402 = vmul.f32 %v79, %v95
    %v3403 = vmul.f32 %v80, %v96
    %v3404 = vmul.f32 %v81, %v97
    %v3405 = vmul.f32 %v82, %v98
    %v3406 = vmul.f32 %v83, %v99
    %v3407 = vmul.f32 %v84, %v100
    %v3408 = vmul.f32 %v85, %v101
    %v3409 = vmul.f32 %v86, %v102
    %v3410 = vmul.f32 %v87, %v103
    %v3411 = vmul.f32 %v88, %v104
    %v3412 = vmul.f32 %v89, %v105
    %v3413 = vmul.f32 %v90, %v106
    %v3414 = vmul.f32 %v91, %v107
    %v3415 = vmul.f32 %v92, %v108
    %v3417 = vsel %vm109, %v3400, 0
    %v3420 = vsel %vm109, %v3401, 0
    %v3423 = vsel %vm109, %v3402, 0
    %v3426 = vsel %vm109, %v3403, 0
    %v3429 = vsel %vm109, %v3404, 0
    %v3432 = vsel %vm109, %v3405, 0
    %v3435 = vsel %vm109, %v3406, 0
    %v3438 = vsel %vm109, %v3407, 0
    %v3441 = vsel %vm109, %v3408, 0
    %v3444 = vsel %vm109, %v3409, 0
    %v3447 = vsel %vm109, %v3410, 0
    %v3450 = vsel %vm109, %v3411, 0
    %v3453 = vsel %vm109, %v3412, 0
    %v3456 = vsel %vm109, %v3413, 0
    %v3459 = vsel %vm109, %v3414, 0
    %v3462 = vsel %vm109, %v3415, 0
    %3464 = vmatprep.subr.mxu0 0.0
    %3465 = vmatpush1.msra.mxu0 %v75
    %3466 = vmatprep.subr.mxu0 0.0
    %3467 = vmatpush1.msra.mxu0 %v76
    %3468 = vmatprep.subr.mxu0 0.0
    %3469 = vmatpush1.msra.mxu0 0.0
    %3470 = vmatprep.subr.mxu0 0.0
    %3471 = vmatpush1.msra.mxu0 0.0
    %3472 = vmatprep.subr.mxu0 0.0
    %3473 = vmatpush1.msra.mxu0 0.0
    %3474 = vmatprep.subr.mxu0 0.0
    %3475 = vmatpush1.msra.mxu0 0.0
    %3476 = vmatprep.subr.mxu0 0.0
    %3477 = vmatpush1.msra.mxu0 0.0
    %3478 = vmatprep.subr.mxu0 0.0
    %3479 = vmatpush1.msra.mxu0 0.0
    %3480 = vmatprep.subr.mxu0 0.0
    %3481 = vmatpush1.msra.mxu0 0.0
    %3482 = vmatprep.subr.mxu0 0.0
    %3483 = vmatpush1.msra.mxu0 0.0
    %3484 = vmatprep.subr.mxu0 0.0
    %3485 = vmatpush1.msra.mxu0 0.0
    %3486 = vmatprep.subr.mxu0 0.0
    %3487 = vmatpush1.msra.mxu0 0.0
    %3488 = vmatprep.subr.mxu0 0.0
    %3489 = vmatpush1.msra.mxu0 0.0
    %3490 = vmatprep.subr.mxu0 0.0
    %3491 = vmatpush1.msra.mxu0 0.0
    %3492 = vmatprep.subr.mxu0 0.0
    %3493 = vmatpush1.msra.mxu0 0.0
    %3494 = vmatprep.subr.mxu0 0.0
    %3495 = vmatpush1.msra.mxu0 0.0
    %3496 = vmatprep.subr.mxu0 0.0
    %3497 = vmatpush1.msra.mxu0 0.0
    %3498 = vmatprep.subr.mxu0 0.0
    %3499 = vmatpush1.msra.mxu0 0.0
    %3500 = vmatprep.subr.mxu0 0.0
    %3501 = vmatpush1.msra.mxu0 0.0
    %3502 = vmatprep.subr.mxu0 0.0
    %3503 = vmatpush1.msra.mxu0 0.0
    %3504 = vmatprep.subr.mxu0 0.0
    %3505 = vmatpush1.msra.mxu0 0.0
    %3506 = vmatprep.subr.mxu0 0.0
    %3507 = vmatpush1.msra.mxu0 0.0
    %3508 = vmatprep.subr.mxu0 0.0
    %3509 = vmatpush1.msra.mxu0 0.0
    %3510 = vmatprep.subr.mxu0 0.0
    %3511 = vmatpush1.msra.mxu0 0.0
    %3512 = vmatprep.subr.mxu0 0.0
    %3513 = vmatpush1.msra.mxu0 0.0
    %3514 = vmatprep.subr.mxu0 0.0
    %3515 = vmatpush1.msra.mxu0 0.0
    %3516 = vmatprep.subr.mxu0 0.0
    %3517 = vmatpush1.msra.mxu0 0.0
    %3518 = vmatprep.subr.mxu0 0.0
    %3519 = vmatpush1.msra.mxu0 0.0
    %3520 = vmatprep.subr.mxu0 0.0
    %3521 = vmatpush1.msra.mxu0 0.0
    %3522 = vmatprep.subr.mxu0 0.0
    %3523 = vmatpush1.msra.mxu0 0.0
    %3524 = vmatprep.subr.mxu0 0.0
    %3525 = vmatpush1.msra.mxu0 0.0
    %3526 = vmatprep.subr.mxu0 0.0
    %3527 = vmatpush1.msra.mxu0 0.0
    %3528 = vmatprep.mubr.f32.mxu0 0.0
    %3529 = vmatmul.mubr.f32.gmra.mrb[0].mxu0 %v3417
    %v3530 = vpop.f32.mrb[0].mxu0
    %v3531 = vadd.f32 0.0, %v3530
    %v3532 = vpop.f32.mrb[0].mxu0
    %3533 = vmatprep.mubr.f32.mxu0 0.0
    %3534 = vmatmul.mubr.f32.gmra.mrb[0].mxu0 %v3420
    %v3535 = vpop.f32.mrb[0].mxu0
    %v3536 = vadd.f32 0.0, %v3535
    %v3537 = vpop.f32.mrb[0].mxu0
    %3538 = vmatprep.mubr.f32.mxu0 0.0
    %3539 = vmatmul.mubr.f32.gmra.mrb[0].mxu0 %v3423
    %v3540 = vpop.f32.mrb[0].mxu0
    %v3541 = vadd.f32 0.0, %v3540
    %v3542 = vpop.f32.mrb[0].mxu0
    %3543 = vmatprep.mubr.f32.mxu0 0.0
    %3544 = vmatmul.mubr.f32.gmra.mrb[0].mxu0 %v3426
    %v3545 = vpop.f32.mrb[0].mxu0
    %v3546 = vadd.f32 0.0, %v3545
    %v3547 = vpop.f32.mrb[0].mxu0
    %3548 = vmatprep.mubr.f32.mxu0 0.0
    %3549 = vmatmul.mubr.f32.gmra.mrb[0].mxu0 %v3429
    %v3550 = vpop.f32.mrb[0].mxu0
    %v3551 = vadd.f32 0.0, %v3550
    %v3552 = vpop.f32.mrb[0].mxu0
    %3553 = vmatprep.mubr.f32.mxu0 0.0
    %3554 = vmatmul.mubr.f32.gmra.mrb[0].mxu0 %v3432
    %v3555 = vpop.f32.mrb[0].mxu0
    %v3556 = vadd.f32 0.0, %v3555
    %v3557 = vpop.f32.mrb[0].mxu0
    %3558 = vmatprep.mubr.f32.mxu0 0.0
    %3559 = vmatmul.mubr.f32.gmra.mrb[0].mxu0 %v3435
    %v3560 = vpop.f32.mrb[0].mxu0
    %v3561 = vadd.f32 0.0, %v3560
    %v3562 = vpop.f32.mrb[0].mxu0
    %3563 = vmatprep.mubr.f32.mxu0 0.0
    %3564 = vmatmul.mubr.f32.gmra.mrb[0].mxu0 %v3438
    %v3565 = vpop.f32.mrb[0].mxu0
    %v3566 = vadd.f32 0.0, %v3565
    %v3567 = vpop.f32.mrb[0].mxu0
    %3568 = vmatprep.mubr.f32.mxu0 0.0
    %3569 = vmatmul.mubr.f32.gmra.mrb[0].mxu0 %v3441
    %v3570 = vpop.f32.mrb[0].mxu0
    %v3571 = vadd.f32 0.0, %v3570
    %v3572 = vpop.f32.mrb[0].mxu0
    %3573 = vmatprep.mubr.f32.mxu0 0.0
    %3574 = vmatmul.mubr.f32.gmra.mrb[0].mxu0 %v3444
    %v3575 = vpop.f32.mrb[0].mxu0
    %v3576 = vadd.f32 0.0, %v3575
    %v3577 = vpop.f32.mrb[0].mxu0
    %3578 = vmatprep.mubr.f32.mxu0 0.0
    %3579 = vmatmul.mubr.f32.gmra.mrb[0].mxu0 %v3447
    %v3580 = vpop.f32.mrb[0].mxu0
    %v3581 = vadd.f32 0.0, %v3580
    %v3582 = vpop.f32.mrb[0].mxu0
    %3583 = vmatprep.mubr.f32.mxu0 0.0
    %3584 = vmatmul.mubr.f32.gmra.mrb[0].mxu0 %v3450
    %v3585 = vpop.f32.mrb[0].mxu0
    %v3586 = vadd.f32 0.0, %v3585
    %v3587 = vpop.f32.mrb[0].mxu0
    %3588 = vmatprep.mubr.f32.mxu0 0.0
    %3589 = vmatmul.mubr.f32.gmra.mrb[0].mxu0 %v3453
    %v3590 = vpop.f32.mrb[0].mxu0
    %v3591 = vadd.f32 0.0, %v3590
    %v3592 = vpop.f32.mrb[0].mxu0
    %3593 = vmatprep.mubr.f32.mxu0 0.0
    %3594 = vmatmul.mubr.f32.gmra.mrb[0].mxu0 %v3456
    %v3595 = vpop.f32.mrb[0].mxu0
    %v3596 = vadd.f32 0.0, %v3595
    %v3597 = vpop.f32.mrb[0].mxu0
    %3598 = vmatprep.mubr.f32.mxu0 0.0
    %3599 = vmatmul.mubr.f32.gmra.mrb[0].mxu0 %v3459
    %v3600 = vpop.f32.mrb[0].mxu0
    %v3601 = vadd.f32 0.0, %v3600
    %v3602 = vpop.f32.mrb[0].mxu0
    %3603 = vmatprep.mubr.f32.mxu0 0.0
    %3604 = vmatmul.mubr.f32.gmra.mrb[0].mxu0 %v3462
    %v3605 = vpop.f32.mrb[0].mxu0
    %v3606 = vadd.f32 0.0, %v3605
    %v3607 = vpop.f32.mrb[0].mxu0
    %3608 = vdwg.mxu0
    %3609 = vmatprep.subr.mxu0 0.0
    %3610 = vmatpush1.msra.mxu0 %v3531
    %3611 = vmatprep.subr.mxu0 0.0
    %3612 = vmatpush1.msra.mxu0 %v3536
    %3613 = vmatprep.subr.mxu0 0.0
    %3614 = vmatpush1.msra.mxu0 0.0
    %3615 = vmatprep.subr.mxu0 0.0
    %3616 = vmatpush1.msra.mxu0 0.0
    %3617 = vmatprep.subr.mxu0 0.0
    %3618 = vmatpush1.msra.mxu0 0.0
    %3619 = vmatprep.subr.mxu0 0.0
    %3620 = vmatpush1.msra.mxu0 0.0
    %3621 = vmatprep.subr.mxu0 0.0
    %3622 = vmatpush1.msra.mxu0 0.0
    %3623 = vmatprep.subr.mxu0 0.0
    %3624 = vmatpush1.msra.mxu0 0.0
    %3625 = vmatprep.subr.mxu0 0.0
    %3626 = vmatpush1.msra.mxu0 0.0
    %3627 = vmatprep.subr.mxu0 0.0
    %3628 = vmatpush1.msra.mxu0 0.0
    %3629 = vmatprep.subr.mxu0 0.0
    %3630 = vmatpush1.msra.mxu0 0.0
    %3631 = vmatprep.subr.mxu0 0.0
    %3632 = vmatpush1.msra.mxu0 0.0
    %3633 = vmatprep.subr.mxu0 0.0
    %3634 = vmatpush1.msra.mxu0 0.0
    %3635 = vmatprep.subr.mxu0 0.0
    %3636 = vmatpush1.msra.mxu0 0.0
    %3637 = vmatprep.subr.mxu0 0.0
    %3638 = vmatpush1.msra.mxu0 0.0
    %3639 = vmatprep.subr.mxu0 0.0
    %3640 = vmatpush1.msra.mxu0 0.0
    %3641 = vmatprep.subr.mxu0 0.0
    %3642 = vmatpush1.msra.mxu0 0.0
    %3643 = vmatprep.subr.mxu0 0.0
    %3644 = vmatpush1.msra.mxu0 0.0
    %3645 = vmatprep.subr.mxu0 0.0
    %3646 = vmatpush1.msra.mxu0 0.0
    %3647 = vmatprep.subr.mxu0 0.0
    %3648 = vmatpush1.msra.mxu0 0.0
    %3649 = vmatprep.subr.mxu0 0.0
    %3650 = vmatpush1.msra.mxu0 0.0
    %3651 = vmatprep.subr.mxu0 0.0
    %3652 = vmatpush1.msra.mxu0 0.0
    %3653 = vmatprep.subr.mxu0 0.0
    %3654 = vmatpush1.msra.mxu0 0.0
    %3655 = vmatprep.subr.mxu0 0.0
    %3656 = vmatpush1.msra.mxu0 0.0
    %3657 = vmatprep.subr.mxu0 0.0
    %3658 = vmatpush1.msra.mxu0 0.0
    %3659 = vmatprep.subr.mxu0 0.0
    %3660 = vmatpush1.msra.mxu0 0.0
    %3661 = vmatprep.subr.mxu0 0.0
    %3662 = vmatpush1.msra.mxu0 0.0
    %3663 = vmatprep.subr.mxu0 0.0
    %3664 = vmatpush1.msra.mxu0 0.0
    %3665 = vmatprep.subr.mxu0 0.0
    %3666 = vmatpush1.msra.mxu0 0.0
    %3667 = vmatprep.subr.mxu0 0.0
    %3668 = vmatpush1.msra.mxu0 0.0
    %3669 = vmatprep.subr.mxu0 0.0
    %3670 = vmatpush1.msra.mxu0 0.0
    %3671 = vmatprep.subr.mxu0 0.0
    %3672 = vmatpush1.msra.mxu0 0.0
    %3673 = vmatprep.mubr.f32.mxu0 0.0
    %3674 = vmatmul.mubr.f32.gmra.mrb[0].mxu0 %v304
    %v3675 = vpop.f32.mrb[0].mxu0
    %v3676 = vadd.f32 0.0, %v3675
    %v3677 = vpop.f32.mrb[0].mxu0
    %3678 = vmatprep.mubr.f32.mxu0 0.0
    %3679 = vmatmul.mubr.f32.gmra.mrb[0].mxu0 %v307
    %v3680 = vpop.f32.mrb[0].mxu0
    %v3681 = vadd.f32 0.0, %v3680
    %v3682 = vpop.f32.mrb[0].mxu0
    %3683 = vdwg.mxu0
    %3684 = vmatprep.subr.mxu0 0.0
    %3685 = vmatpush1.msra.mxu0 %v3541
    %3686 = vmatprep.subr.mxu0 0.0
    %3687 = vmatpush1.msra.mxu0 %v3546
    %3688 = vmatprep.subr.mxu0 0.0
    %3689 = vmatpush1.msra.mxu0 0.0
    %3690 = vmatprep.subr.mxu0 0.0
    %3691 = vmatpush1.msra.mxu0 0.0
    %3692 = vmatprep.subr.mxu0 0.0
    %3693 = vmatpush1.msra.mxu0 0.0
    %3694 = vmatprep.subr.mxu0 0.0
    %3695 = vmatpush1.msra.mxu0 0.0
    %3696 = vmatprep.subr.mxu0 0.0
    %3697 = vmatpush1.msra.mxu0 0.0
    %3698 = vmatprep.subr.mxu0 0.0
    %3699 = vmatpush1.msra.mxu0 0.0
    %3700 = vmatprep.subr.mxu0 0.0
    %3701 = vmatpush1.msra.mxu0 0.0
    %3702 = vmatprep.subr.mxu0 0.0
    %3703 = vmatpush1.msra.mxu0 0.0
    %3704 = vmatprep.subr.mxu0 0.0
    %3705 = vmatpush1.msra.mxu0 0.0
    %3706 = vmatprep.subr.mxu0 0.0
    %3707 = vmatpush1.msra.mxu0 0.0
    %3708 = vmatprep.subr.mxu0 0.0
    %3709 = vmatpush1.msra.mxu0 0.0
    %3710 = vmatprep.subr.mxu0 0.0
    %3711 = vmatpush1.msra.mxu0 0.0
    %3712 = vmatprep.subr.mxu0 0.0
    %3713 = vmatpush1.msra.mxu0 0.0
    %3714 = vmatprep.subr.mxu0 0.0
    %3715 = vmatpush1.msra.mxu0 0.0
    %3716 = vmatprep.subr.mxu0 0.0
    %3717 = vmatpush1.msra.mxu0 0.0
    %3718 = vmatprep.subr.mxu0 0.0
    %3719 = vmatpush1.msra.mxu0 0.0
    %3720 = vmatprep.subr.mxu0 0.0
    %3721 = vmatpush1.msra.mxu0 0.0
    %3722 = vmatprep.subr.mxu0 0.0
    %3723 = vmatpush1.msra.mxu0 0.0
    %3724 = vmatprep.subr.mxu0 0.0
    %3725 = vmatpush1.msra.mxu0 0.0
    %3726 = vmatprep.subr.mxu0 0.0
    %3727 = vmatpush1.msra.mxu0 0.0
    %3728 = vmatprep.subr.mxu0 0.0
    %3729 = vmatpush1.msra.mxu0 0.0
    %3730 = vmatprep.subr.mxu0 0.0
    %3731 = vmatpush1.msra.mxu0 0.0
    %3732 = vmatprep.subr.mxu0 0.0
    %3733 = vmatpush1.msra.mxu0 0.0
    %3734 = vmatprep.subr.mxu0 0.0
    %3735 = vmatpush1.msra.mxu0 0.0
    %3736 = vmatprep.subr.mxu0 0.0
    %3737 = vmatpush1.msra.mxu0 0.0
    %3738 = vmatprep.subr.mxu0 0.0
    %3739 = vmatpush1.msra.mxu0 0.0
    %3740 = vmatprep.subr.mxu0 0.0
    %3741 = vmatpush1.msra.mxu0 0.0
    %3742 = vmatprep.subr.mxu0 0.0
    %3743 = vmatpush1.msra.mxu0 0.0
    %3744 = vmatprep.subr.mxu0 0.0
    %3745 = vmatpush1.msra.mxu0 0.0
    %3746 = vmatprep.subr.mxu0 0.0
    %3747 = vmatpush1.msra.mxu0 0.0
    %3748 = vmatprep.mubr.f32.mxu0 0.0
    %3749 = vmatmul.mubr.f32.gmra.mrb[0].mxu0 %v304
    %v3750 = vpop.f32.mrb[0].mxu0
    %v3751 = vadd.f32 0.0, %v3750
    %v3752 = vpop.f32.mrb[0].mxu0
    %3753 = vmatprep.mubr.f32.mxu0 0.0
    %3754 = vmatmul.mubr.f32.gmra.mrb[0].mxu0 %v307
    %v3755 = vpop.f32.mrb[0].mxu0
    %v3756 = vadd.f32 0.0, %v3755
    %v3757 = vpop.f32.mrb[0].mxu0
    %3758 = vdwg.mxu0
    %3759 = vmatprep.subr.mxu0 0.0
    %3760 = vmatpush1.msra.mxu0 %v3551
    %3761 = vmatprep.subr.mxu0 0.0
    %3762 = vmatpush1.msra.mxu0 %v3556
    %3763 = vmatprep.subr.mxu0 0.0
    %3764 = vmatpush1.msra.mxu0 0.0
    %3765 = vmatprep.subr.mxu0 0.0
    %3766 = vmatpush1.msra.mxu0 0.0
    %3767 = vmatprep.subr.mxu0 0.0
    %3768 = vmatpush1.msra.mxu0 0.0
    %3769 = vmatprep.subr.mxu0 0.0
    %3770 = vmatpush1.msra.mxu0 0.0
    %3771 = vmatprep.subr.mxu0 0.0
    %3772 = vmatpush1.msra.mxu0 0.0
    %3773 = vmatprep.subr.mxu0 0.0
    %3774 = vmatpush1.msra.mxu0 0.0
    %3775 = vmatprep.subr.mxu0 0.0
    %3776 = vmatpush1.msra.mxu0 0.0
    %3777 = vmatprep.subr.mxu0 0.0
    %3778 = vmatpush1.msra.mxu0 0.0
    %3779 = vmatprep.subr.mxu0 0.0
    %3780 = vmatpush1.msra.mxu0 0.0
    %3781 = vmatprep.subr.mxu0 0.0
    %3782 = vmatpush1.msra.mxu0 0.0
    %3783 = vmatprep.subr.mxu0 0.0
    %3784 = vmatpush1.msra.mxu0 0.0
    %3785 = vmatprep.subr.mxu0 0.0
    %3786 = vmatpush1.msra.mxu0 0.0
    %3787 = vmatprep.subr.mxu0 0.0
    %3788 = vmatpush1.msra.mxu0 0.0
    %3789 = vmatprep.subr.mxu0 0.0
    %3790 = vmatpush1.msra.mxu0 0.0
    %3791 = vmatprep.subr.mxu0 0.0
    %3792 = vmatpush1.msra.mxu0 0.0
    %3793 = vmatprep.subr.mxu0 0.0
    %3794 = vmatpush1.msra.mxu0 0.0
    %3795 = vmatprep.subr.mxu0 0.0
    %3796 = vmatpush1.msra.mxu0 0.0
    %3797 = vmatprep.subr.mxu0 0.0
    %3798 = vmatpush1.msra.mxu0 0.0
    %3799 = vmatprep.subr.mxu0 0.0
    %3800 = vmatpush1.msra.mxu0 0.0
    %3801 = vmatprep.subr.mxu0 0.0
    %3802 = vmatpush1.msra.mxu0 0.0
    %3803 = vmatprep.subr.mxu0 0.0
    %3804 = vmatpush1.msra.mxu0 0.0
    %3805 = vmatprep.subr.mxu0 0.0
    %3806 = vmatpush1.msra.mxu0 0.0
    %3807 = vmatprep.subr.mxu0 0.0
    %3808 = vmatpush1.msra.mxu0 0.0
    %3809 = vmatprep.subr.mxu0 0.0
    %3810 = vmatpush1.msra.mxu0 0.0
    %3811 = vmatprep.subr.mxu0 0.0
    %3812 = vmatpush1.msra.mxu0 0.0
    %3813 = vmatprep.subr.mxu0 0.0
    %3814 = vmatpush1.msra.mxu0 0.0
    %3815 = vmatprep.subr.mxu0 0.0
    %3816 = vmatpush1.msra.mxu0 0.0
    %3817 = vmatprep.subr.mxu0 0.0
    %3818 = vmatpush1.msra.mxu0 0.0
    %3819 = vmatprep.subr.mxu0 0.0
    %3820 = vmatpush1.msra.mxu0 0.0
    %3821 = vmatprep.subr.mxu0 0.0
    %3822 = vmatpush1.msra.mxu0 0.0
    %3823 = vmatprep.mubr.f32.mxu0 0.0
    %3824 = vmatmul.mubr.f32.gmra.mrb[0].mxu0 %v304
    %v3825 = vpop.f32.mrb[0].mxu0
    %v3826 = vadd.f32 0.0, %v3825
    %v3827 = vpop.f32.mrb[0].mxu0
    %3828 = vmatprep.mubr.f32.mxu0 0.0
    %3829 = vmatmul.mubr.f32.gmra.mrb[0].mxu0 %v307
    %v3830 = vpop.f32.mrb[0].mxu0
    %v3831 = vadd.f32 0.0, %v3830
    %v3832 = vpop.f32.mrb[0].mxu0
    %3833 = vdwg.mxu0
    %3834 = vmatprep.subr.mxu0 0.0
    %3835 = vmatpush1.msra.mxu0 %v3561
    %3836 = vmatprep.subr.mxu0 0.0
    %3837 = vmatpush1.msra.mxu0 %v3566
    %3838 = vmatprep.subr.mxu0 0.0
    %3839 = vmatpush1.msra.mxu0 0.0
    %3840 = vmatprep.subr.mxu0 0.0
    %3841 = vmatpush1.msra.mxu0 0.0
    %3842 = vmatprep.subr.mxu0 0.0
    %3843 = vmatpush1.msra.mxu0 0.0
    %3844 = vmatprep.subr.mxu0 0.0
    %3845 = vmatpush1.msra.mxu0 0.0
    %3846 = vmatprep.subr.mxu0 0.0
    %3847 = vmatpush1.msra.mxu0 0.0
    %3848 = vmatprep.subr.mxu0 0.0
    %3849 = vmatpush1.msra.mxu0 0.0
    %3850 = vmatprep.subr.mxu0 0.0
    %3851 = vmatpush1.msra.mxu0 0.0
    %3852 = vmatprep.subr.mxu0 0.0
    %3853 = vmatpush1.msra.mxu0 0.0
    %3854 = vmatprep.subr.mxu0 0.0
    %3855 = vmatpush1.msra.mxu0 0.0
    %3856 = vmatprep.subr.mxu0 0.0
    %3857 = vmatpush1.msra.mxu0 0.0
    %3858 = vmatprep.subr.mxu0 0.0
    %3859 = vmatpush1.msra.mxu0 0.0
    %3860 = vmatprep.subr.mxu0 0.0
    %3861 = vmatpush1.msra.mxu0 0.0
    %3862 = vmatprep.subr.mxu0 0.0
    %3863 = vmatpush1.msra.mxu0 0.0
    %3864 = vmatprep.subr.mxu0 0.0
    %3865 = vmatpush1.msra.mxu0 0.0
    %3866 = vmatprep.subr.mxu0 0.0
    %3867 = vmatpush1.msra.mxu0 0.0
    %3868 = vmatprep.subr.mxu0 0.0
    %3869 = vmatpush1.msra.mxu0 0.0
    %3870 = vmatprep.subr.mxu0 0.0
    %3871 = vmatpush1.msra.mxu0 0.0
    %3872 = vmatprep.subr.mxu0 0.0
    %3873 = vmatpush1.msra.mxu0 0.0
    %3874 = vmatprep.subr.mxu0 0.0
    %3875 = vmatpush1.msra.mxu0 0.0
    %3876 = vmatprep.subr.mxu0 0.0
    %3877 = vmatpush1.msra.mxu0 0.0
    %3878 = vmatprep.subr.mxu0 0.0
    %3879 = vmatpush1.msra.mxu0 0.0
    %3880 = vmatprep.subr.mxu0 0.0
    %3881 = vmatpush1.msra.mxu0 0.0
    %3882 = vmatprep.subr.mxu0 0.0
    %3883 = vmatpush1.msra.mxu0 0.0
    %3884 = vmatprep.subr.mxu0 0.0
    %3885 = vmatpush1.msra.mxu0 0.0
    %3886 = vmatprep.subr.mxu0 0.0
    %3887 = vmatpush1.msra.mxu0 0.0
    %3888 = vmatprep.subr.mxu0 0.0
    %3889 = vmatpush1.msra.mxu0 0.0
    %3890 = vmatprep.subr.mxu0 0.0
    %3891 = vmatpush1.msra.mxu0 0.0
    %3892 = vmatprep.subr.mxu0 0.0
    %3893 = vmatpush1.msra.mxu0 0.0
    %3894 = vmatprep.subr.mxu0 0.0
    %3895 = vmatpush1.msra.mxu0 0.0
    %3896 = vmatprep.subr.mxu0 0.0
    %3897 = vmatpush1.msra.mxu0 0.0
    %3898 = vmatprep.mubr.f32.mxu0 0.0
    %3899 = vmatmul.mubr.f32.gmra.mrb[0].mxu0 %v304
    %v3900 = vpop.f32.mrb[0].mxu0
    %v3901 = vadd.f32 0.0, %v3900
    %v3902 = vpop.f32.mrb[0].mxu0
    %3903 = vmatprep.mubr.f32.mxu0 0.0
    %3904 = vmatmul.mubr.f32.gmra.mrb[0].mxu0 %v307
    %v3905 = vpop.f32.mrb[0].mxu0
    %v3906 = vadd.f32 0.0, %v3905
    %v3907 = vpop.f32.mrb[0].mxu0
    %3908 = vdwg.mxu0
    %3909 = vmatprep.subr.mxu0 0.0
    %3910 = vmatpush1.msra.mxu0 %v3571
    %3911 = vmatprep.subr.mxu0 0.0
    %3912 = vmatpush1.msra.mxu0 %v3576
    %3913 = vmatprep.subr.mxu0 0.0
    %3914 = vmatpush1.msra.mxu0 0.0
    %3915 = vmatprep.subr.mxu0 0.0
    %3916 = vmatpush1.msra.mxu0 0.0
    %3917 = vmatprep.subr.mxu0 0.0
    %3918 = vmatpush1.msra.mxu0 0.0
    %3919 = vmatprep.subr.mxu0 0.0
    %3920 = vmatpush1.msra.mxu0 0.0
    %3921 = vmatprep.subr.mxu0 0.0
    %3922 = vmatpush1.msra.mxu0 0.0
    %3923 = vmatprep.subr.mxu0 0.0
    %3924 = vmatpush1.msra.mxu0 0.0
    %3925 = vmatprep.subr.mxu0 0.0
    %3926 = vmatpush1.msra.mxu0 0.0
    %3927 = vmatprep.subr.mxu0 0.0
    %3928 = vmatpush1.msra.mxu0 0.0
    %3929 = vmatprep.subr.mxu0 0.0
    %3930 = vmatpush1.msra.mxu0 0.0
    %3931 = vmatprep.subr.mxu0 0.0
    %3932 = vmatpush1.msra.mxu0 0.0
    %3933 = vmatprep.subr.mxu0 0.0
    %3934 = vmatpush1.msra.mxu0 0.0
    %3935 = vmatprep.subr.mxu0 0.0
    %3936 = vmatpush1.msra.mxu0 0.0
    %3937 = vmatprep.subr.mxu0 0.0
    %3938 = vmatpush1.msra.mxu0 0.0
    %3939 = vmatprep.subr.mxu0 0.0
    %3940 = vmatpush1.msra.mxu0 0.0
    %3941 = vmatprep.subr.mxu0 0.0
    %3942 = vmatpush1.msra.mxu0 0.0
    %3943 = vmatprep.subr.mxu0 0.0
    %3944 = vmatpush1.msra.mxu0 0.0
    %3945 = vmatprep.subr.mxu0 0.0
    %3946 = vmatpush1.msra.mxu0 0.0
    %3947 = vmatprep.subr.mxu0 0.0
    %3948 = vmatpush1.msra.mxu0 0.0
    %3949 = vmatprep.subr.mxu0 0.0
    %3950 = vmatpush1.msra.mxu0 0.0
    %3951 = vmatprep.subr.mxu0 0.0
    %3952 = vmatpush1.msra.mxu0 0.0
    %3953 = vmatprep.subr.mxu0 0.0
    %3954 = vmatpush1.msra.mxu0 0.0
    %3955 = vmatprep.subr.mxu0 0.0
    %3956 = vmatpush1.msra.mxu0 0.0
    %3957 = vmatprep.subr.mxu0 0.0
    %3958 = vmatpush1.msra.mxu0 0.0
    %3959 = vmatprep.subr.mxu0 0.0
    %3960 = vmatpush1.msra.mxu0 0.0
    %3961 = vmatprep.subr.mxu0 0.0
    %3962 = vmatpush1.msra.mxu0 0.0
    %3963 = vmatprep.subr.mxu0 0.0
    %3964 = vmatpush1.msra.mxu0 0.0
    %3965 = vmatprep.subr.mxu0 0.0
    %3966 = vmatpush1.msra.mxu0 0.0
    %3967 = vmatprep.subr.mxu0 0.0
    %3968 = vmatpush1.msra.mxu0 0.0
    %3969 = vmatprep.subr.mxu0 0.0
    %3970 = vmatpush1.msra.mxu0 0.0
    %3971 = vmatprep.subr.mxu0 0.0
    %3972 = vmatpush1.msra.mxu0 0.0
    %3973 = vmatprep.mubr.f32.mxu0 0.0
    %3974 = vmatmul.mubr.f32.gmra.mrb[0].mxu0 %v304
    %v3975 = vpop.f32.mrb[0].mxu0
    %v3976 = vadd.f32 0.0, %v3975
    %v3977 = vpop.f32.mrb[0].mxu0
    %3978 = vmatprep.mubr.f32.mxu0 0.0
    %3979 = vmatmul.mubr.f32.gmra.mrb[0].mxu0 %v307
    %v3980 = vpop.f32.mrb[0].mxu0
    %v3981 = vadd.f32 0.0, %v3980
    %v3982 = vpop.f32.mrb[0].mxu0
    %3983 = vdwg.mxu0
    %3984 = vmatprep.subr.mxu0 0.0
    %3985 = vmatpush1.msra.mxu0 %v3581
    %3986 = vmatprep.subr.mxu0 0.0
    %3987 = vmatpush1.msra.mxu0 %v3586
    %3988 = vmatprep.subr.mxu0 0.0
    %3989 = vmatpush1.msra.mxu0 0.0
    %3990 = vmatprep.subr.mxu0 0.0
    %3991 = vmatpush1.msra.mxu0 0.0
    %3992 = vmatprep.subr.mxu0 0.0
    %3993 = vmatpush1.msra.mxu0 0.0
    %3994 = vmatprep.subr.mxu0 0.0
    %3995 = vmatpush1.msra.mxu0 0.0
    %3996 = vmatprep.subr.mxu0 0.0
    %3997 = vmatpush1.msra.mxu0 0.0
    %3998 = vmatprep.subr.mxu0 0.0
    %3999 = vmatpush1.msra.mxu0 0.0
    %4000 = vmatprep.subr.mxu0 0.0
    %4001 = vmatpush1.msra.mxu0 0.0
    %4002 = vmatprep.subr.mxu0 0.0
    %4003 = vmatpush1.msra.mxu0 0.0
    %4004 = vmatprep.subr.mxu0 0.0
    %4005 = vmatpush1.msra.mxu0 0.0
    %4006 = vmatprep.subr.mxu0 0.0
    %4007 = vmatpush1.msra.mxu0 0.0
    %4008 = vmatprep.subr.mxu0 0.0
    %4009 = vmatpush1.msra.mxu0 0.0
    %4010 = vmatprep.subr.mxu0 0.0
    %4011 = vmatpush1.msra.mxu0 0.0
    %4012 = vmatprep.subr.mxu0 0.0
    %4013 = vmatpush1.msra.mxu0 0.0
    %4014 = vmatprep.subr.mxu0 0.0
    %4015 = vmatpush1.msra.mxu0 0.0
    %4016 = vmatprep.subr.mxu0 0.0
    %4017 = vmatpush1.msra.mxu0 0.0
    %4018 = vmatprep.subr.mxu0 0.0
    %4019 = vmatpush1.msra.mxu0 0.0
    %4020 = vmatprep.subr.mxu0 0.0
    %4021 = vmatpush1.msra.mxu0 0.0
    %4022 = vmatprep.subr.mxu0 0.0
    %4023 = vmatpush1.msra.mxu0 0.0
    %4024 = vmatprep.subr.mxu0 0.0
    %4025 = vmatpush1.msra.mxu0 0.0
    %4026 = vmatprep.subr.mxu0 0.0
    %4027 = vmatpush1.msra.mxu0 0.0
    %4028 = vmatprep.subr.mxu0 0.0
    %4029 = vmatpush1.msra.mxu0 0.0
    %4030 = vmatprep.subr.mxu0 0.0
    %4031 = vmatpush1.msra.mxu0 0.0
    %4032 = vmatprep.subr.mxu0 0.0
    %4033 = vmatpush1.msra.mxu0 0.0
    %4034 = vmatprep.subr.mxu0 0.0
    %4035 = vmatpush1.msra.mxu0 0.0
    %4036 = vmatprep.subr.mxu0 0.0
    %4037 = vmatpush1.msra.mxu0 0.0
    %4038 = vmatprep.subr.mxu0 0.0
    %4039 = vmatpush1.msra.mxu0 0.0
    %4040 = vmatprep.subr.mxu0 0.0
    %4041 = vmatpush1.msra.mxu0 0.0
    %4042 = vmatprep.subr.mxu0 0.0
    %4043 = vmatpush1.msra.mxu0 0.0
    %4044 = vmatprep.subr.mxu0 0.0
    %4045 = vmatpush1.msra.mxu0 0.0
    %4046 = vmatprep.subr.mxu0 0.0
    %4047 = vmatpush1.msra.mxu0 0.0
    %4048 = vmatprep.mubr.f32.mxu0 0.0
    %4049 = vmatmul.mubr.f32.gmra.mrb[0].mxu0 %v304
    %v4050 = vpop.f32.mrb[0].mxu0
    %v4051 = vadd.f32 0.0, %v4050
    %v4052 = vpop.f32.mrb[0].mxu0
    %4053 = vmatprep.mubr.f32.mxu0 0.0
    %4054 = vmatmul.mubr.f32.gmra.mrb[0].mxu0 %v307
    %v4055 = vpop.f32.mrb[0].mxu0
    %v4056 = vadd.f32 0.0, %v4055
    %v4057 = vpop.f32.mrb[0].mxu0
    %4058 = vdwg.mxu0
    %4059 = vmatprep.subr.mxu0 0.0
    %4060 = vmatpush1.msra.mxu0 %v3591
    %4061 = vmatprep.subr.mxu0 0.0
    %4062 = vmatpush1.msra.mxu0 %v3596
    %4063 = vmatprep.subr.mxu0 0.0
    %4064 = vmatpush1.msra.mxu0 0.0
    %4065 = vmatprep.subr.mxu0 0.0
    %4066 = vmatpush1.msra.mxu0 0.0
    %4067 = vmatprep.subr.mxu0 0.0
    %4068 = vmatpush1.msra.mxu0 0.0
    %4069 = vmatprep.subr.mxu0 0.0
    %4070 = vmatpush1.msra.mxu0 0.0
    %4071 = vmatprep.subr.mxu0 0.0
    %4072 = vmatpush1.msra.mxu0 0.0
    %4073 = vmatprep.subr.mxu0 0.0
    %4074 = vmatpush1.msra.mxu0 0.0
    %4075 = vmatprep.subr.mxu0 0.0
    %4076 = vmatpush1.msra.mxu0 0.0
    %4077 = vmatprep.subr.mxu0 0.0
    %4078 = vmatpush1.msra.mxu0 0.0
    %4079 = vmatprep.subr.mxu0 0.0
    %4080 = vmatpush1.msra.mxu0 0.0
    %4081 = vmatprep.subr.mxu0 0.0
    %4082 = vmatpush1.msra.mxu0 0.0
    %4083 = vmatprep.subr.mxu0 0.0
    %4084 = vmatpush1.msra.mxu0 0.0
    %4085 = vmatprep.subr.mxu0 0.0
    %4086 = vmatpush1.msra.mxu0 0.0
    %4087 = vmatprep.subr.mxu0 0.0
    %4088 = vmatpush1.msra.mxu0 0.0
    %4089 = vmatprep.subr.mxu0 0.0
    %4090 = vmatpush1.msra.mxu0 0.0
    %4091 = vmatprep.subr.mxu0 0.0
    %4092 = vmatpush1.msra.mxu0 0.0
    %4093 = vmatprep.subr.mxu0 0.0
    %4094 = vmatpush1.msra.mxu0 0.0
    %4095 = vmatprep.subr.mxu0 0.0
    %4096 = vmatpush1.msra.mxu0 0.0
    %4097 = vmatprep.subr.mxu0 0.0
    %4098 = vmatpush1.msra.mxu0 0.0
    %4099 = vmatprep.subr.mxu0 0.0
    %4100 = vmatpush1.msra.mxu0 0.0
    %4101 = vmatprep.subr.mxu0 0.0
    %4102 = vmatpush1.msra.mxu0 0.0
    %4103 = vmatprep.subr.mxu0 0.0
    %4104 = vmatpush1.msra.mxu0 0.0
    %4105 = vmatprep.subr.mxu0 0.0
    %4106 = vmatpush1.msra.mxu0 0.0
    %4107 = vmatprep.subr.mxu0 0.0
    %4108 = vmatpush1.msra.mxu0 0.0
    %4109 = vmatprep.subr.mxu0 0.0
    %4110 = vmatpush1.msra.mxu0 0.0
    %4111 = vmatprep.subr.mxu0 0.0
    %4112 = vmatpush1.msra.mxu0 0.0
    %4113 = vmatprep.subr.mxu0 0.0
    %4114 = vmatpush1.msra.mxu0 0.0
    %4115 = vmatprep.subr.mxu0 0.0
    %4116 = vmatpush1.msra.mxu0 0.0
    %4117 = vmatprep.subr.mxu0 0.0
    %4118 = vmatpush1.msra.mxu0 0.0
    %4119 = vmatprep.subr.mxu0 0.0
    %4120 = vmatpush1.msra.mxu0 0.0
    %4121 = vmatprep.subr.mxu0 0.0
    %4122 = vmatpush1.msra.mxu0 0.0
    %4123 = vmatprep.mubr.f32.mxu0 0.0
    %4124 = vmatmul.mubr.f32.gmra.mrb[0].mxu0 %v304
    %v4125 = vpop.f32.mrb[0].mxu0
    %v4126 = vadd.f32 0.0, %v4125
    %v4127 = vpop.f32.mrb[0].mxu0
    %4128 = vmatprep.mubr.f32.mxu0 0.0
    %4129 = vmatmul.mubr.f32.gmra.mrb[0].mxu0 %v307
    %v4130 = vpop.f32.mrb[0].mxu0
    %v4131 = vadd.f32 0.0, %v4130
    %v4132 = vpop.f32.mrb[0].mxu0
    %4133 = vdwg.mxu0
    %4134 = vmatprep.subr.mxu0 0.0
    %4135 = vmatpush1.msra.mxu0 %v3601
    %4136 = vmatprep.subr.mxu0 0.0
    %4137 = vmatpush1.msra.mxu0 %v3606
    %4138 = vmatprep.subr.mxu0 0.0
    %4139 = vmatpush1.msra.mxu0 0.0
    %4140 = vmatprep.subr.mxu0 0.0
    %4141 = vmatpush1.msra.mxu0 0.0
    %4142 = vmatprep.subr.mxu0 0.0
    %4143 = vmatpush1.msra.mxu0 0.0
    %4144 = vmatprep.subr.mxu0 0.0
    %4145 = vmatpush1.msra.mxu0 0.0
    %4146 = vmatprep.subr.mxu0 0.0
    %4147 = vmatpush1.msra.mxu0 0.0
    %4148 = vmatprep.subr.mxu0 0.0
    %4149 = vmatpush1.msra.mxu0 0.0
    %4150 = vmatprep.subr.mxu0 0.0
    %4151 = vmatpush1.msra.mxu0 0.0
    %4152 = vmatprep.subr.mxu0 0.0
    %4153 = vmatpush1.msra.mxu0 0.0
    %4154 = vmatprep.subr.mxu0 0.0
    %4155 = vmatpush1.msra.mxu0 0.0
    %4156 = vmatprep.subr.mxu0 0.0
    %4157 = vmatpush1.msra.mxu0 0.0
    %4158 = vmatprep.subr.mxu0 0.0
    %4159 = vmatpush1.msra.mxu0 0.0
    %4160 = vmatprep.subr.mxu0 0.0
    %4161 = vmatpush1.msra.mxu0 0.0
    %4162 = vmatprep.subr.mxu0 0.0
    %4163 = vmatpush1.msra.mxu0 0.0
    %4164 = vmatprep.subr.mxu0 0.0
    %4165 = vmatpush1.msra.mxu0 0.0
    %4166 = vmatprep.subr.mxu0 0.0
    %4167 = vmatpush1.msra.mxu0 0.0
    %4168 = vmatprep.subr.mxu0 0.0
    %4169 = vmatpush1.msra.mxu0 0.0
    %4170 = vmatprep.subr.mxu0 0.0
    %4171 = vmatpush1.msra.mxu0 0.0
    %4172 = vmatprep.subr.mxu0 0.0
    %4173 = vmatpush1.msra.mxu0 0.0
    %4174 = vmatprep.subr.mxu0 0.0
    %4175 = vmatpush1.msra.mxu0 0.0
    %4176 = vmatprep.subr.mxu0 0.0
    %4177 = vmatpush1.msra.mxu0 0.0
    %4178 = vmatprep.subr.mxu0 0.0
    %4179 = vmatpush1.msra.mxu0 0.0
    %4180 = vmatprep.subr.mxu0 0.0
    %4181 = vmatpush1.msra.mxu0 0.0
    %4182 = vmatprep.subr.mxu0 0.0
    %4183 = vmatpush1.msra.mxu0 0.0
    %4184 = vmatprep.subr.mxu0 0.0
    %4185 = vmatpush1.msra.mxu0 0.0
    %4186 = vmatprep.subr.mxu0 0.0
    %4187 = vmatpush1.msra.mxu0 0.0
    %4188 = vmatprep.subr.mxu0 0.0
    %4189 = vmatpush1.msra.mxu0 0.0
    %4190 = vmatprep.subr.mxu0 0.0
    %4191 = vmatpush1.msra.mxu0 0.0
    %4192 = vmatprep.subr.mxu0 0.0
    %4193 = vmatpush1.msra.mxu0 0.0
    %4194 = vmatprep.subr.mxu0 0.0
    %4195 = vmatpush1.msra.mxu0 0.0
    %4196 = vmatprep.subr.mxu0 0.0
    %4197 = vmatpush1.msra.mxu0 0.0
    %4198 = vmatprep.mubr.f32.mxu0 0.0
    %4199 = vmatmul.mubr.f32.gmra.mrb[0].mxu0 %v304
    %v4200 = vpop.f32.mrb[0].mxu0
    %v4201 = vadd.f32 0.0, %v4200
    %v4202 = vpop.f32.mrb[0].mxu0
    %4203 = vmatprep.mubr.f32.mxu0 0.0
    %4204 = vmatmul.mubr.f32.gmra.mrb[0].mxu0 %v307
    %v4205 = vpop.f32.mrb[0].mxu0
    %v4206 = vadd.f32 0.0, %v4205
    %v4207 = vpop.f32.mrb[0].mxu0
    %4208 = vdwg.mxu0
    %v4209 = vsub.f32 %v3676, %v1734
    %v4210 = vsub.f32 %v3681, %v1735
    %v4211 = vsub.f32 %v3751, %v1736
    %v4212 = vsub.f32 %v3756, %v1737
    %v4213 = vsub.f32 %v3826, %v1738
    %v4214 = vsub.f32 %v3831, %v1739
    %v4215 = vsub.f32 %v3901, %v1740
    %v4216 = vsub.f32 %v3906, %v1741
    %v4217 = vsub.f32 %v3976, %v1742
    %v4218 = vsub.f32 %v3981, %v1743
    %v4219 = vsub.f32 %v4051, %v1744
    %v4220 = vsub.f32 %v4056, %v1745
    %v4221 = vsub.f32 %v4126, %v1746
    %v4222 = vsub.f32 %v4131, %v1747
    %v4223 = vsub.f32 %v4201, %v1748
    %v4224 = vsub.f32 %v4206, %v1749
    %v4225 = vmul.f32 %v1734, 2.0
    %v4226 = vmul.f32 %v1735, 2.0
    %v4227 = vmul.f32 %v1736, 2.0
    %v4228 = vmul.f32 %v1737, 2.0
    %v4229 = vmul.f32 %v1738, 2.0
    %v4230 = vmul.f32 %v1739, 2.0
    %v4231 = vmul.f32 %v1740, 2.0
    %v4232 = vmul.f32 %v1741, 2.0
    %v4233 = vmul.f32 %v1742, 2.0
    %v4234 = vmul.f32 %v1743, 2.0
    %v4235 = vmul.f32 %v1744, 2.0
    %v4236 = vmul.f32 %v1745, 2.0
    %v4237 = vmul.f32 %v1746, 2.0
    %v4238 = vmul.f32 %v1747, 2.0
    %v4239 = vmul.f32 %v1748, 2.0
    %v4240 = vmul.f32 %v1749, 2.0
    %v4241 = vadd.f32 %v4225, 0.0001
    %v4242 = vadd.f32 %v4226, 0.0001
    %v4243 = vadd.f32 %v4227, 0.0001
    %v4244 = vadd.f32 %v4228, 0.0001
    %v4245 = vadd.f32 %v4229, 0.0001
    %v4246 = vadd.f32 %v4230, 0.0001
    %v4247 = vadd.f32 %v4231, 0.0001
    %v4248 = vadd.f32 %v4232, 0.0001
    %v4249 = vadd.f32 %v4233, 0.0001
    %v4250 = vadd.f32 %v4234, 0.0001
    %v4251 = vadd.f32 %v4235, 0.0001
    %v4252 = vadd.f32 %v4236, 0.0001
    %v4253 = vadd.f32 %v4237, 0.0001
    %v4254 = vadd.f32 %v4238, 0.0001
    %v4255 = vadd.f32 %v4239, 0.0001
    %v4256 = vadd.f32 %v4240, 0.0001
    %v4257 = vmul.f32 %v4209, 2.0
    %v4258 = vmul.f32 %v4210, 2.0
    %v4259 = vmul.f32 %v4211, 2.0
    %v4260 = vmul.f32 %v4212, 2.0
    %v4261 = vmul.f32 %v4213, 2.0
    %v4262 = vmul.f32 %v4214, 2.0
    %v4263 = vmul.f32 %v4215, 2.0
    %v4264 = vmul.f32 %v4216, 2.0
    %v4265 = vmul.f32 %v4217, 2.0
    %v4266 = vmul.f32 %v4218, 2.0
    %v4267 = vmul.f32 %v4219, 2.0
    %v4268 = vmul.f32 %v4220, 2.0
    %v4269 = vmul.f32 %v4221, 2.0
    %v4270 = vmul.f32 %v4222, 2.0
    %v4271 = vmul.f32 %v4223, 2.0
    %v4272 = vmul.f32 %v4224, 2.0
    %v4273 = vadd.f32 %v4257, 0.0009
    %v4274 = vadd.f32 %v4258, 0.0009
    %v4275 = vadd.f32 %v4259, 0.0009
    %v4276 = vadd.f32 %v4260, 0.0009
    %v4277 = vadd.f32 %v4261, 0.0009
    %v4278 = vadd.f32 %v4262, 0.0009
    %v4279 = vadd.f32 %v4263, 0.0009
    %v4280 = vadd.f32 %v4264, 0.0009
    %v4281 = vadd.f32 %v4265, 0.0009
    %v4282 = vadd.f32 %v4266, 0.0009
    %v4283 = vadd.f32 %v4267, 0.0009
    %v4284 = vadd.f32 %v4268, 0.0009
    %v4285 = vadd.f32 %v4269, 0.0009
    %v4286 = vadd.f32 %v4270, 0.0009
    %v4287 = vadd.f32 %v4271, 0.0009
    %v4288 = vadd.f32 %v4272, 0.0009
    %v4289 = vmul.f32 %v4241, %v4273
    %v4290 = vmul.f32 %v4242, %v4274
    %v4291 = vmul.f32 %v4243, %v4275
    %v4292 = vmul.f32 %v4244, %v4276
    %v4293 = vmul.f32 %v4245, %v4277
    %v4294 = vmul.f32 %v4246, %v4278
    %v4295 = vmul.f32 %v4247, %v4279
    %v4296 = vmul.f32 %v4248, %v4280
    %v4297 = vmul.f32 %v4249, %v4281
    %v4298 = vmul.f32 %v4250, %v4282
    %v4299 = vmul.f32 %v4251, %v4283
    %v4300 = vmul.f32 %v4252, %v4284
    %v4301 = vmul.f32 %v4253, %v4285
    %v4302 = vmul.f32 %v4254, %v4286
    %v4303 = vmul.f32 %v4255, %v4287
    %v4304 = vmul.f32 %v4256, %v4288
    %v4305 = vadd.f32 %v1702, %v1718
    %v4306 = vadd.f32 %v1703, %v1719
    %v4307 = vadd.f32 %v1704, %v1720
    %v4308 = vadd.f32 %v1705, %v1721
    %v4309 = vadd.f32 %v1706, %v1722
    %v4310 = vadd.f32 %v1707, %v1723
    %v4311 = vadd.f32 %v1708, %v1724
    %v4312 = vadd.f32 %v1709, %v1725
    %v4313 = vadd.f32 %v1710, %v1726
    %v4314 = vadd.f32 %v1711, %v1727
    %v4315 = vadd.f32 %v1712, %v1728
    %v4316 = vadd.f32 %v1713, %v1729
    %v4317 = vadd.f32 %v1714, %v1730
    %v4318 = vadd.f32 %v1715, %v1731
    %v4319 = vadd.f32 %v1716, %v1732
    %v4320 = vadd.f32 %v1717, %v1733
    %v4321 = vadd.f32 %v4305, 0.0001
    %v4322 = vadd.f32 %v4306, 0.0001
    %v4323 = vadd.f32 %v4307, 0.0001
    %v4324 = vadd.f32 %v4308, 0.0001
    %v4325 = vadd.f32 %v4309, 0.0001
    %v4326 = vadd.f32 %v4310, 0.0001
    %v4327 = vadd.f32 %v4311, 0.0001
    %v4328 = vadd.f32 %v4312, 0.0001
    %v4329 = vadd.f32 %v4313, 0.0001
    %v4330 = vadd.f32 %v4314, 0.0001
    %v4331 = vadd.f32 %v4315, 0.0001
    %v4332 = vadd.f32 %v4316, 0.0001
    %v4333 = vadd.f32 %v4317, 0.0001
    %v4334 = vadd.f32 %v4318, 0.0001
    %v4335 = vadd.f32 %v4319, 0.0001
    %v4336 = vadd.f32 %v4320, 0.0001
    %v4337 = vadd.f32 %v2559, %v3384
    %v4338 = vadd.f32 %v2560, %v3385
    %v4339 = vadd.f32 %v2561, %v3386
    %v4340 = vadd.f32 %v2562, %v3387
    %v4341 = vadd.f32 %v2563, %v3388
    %v4342 = vadd.f32 %v2564, %v3389
    %v4343 = vadd.f32 %v2565, %v3390
    %v4344 = vadd.f32 %v2566, %v3391
    %v4345 = vadd.f32 %v2567, %v3392
    %v4346 = vadd.f32 %v2568, %v3393
    %v4347 = vadd.f32 %v2569, %v3394
    %v4348 = vadd.f32 %v2570, %v3395
    %v4349 = vadd.f32 %v2571, %v3396
    %v4350 = vadd.f32 %v2572, %v3397
    %v4351 = vadd.f32 %v2573, %v3398
    %v4352 = vadd.f32 %v2574, %v3399
    %v4353 = vadd.f32 %v4337, 0.0009
    %v4354 = vadd.f32 %v4338, 0.0009
    %v4355 = vadd.f32 %v4339, 0.0009
    %v4356 = vadd.f32 %v4340, 0.0009
    %v4357 = vadd.f32 %v4341, 0.0009
    %v4358 = vadd.f32 %v4342, 0.0009
    %v4359 = vadd.f32 %v4343, 0.0009
    %v4360 = vadd.f32 %v4344, 0.0009
    %v4361 = vadd.f32 %v4345, 0.0009
    %v4362 = vadd.f32 %v4346, 0.0009
    %v4363 = vadd.f32 %v4347, 0.0009
    %v4364 = vadd.f32 %v4348, 0.0009
    %v4365 = vadd.f32 %v4349, 0.0009
    %v4366 = vadd.f32 %v4350, 0.0009
    %v4367 = vadd.f32 %v4351, 0.0009
    %v4368 = vadd.f32 %v4352, 0.0009
    %v4369 = vmul.f32 %v4321, %v4353
    %v4370 = vmul.f32 %v4322, %v4354
    %v4371 = vmul.f32 %v4323, %v4355
    %v4372 = vmul.f32 %v4324, %v4356
    %v4373 = vmul.f32 %v4325, %v4357
    %v4374 = vmul.f32 %v4326, %v4358
    %v4375 = vmul.f32 %v4327, %v4359
    %v4376 = vmul.f32 %v4328, %v4360
    %v4377 = vmul.f32 %v4329, %v4361
    %v4378 = vmul.f32 %v4330, %v4362
    %v4379 = vmul.f32 %v4331, %v4363
    %v4380 = vmul.f32 %v4332, %v4364
    %v4381 = vmul.f32 %v4333, %v4365
    %v4382 = vmul.f32 %v4334, %v4366
    %v4383 = vmul.f32 %v4335, %v4367
    %v4384 = vmul.f32 %v4336, %v4368
    %v4385 = vrcp.pop %v4369
    %v4386 = vrcp.pop %v4370
    %v4387 = vrcp.pop %v4371
    %v4388 = vrcp.pop %v4372
    %v4389 = vrcp.pop %v4373
    %v4390 = vrcp.pop %v4374
    %v4391 = vrcp.pop %v4375
    %v4392 = vrcp.pop %v4376
    %v4393 = vrcp.pop %v4377
    %v4394 = vrcp.pop %v4378
    %v4395 = vrcp.pop %v4379
    %v4396 = vrcp.pop %v4380
    %v4397 = vrcp.pop %v4381
    %v4398 = vrcp.pop %v4382
    %v4399 = vrcp.pop %v4383
    %v4400 = vrcp.pop %v4384
    %v4401 = vmul.f32 %v4289, %v4385
    %v4402 = vmul.f32 %v4290, %v4386
    %v4403 = vmul.f32 %v4291, %v4387
    %v4404 = vmul.f32 %v4292, %v4388
    %v4405 = vmul.f32 %v4293, %v4389
    %v4406 = vmul.f32 %v4294, %v4390
    %v4407 = vmul.f32 %v4295, %v4391
    %v4408 = vmul.f32 %v4296, %v4392
    %v4409 = vmul.f32 %v4297, %v4393
    %v4410 = vmul.f32 %v4298, %v4394
    %v4411 = vmul.f32 %v4299, %v4395
    %v4412 = vmul.f32 %v4300, %v4396
    %v4413 = vmul.f32 %v4301, %v4397
    %v4414 = vmul.f32 %v4302, %v4398
    %v4415 = vmul.f32 %v4303, %v4399
    %v4416 = vmul.f32 %v4304, %v4400
    %v4417 = vsel %vm109, %v4401, 0.0
    %v4418 = vsel %vm109, %v4402, 0.0
    %v4419 = vadd.f32 %v4417, %v4418
    %v4420 = vrot.slane %v4419, 4
    %v4421 = vadd.f32 %v4419, %v4420
    %v4422 = vrot.slane %v4421, 2
    %v4423 = vadd.f32 %v4421, %v4422
    %v4424 = vrot.slane %v4423, 1
    %v4425 = vadd.f32 %v4423, %v4424
    %v4426 = vsel %vm109, %v4403, 0.0
    %v4427 = vsel %vm109, %v4404, 0.0
    %v4428 = vadd.f32 %v4426, %v4427
    %v4429 = vrot.slane %v4428, 4
    %v4430 = vadd.f32 %v4428, %v4429
    %v4431 = vrot.slane %v4430, 2
    %v4432 = vadd.f32 %v4430, %v4431
    %v4433 = vrot.slane %v4432, 1
    %v4434 = vadd.f32 %v4432, %v4433
    %v4435 = vsel %vm109, %v4405, 0.0
    %v4436 = vsel %vm109, %v4406, 0.0
    %v4437 = vadd.f32 %v4435, %v4436
    %v4438 = vrot.slane %v4437, 4
    %v4439 = vadd.f32 %v4437, %v4438
    %v4440 = vrot.slane %v4439, 2
    %v4441 = vadd.f32 %v4439, %v4440
    %v4442 = vrot.slane %v4441, 1
    %v4443 = vadd.f32 %v4441, %v4442
    %v4444 = vsel %vm109, %v4407, 0.0
    %v4445 = vsel %vm109, %v4408, 0.0
    %v4446 = vadd.f32 %v4444, %v4445
    %v4447 = vrot.slane %v4446, 4
    %v4448 = vadd.f32 %v4446, %v4447
    %v4449 = vrot.slane %v4448, 2
    %v4450 = vadd.f32 %v4448, %v4449
    %v4451 = vrot.slane %v4450, 1
    %v4452 = vadd.f32 %v4450, %v4451
    %v4453 = vsel %vm109, %v4409, 0.0
    %v4454 = vsel %vm109, %v4410, 0.0
    %v4455 = vadd.f32 %v4453, %v4454
    %v4456 = vrot.slane %v4455, 4
    %v4457 = vadd.f32 %v4455, %v4456
    %v4458 = vrot.slane %v4457, 2
    %v4459 = vadd.f32 %v4457, %v4458
    %v4460 = vrot.slane %v4459, 1
    %v4461 = vadd.f32 %v4459, %v4460
    %v4462 = vsel %vm109, %v4411, 0.0
    %v4463 = vsel %vm109, %v4412, 0.0
    %v4464 = vadd.f32 %v4462, %v4463
    %v4465 = vrot.slane %v4464, 4
    %v4466 = vadd.f32 %v4464, %v4465
    %v4467 = vrot.slane %v4466, 2
    %v4468 = vadd.f32 %v4466, %v4467
    %v4469 = vrot.slane %v4468, 1
    %v4470 = vadd.f32 %v4468, %v4469
    %v4471 = vsel %vm109, %v4413, 0.0
    %v4472 = vsel %vm109, %v4414, 0.0
    %v4473 = vadd.f32 %v4471, %v4472
    %v4474 = vrot.slane %v4473, 4
    %v4475 = vadd.f32 %v4473, %v4474
    %v4476 = vrot.slane %v4475, 2
    %v4477 = vadd.f32 %v4475, %v4476
    %v4478 = vrot.slane %v4477, 1
    %v4479 = vadd.f32 %v4477, %v4478
    %v4480 = vsel %vm109, %v4415, 0.0
    %v4481 = vsel %vm109, %v4416, 0.0
    %v4482 = vadd.f32 %v4480, %v4481
    %v4483 = vrot.slane %v4482, 4
    %v4484 = vadd.f32 %v4482, %v4483
    %v4485 = vrot.slane %v4484, 2
    %v4486 = vadd.f32 %v4484, %v4485
    %v4487 = vrot.slane %v4486, 1
    %v4488 = vadd.f32 %v4486, %v4487
    %vm4497 = vcmask 1041409
    %v4498 = vsel %vm4497, %v4434, %v4425
    %vm4499 = vcmask 1042434
    %v4500 = vsel %vm4499, %v4443, %v4498
    %vm4501 = vcmask 1043459
    %v4502 = vsel %vm4501, %v4452, %v4500
    %vm4503 = vcmask 1044484
    %v4504 = vsel %vm4503, %v4461, %v4502
    %vm4505 = vcmask 1045509
    %v4506 = vsel %vm4505, %v4470, %v4504
    %vm4507 = vcmask 1046534
    %v4508 = vsel %vm4507, %v4479, %v4506
    %vm4509 = vcmask 1047559
    %v4510 = vsel %vm4509, %v4488, %v4508
    %4512 = vst.msk [vmem:[#allocation10] sm:$0xff] %vm109, %v4510
    // Predicated region
    $region34: #{tpu_custom_call.1} parent=1 // pred_check
      _
    $region35: #{tpu_custom_call.1} parent=1 // pred_check_branch
      %4514 = sbr.rel (0) target = $region37
    $region36: #{tpu_custom_call.1} parent=1 // pred_region
      %s4516 = ssub.s32 128, 128
      %4517 = vsyncadd [#allocation4], %s4516
      %s4519 = sshll.u32 [#allocation10], 4
      %s4520 = int_to_ptr.vmem [resolvable:$true] %s4519
      %4522 = dma.vmem_to_hbm [thread:$0]  %s4520, 128, %s4, [#allocation4]
    $region37: #{tpu_custom_call.1} parent=1 // pred_fallthru
      _
    // Predicated region
    $region38: #{tpu_custom_call.1} parent=1 // pred_check
      _
    $region39: #{tpu_custom_call.1} parent=1 // pred_check_branch
      %4524 = sbr.rel (0) target = $region41
    $region40: #{tpu_custom_call.1} parent=1 // pred_region
      %4525 = dma.done [#allocation4], 128
    $region41: #{tpu_custom_call.1} parent=1 // pred_fallthru
      _
    %4526 = vsyncpa [#allocation3], 1
    %4527 = vsyncpa [#allocation6], 1
    %4528 = vsyncpa [#allocation9], 1
    %4529 = vsyncpa [#allocation4], 1

</llo_original>
